<compile_context>
chip_gen: v7x
topology: tpu7x:2x2x1
jax: 0.10.0
libtpu: 0.0.40
codegen_flags: <defaults>
</compile_context>

<pallas_src>
import functools
import math

import numpy as np
import jax
import jax.numpy as jnp
from jax.experimental import pallas as pl
from jax.experimental.pallas import tpu as pltpu

SQRT_2PI = math.sqrt(2.0 * math.pi)
TWO_PI = 2.0 * math.pi
KSIZE = 7
PAD = (KSIZE - 1) // 2


def _conv_tap_masks(B, H, W):
    """Static per-tap validity masks for the 7x7 'same' conv in flat (HW) space.

    masks[t, b, p] == 1.0 iff output position p=(h,w) may read source position
    (h+di, w+dj) for tap t = i*7+j with di=i-3, dj=j-3 (source in-bounds, same
    row/col neighborhood).  Built once on the host so the 49-tap loop contains
    no broadcasts or mask recomputation.
    """
    hh, ww = np.meshgrid(np.arange(H), np.arange(W), indexing="ij")
    hh = hh.reshape(-1)
    ww = ww.reshape(-1)
    masks = np.zeros((KSIZE * KSIZE, B, H * W), np.float32)
    for i in range(KSIZE):
        di = i - PAD
        for j in range(KSIZE):
            dj = j - PAD
            ok = ((hh + di >= 0) & (hh + di < H) &
                  (ww + dj >= 0) & (ww + dj < W)).astype(np.float32)
            masks[i * KSIZE + j] = ok[None, :]
    return masks


def amm_kernel(x_ref, w1_ref, b1_ref, w2_ref, b2_ref, mask_ref, wconv_ref,
               out_ref, *, W):
    """Fused AMM forward.

    x_ref:     (B, C, HW)  f32 VMEM   lane-dense view of the NCHW input
    w1_ref:    (hid, C)    f32 VMEM   torch Linear(C, hid).weight
    b1_ref:    (1, hid)    f32 VMEM
    w2_ref:    (hid, C)    f32 VMEM   torch Linear(hid, C).weight.T
    b2_ref:    (1, C)      f32 VMEM
    mask_ref:  (49, B, HW) f32 VMEM   static boundary masks, one per conv tap
    wconv_ref: (2*49,)     f32 SMEM   conv weight flattened as [in_ch, kh, kw]
    out_ref:   (B, C, HW)  f32 VMEM
    """
    x = x_ref[...]                                   # (B, C, HW)
    B, C, HW = x.shape

    # ---------------- ChannelGate ----------------
    # Global average pool over the lane-dense spatial axis.
    avg = jnp.mean(x, axis=2)                        # (B, C)

    # Tiny MLP on the VPU (an MXU pass would be ~empty at these sizes).
    h = jnp.sum(avg[:, None, :] * w1_ref[...][None, :, :], axis=-1) + b1_ref[...]
    h = jnp.maximum(h, 0.0)                          # (B, hid)
    att = jnp.sum(h[:, :, None] * w2_ref[...][None, :, :], axis=1) + b2_ref[...]  # (B, C)

    # GaussProjection: global mean, unbiased std.  Exact divide for the exp()
    # exponent term (tolerance-critical); rsqrt (EUP) for the sigma prefactor.
    c_mean = jnp.mean(att)
    c_var = jnp.sum((att - c_mean) ** 2) * (1.0 / (att.size - 1))
    inv_sigma_c = jax.lax.rsqrt(TWO_PI * c_var)      # 1 / (sqrt(2*pi) * std)
    c_scale = jnp.exp(-(att - c_mean) ** 2 * (0.5 / c_var)) * inv_sigma_c  # (B, C)

    # Write the channel-gated tensor out immediately; y's last use is the
    # channel pooling right below, so it is NOT live across the conv/BN/Gauss
    # section (vreg-pressure fix).  The spatial scale is applied in-place later.
    y = x * c_scale[:, :, None]                      # (B, C, HW)
    out_ref[...] = y

    # ---------------- ChannelPool (lane-dense) ----------------
    pool_max = jnp.max(y, axis=1)                    # (B, HW)
    pool_mean = jnp.mean(y, axis=1)                  # (B, HW)

    # ---------------- 7x7 "same" conv, 2 -> 1 channels, no bias -------------
    # Lane-dense formulation: tap (i, j) has flat offset off = (i-3)*W + (j-3);
    # the two pooled channels are combined with their scalar weights BEFORE the
    # roll (halves the tap count), the shift goes to the XLU, and the boundary
    # mask is a plain VMEM load (no in-loop broadcasts).
    acc = jnp.zeros((B, HW), jnp.float32)
    for i in range(KSIZE):
        di = i - PAD
        for j in range(KSIZE):
            dj = j - PAD
            t = i * KSIZE + j
            w_max = wconv_ref[t]                        # channel 0 = max pool
            w_mean = wconv_ref[KSIZE * KSIZE + t]       # channel 1 = mean pool
            comb = pool_max * w_max + pool_mean * w_mean            # (B, HW)
            shift = (-(di * W + dj)) % HW               # static Python int
            rolled = pltpu.roll(comb, shift, axis=1) if shift else comb
            acc = acc + rolled * mask_ref[t]                        # (B, HW)

    # ---------------- BatchNorm2d (training mode, gamma=1, beta=0) ----------
    b_mean = jnp.mean(acc)
    b_var = jnp.mean((acc - b_mean) ** 2)            # biased batch variance
    xn = (acc - b_mean) * jax.lax.rsqrt(b_var + 1e-5)

    # ---------------- GaussProjection on the normalized map -----------------
    g_mean = jnp.mean(xn)
    g_var = jnp.sum((xn - g_mean) ** 2) * (1.0 / (xn.size - 1))
    inv_sigma_s = jax.lax.rsqrt(TWO_PI * g_var)
    s_scale = jnp.exp(-(xn - g_mean) ** 2 * (0.5 / g_var)) * inv_sigma_s   # (B, HW)

    # In-place spatial scaling: one full-tile, lane-dense read-modify-write.
    out_ref[...] = out_ref[...] * s_scale[:, None, :]


@jax.jit
def amm_forward(x, w1, b1, w2t, b2, wconv):
    """x: (B, C, H, W) f32.  w1/w2t: (hid, C), b1: (1, hid), b2: (1, C),
    wconv: (1, 2, 7, 7).  Returns (B, C, H, W)."""
    B, C, H, W = x.shape
    HW = H * W

    x_flat = x.reshape(B, C, HW)                     # lane-dense view (layout glue)
    wconv_flat = wconv.reshape(-1).astype(jnp.float32)
    masks = jnp.asarray(_conv_tap_masks(B, H, W))    # static constant (49, B, HW)

    kernel = functools.partial(amm_kernel, W=W)

    out_flat = pl.pallas_call(
        kernel,
        out_shape=jax.ShapeDtypeStruct((B, C, HW), jnp.float32),
        in_specs=[
            pl.BlockSpec(memory_space=pltpu.MemorySpace.VMEM),   # x (B, C, HW)
            pl.BlockSpec(memory_space=pltpu.MemorySpace.VMEM),   # w1 (hid, C)
            pl.BlockSpec(memory_space=pltpu.MemorySpace.VMEM),   # b1 (1, hid)
            pl.BlockSpec(memory_space=pltpu.MemorySpace.VMEM),   # w2t (hid, C)
            pl.BlockSpec(memory_space=pltpu.MemorySpace.VMEM),   # b2 (1, C)
            pl.BlockSpec(memory_space=pltpu.MemorySpace.VMEM),   # conv tap masks
            pl.BlockSpec(memory_space=pltpu.MemorySpace.SMEM),   # conv weights (98,)
        ],
        out_specs=pl.BlockSpec(memory_space=pltpu.MemorySpace.VMEM),
    )(x_flat, w1, b1, w2t, b2, masks, wconv_flat)

    return out_flat.reshape(B, C, H, W)


def amm_reference(x, w1, b1, w2t, b2, wconv):
    """Pure-JAX reference of the PyTorch AMM forward (f32, highest precision)."""
    B, C, H, W = x.shape
    hp = jax.lax.Precision.HIGHEST
    avg = jnp.mean(x, axis=(2, 3))                                        # (B, C)
    h = jnp.maximum(jnp.einsum("bc,kc->bk", avg, w1, precision=hp) + b1, 0.0)
    att = jnp.einsum("bk,kc->bc", h, w2t, precision=hp) + b2              # (B, C)
    c_mean = jnp.mean(att)
    c_var = jnp.sum((att - c_mean) ** 2) / (att.size - 1)
    c_std = jnp.sqrt(c_var)
    c_scale = jnp.exp(-(att - c_mean) ** 2 / (2.0 * c_var)) / (SQRT_2PI * c_std)
    y = x * c_scale[:, :, None, None]
    pooled = jnp.stack([jnp.max(y, axis=1), jnp.mean(y, axis=1)], axis=1)  # (B,2,H,W)
    pp = jnp.pad(pooled, ((0, 0), (0, 0), (PAD, PAD), (PAD, PAD)))
    conv = jnp.zeros((B, H, W), jnp.float32)
    for c in range(2):
        for i in range(KSIZE):
            for j in range(KSIZE):
                conv = conv + pp[:, c, i:i + H, j:j + W] * wconv[0, c, i, j]
    b_mean = jnp.mean(conv)
    b_var = jnp.mean((conv - b_mean) ** 2)
    xn = (conv - b_mean) / jnp.sqrt(b_var + 1e-5)
    g_mean = jnp.mean(xn)
    g_var = jnp.sum((xn - g_mean) ** 2) / (xn.size - 1)
    g_std = jnp.sqrt(g_var)
    s_scale = jnp.exp(-(xn - g_mean) ** 2 / (2.0 * g_var)) / (SQRT_2PI * g_std)
    return y * s_scale[:, None, :, :]


if __name__ == "__main__":
    # Shapes consistent with AMM(gate_channels=32, reduction_ratio=16).
    B, C, H, W = 2, 32, 16, 16
    reduction = 16
    hid = C // reduction

    key = jax.random.PRNGKey(0)
    ks = jax.random.split(key, 6)
    x = jax.random.normal(ks[0], (B, C, H, W), dtype=jnp.float32)

    # Deterministic synthetic parameters (layouts documented in amm_kernel).
    w1 = 0.1 * jax.random.normal(ks[1], (hid, C), dtype=jnp.float32)    # Linear(C, hid).weight
    b1 = 0.1 * jax.random.normal(ks[2], (1, hid), dtype=jnp.float32)    # Linear(C, hid).bias
    w2t = 0.1 * jax.random.normal(ks[3], (hid, C), dtype=jnp.float32)   # Linear(hid, C).weight.T
    b2 = 0.1 * jax.random.normal(ks[4], (1, C), dtype=jnp.float32)      # Linear(hid, C).bias
    wconv = 0.1 * jax.random.normal(ks[5], (1, 2, KSIZE, KSIZE), dtype=jnp.float32)  # Conv2d(2,1,7)

    out = amm_forward(x, w1, b1, w2t, b2, wconv)
    jax.block_until_ready(out)

    assert out.shape == (B, C, H, W)
    assert bool(jnp.all(jnp.isfinite(out)))

    ref = amm_reference(x, w1, b1, w2t, b2, wconv)
    max_err = float(jnp.max(jnp.abs(out - ref)))
    assert max_err < 5e-3, f"mismatch vs JAX reference: {max_err}"

    print("KERNEL_OK")
</pallas_src>

<mosaic_0001>
module attributes {stable_mosaic.version = 11 : i64} {
  func.func @amm_kernel(%arg0: memref<2x32x256xf32, #tpu.memory_space<vmem>>, %arg1: memref<2x32xf32, #tpu.memory_space<vmem>>, %arg2: memref<1x2xf32, #tpu.memory_space<vmem>>, %arg3: memref<2x32xf32, #tpu.memory_space<vmem>>, %arg4: memref<1x32xf32, #tpu.memory_space<vmem>>, %arg5: memref<49x2x256xf32, #tpu.memory_space<vmem>>, %arg6: memref<98xf32, #tpu.memory_space<smem>>, %arg7: memref<2x32x256xf32, #tpu.memory_space<vmem>>) attributes {dimension_semantics = [], scalar_prefetch = 0 : i64, scratch_operands = 0 : i64, tpu.core_type = #tpu.core_type<tc>} {
    %c0 = arith.constant 0 : index
    %c0_0 = arith.constant 0 : index
    %c0_1 = arith.constant 0 : index
    %0 = vector.load %arg0[%c0, %c0_0, %c0_1] : memref<2x32x256xf32, #tpu.memory_space<vmem>>, vector<2x32x256xf32>
    %cst = arith.constant dense<0.000000e+00> : vector<2x32xf32>
    %1 = vector.multi_reduction <add>, %0, %cst [2] : vector<2x32x256xf32> to vector<2x32xf32>
    %cst_2 = arith.constant 2.560000e+02 : f32
    %2 = vector.broadcast %cst_2 : f32 to vector<2x32xf32>
    %3 = arith.divf %1, %2 : vector<2x32xf32>
    %4 = vector.shape_cast %3 : vector<2x32xf32> to vector<2x1x32xf32>
    %c0_3 = arith.constant 0 : index
    %c0_4 = arith.constant 0 : index
    %5 = vector.load %arg1[%c0_3, %c0_4] : memref<2x32xf32, #tpu.memory_space<vmem>>, vector<2x32xf32>
    %6 = vector.shape_cast %5 : vector<2x32xf32> to vector<1x2x32xf32>
    %7 = vector.broadcast %4 : vector<2x1x32xf32> to vector<2x2x32xf32>
    %8 = vector.broadcast %6 : vector<1x2x32xf32> to vector<2x2x32xf32>
    %9 = arith.mulf %7, %8 : vector<2x2x32xf32>
    %cst_5 = arith.constant dense<0.000000e+00> : vector<2x2xf32>
    %10 = vector.multi_reduction <add>, %9, %cst_5 [2] : vector<2x2x32xf32> to vector<2x2xf32>
    %c0_6 = arith.constant 0 : index
    %c0_7 = arith.constant 0 : index
    %11 = vector.load %arg2[%c0_6, %c0_7] : memref<1x2xf32, #tpu.memory_space<vmem>>, vector<1x2xf32>
    %12 = vector.broadcast %11 : vector<1x2xf32> to vector<2x2xf32>
    %13 = arith.addf %10, %12 : vector<2x2xf32>
    %cst_8 = arith.constant 0.000000e+00 : f32
    %14 = vector.broadcast %cst_8 : f32 to vector<2x2xf32>
    %15 = arith.maximumf %13, %14 : vector<2x2xf32>
    %16 = vector.shape_cast %15 : vector<2x2xf32> to vector<2x2x1xf32>
    %c0_9 = arith.constant 0 : index
    %c0_10 = arith.constant 0 : index
    %17 = vector.load %arg3[%c0_9, %c0_10] : memref<2x32xf32, #tpu.memory_space<vmem>>, vector<2x32xf32>
    %18 = vector.shape_cast %17 : vector<2x32xf32> to vector<1x2x32xf32>
    %19 = vector.broadcast %16 : vector<2x2x1xf32> to vector<2x2x32xf32>
    %20 = vector.broadcast %18 : vector<1x2x32xf32> to vector<2x2x32xf32>
    %21 = arith.mulf %19, %20 : vector<2x2x32xf32>
    %cst_11 = arith.constant dense<0.000000e+00> : vector<2x32xf32>
    %22 = vector.multi_reduction <add>, %21, %cst_11 [1] : vector<2x2x32xf32> to vector<2x32xf32>
    %c0_12 = arith.constant 0 : index
    %c0_13 = arith.constant 0 : index
    %23 = vector.load %arg4[%c0_12, %c0_13] : memref<1x32xf32, #tpu.memory_space<vmem>>, vector<1x32xf32>
    %24 = vector.broadcast %23 : vector<1x32xf32> to vector<2x32xf32>
    %25 = arith.addf %22, %24 : vector<2x32xf32>
    %26 = vector.shape_cast %25 : vector<2x32xf32> to vector<1x2x32xf32>
    %cst_14 = arith.constant dense<0.000000e+00> : vector<1xf32>
    %27 = vector.multi_reduction <add>, %26, %cst_14 [1, 2] : vector<1x2x32xf32> to vector<1xf32>
    %28 = vector.shape_cast %27 : vector<1xf32> to vector<1x1x1xf32>
    %29 = vector.extract %28[0, 0, 0] : f32 from vector<1x1x1xf32>
    %cst_15 = arith.constant 6.400000e+01 : f32
    %30 = arith.divf %29, %cst_15 : f32
    %31 = vector.broadcast %30 : f32 to vector<2x32xf32>
    %32 = arith.subf %25, %31 : vector<2x32xf32>
    %33 = arith.mulf %32, %32 : vector<2x32xf32>
    %34 = vector.shape_cast %33 : vector<2x32xf32> to vector<1x2x32xf32>
    %cst_16 = arith.constant dense<0.000000e+00> : vector<1xf32>
    %35 = vector.multi_reduction <add>, %34, %cst_16 [1, 2] : vector<1x2x32xf32> to vector<1xf32>
    %36 = vector.shape_cast %35 : vector<1xf32> to vector<1x1x1xf32>
    %37 = vector.extract %36[0, 0, 0] : f32 from vector<1x1x1xf32>
    %cst_17 = arith.constant 0.0158730168 : f32
    %38 = arith.mulf %37, %cst_17 : f32
    %cst_18 = arith.constant 6.28318548 : f32
    %39 = arith.mulf %cst_18, %38 : f32
    %40 = math.rsqrt %39 : f32
    %41 = vector.broadcast %30 : f32 to vector<2x32xf32>
    %42 = arith.subf %25, %41 : vector<2x32xf32>
    %43 = arith.mulf %42, %42 : vector<2x32xf32>
    %cst_19 = arith.constant 0.000000e+00 : f32
    %44 = vector.broadcast %cst_19 : f32 to vector<2x32xf32>
    %45 = arith.subf %44, %43 : vector<2x32xf32>
    %cst_20 = arith.constant 5.000000e-01 : f32
    %46 = arith.divf %cst_20, %38 : f32
    %47 = vector.broadcast %46 : f32 to vector<2x32xf32>
    %48 = arith.mulf %45, %47 : vector<2x32xf32>
    %49 = math.exp %48 : vector<2x32xf32>
    %50 = vector.broadcast %40 : f32 to vector<2x32xf32>
    %51 = arith.mulf %49, %50 : vector<2x32xf32>
    %52 = vector.shape_cast %51 : vector<2x32xf32> to vector<2x32x1xf32>
    %53 = vector.broadcast %52 : vector<2x32x1xf32> to vector<2x32x256xf32>
    %54 = arith.mulf %0, %53 : vector<2x32x256xf32>
    %c0_21 = arith.constant 0 : index
    %c0_22 = arith.constant 0 : index
    %c0_23 = arith.constant 0 : index
    %55 = vector.load %arg7[%c0_21, %c0_22, %c0_23] : memref<2x32x256xf32, #tpu.memory_space<vmem>>, vector<2x32x256xf32>
    tpu.vector_store %arg7[%c0_21, %c0_22, %c0_23], %54 {strides = array<i32>} : memref<2x32x256xf32, #tpu.memory_space<vmem>>, vector<2x32x256xf32>,
    %cst_24 = arith.constant dense<0xFF800000> : vector<2x256xf32>
    %56 = vector.multi_reduction <maximumf>, %54, %cst_24 [1] : vector<2x32x256xf32> to vector<2x256xf32>
    %cst_25 = arith.constant dense<0.000000e+00> : vector<2x256xf32>
    %57 = vector.multi_reduction <add>, %54, %cst_25 [1] : vector<2x32x256xf32> to vector<2x256xf32>
    %cst_26 = arith.constant 3.200000e+01 : f32
    %58 = vector.broadcast %cst_26 : f32 to vector<2x256xf32>
    %59 = arith.divf %57, %58 : vector<2x256xf32>
    %cst_27 = arith.constant 0.000000e+00 : f32
    %60 = vector.broadcast %cst_27 : f32 to vector<2x256xf32>
    %c0_28 = arith.constant 0 : index
    %61 = memref.load %arg6[%c0_28] : memref<98xf32, #tpu.memory_space<smem>>
    %c49 = arith.constant 49 : index
    %62 = memref.load %arg6[%c49] : memref<98xf32, #tpu.memory_space<smem>>
    %63 = vector.broadcast %61 : f32 to vector<2x256xf32>
    %64 = arith.mulf %56, %63 : vector<2x256xf32>
    %65 = vector.broadcast %62 : f32 to vector<2x256xf32>
    %66 = arith.mulf %59, %65 : vector<2x256xf32>
    %67 = arith.addf %64, %66 : vector<2x256xf32>
    %c51_i32 = arith.constant 51 : i32
    %68 = tpu.dynamic_rotate %67 by %c51_i32 dim 1 : vector<2x256xf32>, i32 -> vector<2x256xf32>
    %c0_29 = arith.constant 0 : index
    %c0_30 = arith.constant 0 : index
    %c0_31 = arith.constant 0 : index
    %69 = vector.load %arg5[%c0_29, %c0_30, %c0_31] : memref<49x2x256xf32, #tpu.memory_space<vmem>>, vector<1x2x256xf32>
    %70 = vector.shape_cast %69 : vector<1x2x256xf32> to vector<2x256xf32>
    %71 = arith.mulf %68, %70 : vector<2x256xf32>
    %72 = arith.addf %60, %71 : vector<2x256xf32>
    %c1 = arith.constant 1 : index
    %73 = memref.load %arg6[%c1] : memref<98xf32, #tpu.memory_space<smem>>
    %c50 = arith.constant 50 : index
    %74 = memref.load %arg6[%c50] : memref<98xf32, #tpu.memory_space<smem>>
    %75 = vector.broadcast %73 : f32 to vector<2x256xf32>
    %76 = arith.mulf %56, %75 : vector<2x256xf32>
    %77 = vector.broadcast %74 : f32 to vector<2x256xf32>
    %78 = arith.mulf %59, %77 : vector<2x256xf32>
    %79 = arith.addf %76, %78 : vector<2x256xf32>
    %c50_i32 = arith.constant 50 : i32
    %80 = tpu.dynamic_rotate %79 by %c50_i32 dim 1 : vector<2x256xf32>, i32 -> vector<2x256xf32>
    %c1_32 = arith.constant 1 : index
    %c0_33 = arith.constant 0 : index
    %c0_34 = arith.constant 0 : index
    %81 = vector.load %arg5[%c1_32, %c0_33, %c0_34] : memref<49x2x256xf32, #tpu.memory_space<vmem>>, vector<1x2x256xf32>
    %82 = vector.shape_cast %81 : vector<1x2x256xf32> to vector<2x256xf32>
    %83 = arith.mulf %80, %82 : vector<2x256xf32>
    %84 = arith.addf %72, %83 : vector<2x256xf32>
    %c2 = arith.constant 2 : index
    %85 = memref.load %arg6[%c2] : memref<98xf32, #tpu.memory_space<smem>>
    %c51 = arith.constant 51 : index
    %86 = memref.load %arg6[%c51] : memref<98xf32, #tpu.memory_space<smem>>
    %87 = vector.broadcast %85 : f32 to vector<2x256xf32>
    %88 = arith.mulf %56, %87 : vector<2x256xf32>
    %89 = vector.broadcast %86 : f32 to vector<2x256xf32>
    %90 = arith.mulf %59, %89 : vector<2x256xf32>
    %91 = arith.addf %88, %90 : vector<2x256xf32>
    %c49_i32 = arith.constant 49 : i32
    %92 = tpu.dynamic_rotate %91 by %c49_i32 dim 1 : vector<2x256xf32>, i32 -> vector<2x256xf32>
    %c2_35 = arith.constant 2 : index
    %c0_36 = arith.constant 0 : index
    %c0_37 = arith.constant 0 : index
    %93 = vector.load %arg5[%c2_35, %c0_36, %c0_37] : memref<49x2x256xf32, #tpu.memory_space<vmem>>, vector<1x2x256xf32>
    %94 = vector.shape_cast %93 : vector<1x2x256xf32> to vector<2x256xf32>
    %95 = arith.mulf %92, %94 : vector<2x256xf32>
    %96 = arith.addf %84, %95 : vector<2x256xf32>
    %c3 = arith.constant 3 : index
    %97 = memref.load %arg6[%c3] : memref<98xf32, #tpu.memory_space<smem>>
    %c52 = arith.constant 52 : index
    %98 = memref.load %arg6[%c52] : memref<98xf32, #tpu.memory_space<smem>>
    %99 = vector.broadcast %97 : f32 to vector<2x256xf32>
    %100 = arith.mulf %56, %99 : vector<2x256xf32>
    %101 = vector.broadcast %98 : f32 to vector<2x256xf32>
    %102 = arith.mulf %59, %101 : vector<2x256xf32>
    %103 = arith.addf %100, %102 : vector<2x256xf32>
    %c48_i32 = arith.constant 48 : i32
    %104 = tpu.dynamic_rotate %103 by %c48_i32 dim 1 : vector<2x256xf32>, i32 -> vector<2x256xf32>
    %c3_38 = arith.constant 3 : index
    %c0_39 = arith.constant 0 : index
    %c0_40 = arith.constant 0 : index
    %105 = vector.load %arg5[%c3_38, %c0_39, %c0_40] : memref<49x2x256xf32, #tpu.memory_space<vmem>>, vector<1x2x256xf32>
    %106 = vector.shape_cast %105 : vector<1x2x256xf32> to vector<2x256xf32>
    %107 = arith.mulf %104, %106 : vector<2x256xf32>
    %108 = arith.addf %96, %107 : vector<2x256xf32>
    %c4 = arith.constant 4 : index
    %109 = memref.load %arg6[%c4] : memref<98xf32, #tpu.memory_space<smem>>
    %c53 = arith.constant 53 : index
    %110 = memref.load %arg6[%c53] : memref<98xf32, #tpu.memory_space<smem>>
    %111 = vector.broadcast %109 : f32 to vector<2x256xf32>
    %112 = arith.mulf %56, %111 : vector<2x256xf32>
    %113 = vector.broadcast %110 : f32 to vector<2x256xf32>
    %114 = arith.mulf %59, %113 : vector<2x256xf32>
    %115 = arith.addf %112, %114 : vector<2x256xf32>
    %c47_i32 = arith.constant 47 : i32
    %116 = tpu.dynamic_rotate %115 by %c47_i32 dim 1 : vector<2x256xf32>, i32 -> vector<2x256xf32>
    %c4_41 = arith.constant 4 : index
    %c0_42 = arith.constant 0 : index
    %c0_43 = arith.constant 0 : index
    %117 = vector.load %arg5[%c4_41, %c0_42, %c0_43] : memref<49x2x256xf32, #tpu.memory_space<vmem>>, vector<1x2x256xf32>
    %118 = vector.shape_cast %117 : vector<1x2x256xf32> to vector<2x256xf32>
    %119 = arith.mulf %116, %118 : vector<2x256xf32>
    %120 = arith.addf %108, %119 : vector<2x256xf32>
    %c5 = arith.constant 5 : index
    %121 = memref.load %arg6[%c5] : memref<98xf32, #tpu.memory_space<smem>>
    %c54 = arith.constant 54 : index
    %122 = memref.load %arg6[%c54] : memref<98xf32, #tpu.memory_space<smem>>
    %123 = vector.broadcast %121 : f32 to vector<2x256xf32>
    %124 = arith.mulf %56, %123 : vector<2x256xf32>
    %125 = vector.broadcast %122 : f32 to vector<2x256xf32>
    %126 = arith.mulf %59, %125 : vector<2x256xf32>
    %127 = arith.addf %124, %126 : vector<2x256xf32>
    %c46_i32 = arith.constant 46 : i32
    %128 = tpu.dynamic_rotate %127 by %c46_i32 dim 1 : vector<2x256xf32>, i32 -> vector<2x256xf32>
    %c5_44 = arith.constant 5 : index
    %c0_45 = arith.constant 0 : index
    %c0_46 = arith.constant 0 : index
    %129 = vector.load %arg5[%c5_44, %c0_45, %c0_46] : memref<49x2x256xf32, #tpu.memory_space<vmem>>, vector<1x2x256xf32>
    %130 = vector.shape_cast %129 : vector<1x2x256xf32> to vector<2x256xf32>
    %131 = arith.mulf %128, %130 : vector<2x256xf32>
    %132 = arith.addf %120, %131 : vector<2x256xf32>
    %c6 = arith.constant 6 : index
    %133 = memref.load %arg6[%c6] : memref<98xf32, #tpu.memory_space<smem>>
    %c55 = arith.constant 55 : index
    %134 = memref.load %arg6[%c55] : memref<98xf32, #tpu.memory_space<smem>>
    %135 = vector.broadcast %133 : f32 to vector<2x256xf32>
    %136 = arith.mulf %56, %135 : vector<2x256xf32>
    %137 = vector.broadcast %134 : f32 to vector<2x256xf32>
    %138 = arith.mulf %59, %137 : vector<2x256xf32>
    %139 = arith.addf %136, %138 : vector<2x256xf32>
    %c45_i32 = arith.constant 45 : i32
    %140 = tpu.dynamic_rotate %139 by %c45_i32 dim 1 : vector<2x256xf32>, i32 -> vector<2x256xf32>
    %c6_47 = arith.constant 6 : index
    %c0_48 = arith.constant 0 : index
    %c0_49 = arith.constant 0 : index
    %141 = vector.load %arg5[%c6_47, %c0_48, %c0_49] : memref<49x2x256xf32, #tpu.memory_space<vmem>>, vector<1x2x256xf32>
    %142 = vector.shape_cast %141 : vector<1x2x256xf32> to vector<2x256xf32>
    %143 = arith.mulf %140, %142 : vector<2x256xf32>
    %144 = arith.addf %132, %143 : vector<2x256xf32>
    %c7 = arith.constant 7 : index
    %145 = memref.load %arg6[%c7] : memref<98xf32, #tpu.memory_space<smem>>
    %c56 = arith.constant 56 : index
    %146 = memref.load %arg6[%c56] : memref<98xf32, #tpu.memory_space<smem>>
    %147 = vector.broadcast %145 : f32 to vector<2x256xf32>
    %148 = arith.mulf %56, %147 : vector<2x256xf32>
    %149 = vector.broadcast %146 : f32 to vector<2x256xf32>
    %150 = arith.mulf %59, %149 : vector<2x256xf32>
    %151 = arith.addf %148, %150 : vector<2x256xf32>
    %c35_i32 = arith.constant 35 : i32
    %152 = tpu.dynamic_rotate %151 by %c35_i32 dim 1 : vector<2x256xf32>, i32 -> vector<2x256xf32>
    %c7_50 = arith.constant 7 : index
    %c0_51 = arith.constant 0 : index
    %c0_52 = arith.constant 0 : index
    %153 = vector.load %arg5[%c7_50, %c0_51, %c0_52] : memref<49x2x256xf32, #tpu.memory_space<vmem>>, vector<1x2x256xf32>
    %154 = vector.shape_cast %153 : vector<1x2x256xf32> to vector<2x256xf32>
    %155 = arith.mulf %152, %154 : vector<2x256xf32>
    %156 = arith.addf %144, %155 : vector<2x256xf32>
    %c8 = arith.constant 8 : index
    %157 = memref.load %arg6[%c8] : memref<98xf32, #tpu.memory_space<smem>>
    %c57 = arith.constant 57 : index
    %158 = memref.load %arg6[%c57] : memref<98xf32, #tpu.memory_space<smem>>
    %159 = vector.broadcast %157 : f32 to vector<2x256xf32>
    %160 = arith.mulf %56, %159 : vector<2x256xf32>
    %161 = vector.broadcast %158 : f32 to vector<2x256xf32>
    %162 = arith.mulf %59, %161 : vector<2x256xf32>
    %163 = arith.addf %160, %162 : vector<2x256xf32>
    %c34_i32 = arith.constant 34 : i32
    %164 = tpu.dynamic_rotate %163 by %c34_i32 dim 1 : vector<2x256xf32>, i32 -> vector<2x256xf32>
    %c8_53 = arith.constant 8 : index
    %c0_54 = arith.constant 0 : index
    %c0_55 = arith.constant 0 : index
    %165 = vector.load %arg5[%c8_53, %c0_54, %c0_55] : memref<49x2x256xf32, #tpu.memory_space<vmem>>, vector<1x2x256xf32>
    %166 = vector.shape_cast %165 : vector<1x2x256xf32> to vector<2x256xf32>
    %167 = arith.mulf %164, %166 : vector<2x256xf32>
    %168 = arith.addf %156, %167 : vector<2x256xf32>
    %c9 = arith.constant 9 : index
    %169 = memref.load %arg6[%c9] : memref<98xf32, #tpu.memory_space<smem>>
    %c58 = arith.constant 58 : index
    %170 = memref.load %arg6[%c58] : memref<98xf32, #tpu.memory_space<smem>>
    %171 = vector.broadcast %169 : f32 to vector<2x256xf32>
    %172 = arith.mulf %56, %171 : vector<2x256xf32>
    %173 = vector.broadcast %170 : f32 to vector<2x256xf32>
    %174 = arith.mulf %59, %173 : vector<2x256xf32>
    %175 = arith.addf %172, %174 : vector<2x256xf32>
    %c33_i32 = arith.constant 33 : i32
    %176 = tpu.dynamic_rotate %175 by %c33_i32 dim 1 : vector<2x256xf32>, i32 -> vector<2x256xf32>
    %c9_56 = arith.constant 9 : index
    %c0_57 = arith.constant 0 : index
    %c0_58 = arith.constant 0 : index
    %177 = vector.load %arg5[%c9_56, %c0_57, %c0_58] : memref<49x2x256xf32, #tpu.memory_space<vmem>>, vector<1x2x256xf32>
    %178 = vector.shape_cast %177 : vector<1x2x256xf32> to vector<2x256xf32>
    %179 = arith.mulf %176, %178 : vector<2x256xf32>
    %180 = arith.addf %168, %179 : vector<2x256xf32>
    %c10 = arith.constant 10 : index
    %181 = memref.load %arg6[%c10] : memref<98xf32, #tpu.memory_space<smem>>
    %c59 = arith.constant 59 : index
    %182 = memref.load %arg6[%c59] : memref<98xf32, #tpu.memory_space<smem>>
    %183 = vector.broadcast %181 : f32 to vector<2x256xf32>
    %184 = arith.mulf %56, %183 : vector<2x256xf32>
    %185 = vector.broadcast %182 : f32 to vector<2x256xf32>
    %186 = arith.mulf %59, %185 : vector<2x256xf32>
    %187 = arith.addf %184, %186 : vector<2x256xf32>
    %c32_i32 = arith.constant 32 : i32
    %188 = tpu.dynamic_rotate %187 by %c32_i32 dim 1 : vector<2x256xf32>, i32 -> vector<2x256xf32>
    %c10_59 = arith.constant 10 : index
    %c0_60 = arith.constant 0 : index
    %c0_61 = arith.constant 0 : index
    %189 = vector.load %arg5[%c10_59, %c0_60, %c0_61] : memref<49x2x256xf32, #tpu.memory_space<vmem>>, vector<1x2x256xf32>
    %190 = vector.shape_cast %189 : vector<1x2x256xf32> to vector<2x256xf32>
    %191 = arith.mulf %188, %190 : vector<2x256xf32>
    %192 = arith.addf %180, %191 : vector<2x256xf32>
    %c11 = arith.constant 11 : index
    %193 = memref.load %arg6[%c11] : memref<98xf32, #tpu.memory_space<smem>>
    %c60 = arith.constant 60 : index
    %194 = memref.load %arg6[%c60] : memref<98xf32, #tpu.memory_space<smem>>
    %195 = vector.broadcast %193 : f32 to vector<2x256xf32>
    %196 = arith.mulf %56, %195 : vector<2x256xf32>
    %197 = vector.broadcast %194 : f32 to vector<2x256xf32>
    %198 = arith.mulf %59, %197 : vector<2x256xf32>
    %199 = arith.addf %196, %198 : vector<2x256xf32>
    %c31_i32 = arith.constant 31 : i32
    %200 = tpu.dynamic_rotate %199 by %c31_i32 dim 1 : vector<2x256xf32>, i32 -> vector<2x256xf32>
    %c11_62 = arith.constant 11 : index
    %c0_63 = arith.constant 0 : index
    %c0_64 = arith.constant 0 : index
    %201 = vector.load %arg5[%c11_62, %c0_63, %c0_64] : memref<49x2x256xf32, #tpu.memory_space<vmem>>, vector<1x2x256xf32>
    %202 = vector.shape_cast %201 : vector<1x2x256xf32> to vector<2x256xf32>
    %203 = arith.mulf %200, %202 : vector<2x256xf32>
    %204 = arith.addf %192, %203 : vector<2x256xf32>
    %c12 = arith.constant 12 : index
    %205 = memref.load %arg6[%c12] : memref<98xf32, #tpu.memory_space<smem>>
    %c61 = arith.constant 61 : index
    %206 = memref.load %arg6[%c61] : memref<98xf32, #tpu.memory_space<smem>>
    %207 = vector.broadcast %205 : f32 to vector<2x256xf32>
    %208 = arith.mulf %56, %207 : vector<2x256xf32>
    %209 = vector.broadcast %206 : f32 to vector<2x256xf32>
    %210 = arith.mulf %59, %209 : vector<2x256xf32>
    %211 = arith.addf %208, %210 : vector<2x256xf32>
    %c30_i32 = arith.constant 30 : i32
    %212 = tpu.dynamic_rotate %211 by %c30_i32 dim 1 : vector<2x256xf32>, i32 -> vector<2x256xf32>
    %c12_65 = arith.constant 12 : index
    %c0_66 = arith.constant 0 : index
    %c0_67 = arith.constant 0 : index
    %213 = vector.load %arg5[%c12_65, %c0_66, %c0_67] : memref<49x2x256xf32, #tpu.memory_space<vmem>>, vector<1x2x256xf32>
    %214 = vector.shape_cast %213 : vector<1x2x256xf32> to vector<2x256xf32>
    %215 = arith.mulf %212, %214 : vector<2x256xf32>
    %216 = arith.addf %204, %215 : vector<2x256xf32>
    %c13 = arith.constant 13 : index
    %217 = memref.load %arg6[%c13] : memref<98xf32, #tpu.memory_space<smem>>
    %c62 = arith.constant 62 : index
    %218 = memref.load %arg6[%c62] : memref<98xf32, #tpu.memory_space<smem>>
    %219 = vector.broadcast %217 : f32 to vector<2x256xf32>
    %220 = arith.mulf %56, %219 : vector<2x256xf32>
    %221 = vector.broadcast %218 : f32 to vector<2x256xf32>
    %222 = arith.mulf %59, %221 : vector<2x256xf32>
    %223 = arith.addf %220, %222 : vector<2x256xf32>
    %c29_i32 = arith.constant 29 : i32
    %224 = tpu.dynamic_rotate %223 by %c29_i32 dim 1 : vector<2x256xf32>, i32 -> vector<2x256xf32>
    %c13_68 = arith.constant 13 : index
    %c0_69 = arith.constant 0 : index
    %c0_70 = arith.constant 0 : index
    %225 = vector.load %arg5[%c13_68, %c0_69, %c0_70] : memref<49x2x256xf32, #tpu.memory_space<vmem>>, vector<1x2x256xf32>
    %226 = vector.shape_cast %225 : vector<1x2x256xf32> to vector<2x256xf32>
    %227 = arith.mulf %224, %226 : vector<2x256xf32>
    %228 = arith.addf %216, %227 : vector<2x256xf32>
    %c14 = arith.constant 14 : index
    %229 = memref.load %arg6[%c14] : memref<98xf32, #tpu.memory_space<smem>>
    %c63 = arith.constant 63 : index
    %230 = memref.load %arg6[%c63] : memref<98xf32, #tpu.memory_space<smem>>
    %231 = vector.broadcast %229 : f32 to vector<2x256xf32>
    %232 = arith.mulf %56, %231 : vector<2x256xf32>
    %233 = vector.broadcast %230 : f32 to vector<2x256xf32>
    %234 = arith.mulf %59, %233 : vector<2x256xf32>
    %235 = arith.addf %232, %234 : vector<2x256xf32>
    %c19_i32 = arith.constant 19 : i32
    %236 = tpu.dynamic_rotate %235 by %c19_i32 dim 1 : vector<2x256xf32>, i32 -> vector<2x256xf32>
    %c14_71 = arith.constant 14 : index
    %c0_72 = arith.constant 0 : index
    %c0_73 = arith.constant 0 : index
    %237 = vector.load %arg5[%c14_71, %c0_72, %c0_73] : memref<49x2x256xf32, #tpu.memory_space<vmem>>, vector<1x2x256xf32>
    %238 = vector.shape_cast %237 : vector<1x2x256xf32> to vector<2x256xf32>
    %239 = arith.mulf %236, %238 : vector<2x256xf32>
    %240 = arith.addf %228, %239 : vector<2x256xf32>
    %c15 = arith.constant 15 : index
    %241 = memref.load %arg6[%c15] : memref<98xf32, #tpu.memory_space<smem>>
    %c64 = arith.constant 64 : index
    %242 = memref.load %arg6[%c64] : memref<98xf32, #tpu.memory_space<smem>>
    %243 = vector.broadcast %241 : f32 to vector<2x256xf32>
    %244 = arith.mulf %56, %243 : vector<2x256xf32>
    %245 = vector.broadcast %242 : f32 to vector<2x256xf32>
    %246 = arith.mulf %59, %245 : vector<2x256xf32>
    %247 = arith.addf %244, %246 : vector<2x256xf32>
    %c18_i32 = arith.constant 18 : i32
    %248 = tpu.dynamic_rotate %247 by %c18_i32 dim 1 : vector<2x256xf32>, i32 -> vector<2x256xf32>
    %c15_74 = arith.constant 15 : index
    %c0_75 = arith.constant 0 : index
    %c0_76 = arith.constant 0 : index
    %249 = vector.load %arg5[%c15_74, %c0_75, %c0_76] : memref<49x2x256xf32, #tpu.memory_space<vmem>>, vector<1x2x256xf32>
    %250 = vector.shape_cast %249 : vector<1x2x256xf32> to vector<2x256xf32>
    %251 = arith.mulf %248, %250 : vector<2x256xf32>
    %252 = arith.addf %240, %251 : vector<2x256xf32>
    %c16 = arith.constant 16 : index
    %253 = memref.load %arg6[%c16] : memref<98xf32, #tpu.memory_space<smem>>
    %c65 = arith.constant 65 : index
    %254 = memref.load %arg6[%c65] : memref<98xf32, #tpu.memory_space<smem>>
    %255 = vector.broadcast %253 : f32 to vector<2x256xf32>
    %256 = arith.mulf %56, %255 : vector<2x256xf32>
    %257 = vector.broadcast %254 : f32 to vector<2x256xf32>
    %258 = arith.mulf %59, %257 : vector<2x256xf32>
    %259 = arith.addf %256, %258 : vector<2x256xf32>
    %c17_i32 = arith.constant 17 : i32
    %260 = tpu.dynamic_rotate %259 by %c17_i32 dim 1 : vector<2x256xf32>, i32 -> vector<2x256xf32>
    %c16_77 = arith.constant 16 : index
    %c0_78 = arith.constant 0 : index
    %c0_79 = arith.constant 0 : index
    %261 = vector.load %arg5[%c16_77, %c0_78, %c0_79] : memref<49x2x256xf32, #tpu.memory_space<vmem>>, vector<1x2x256xf32>
    %262 = vector.shape_cast %261 : vector<1x2x256xf32> to vector<2x256xf32>
    %263 = arith.mulf %260, %262 : vector<2x256xf32>
    %264 = arith.addf %252, %263 : vector<2x256xf32>
    %c17 = arith.constant 17 : index
    %265 = memref.load %arg6[%c17] : memref<98xf32, #tpu.memory_space<smem>>
    %c66 = arith.constant 66 : index
    %266 = memref.load %arg6[%c66] : memref<98xf32, #tpu.memory_space<smem>>
    %267 = vector.broadcast %265 : f32 to vector<2x256xf32>
    %268 = arith.mulf %56, %267 : vector<2x256xf32>
    %269 = vector.broadcast %266 : f32 to vector<2x256xf32>
    %270 = arith.mulf %59, %269 : vector<2x256xf32>
    %271 = arith.addf %268, %270 : vector<2x256xf32>
    %c16_i32 = arith.constant 16 : i32
    %272 = tpu.dynamic_rotate %271 by %c16_i32 dim 1 : vector<2x256xf32>, i32 -> vector<2x256xf32>
    %c17_80 = arith.constant 17 : index
    %c0_81 = arith.constant 0 : index
    %c0_82 = arith.constant 0 : index
    %273 = vector.load %arg5[%c17_80, %c0_81, %c0_82] : memref<49x2x256xf32, #tpu.memory_space<vmem>>, vector<1x2x256xf32>
    %274 = vector.shape_cast %273 : vector<1x2x256xf32> to vector<2x256xf32>
    %275 = arith.mulf %272, %274 : vector<2x256xf32>
    %276 = arith.addf %264, %275 : vector<2x256xf32>
    %c18 = arith.constant 18 : index
    %277 = memref.load %arg6[%c18] : memref<98xf32, #tpu.memory_space<smem>>
    %c67 = arith.constant 67 : index
    %278 = memref.load %arg6[%c67] : memref<98xf32, #tpu.memory_space<smem>>
    %279 = vector.broadcast %277 : f32 to vector<2x256xf32>
    %280 = arith.mulf %56, %279 : vector<2x256xf32>
    %281 = vector.broadcast %278 : f32 to vector<2x256xf32>
    %282 = arith.mulf %59, %281 : vector<2x256xf32>
    %283 = arith.addf %280, %282 : vector<2x256xf32>
    %c15_i32 = arith.constant 15 : i32
    %284 = tpu.dynamic_rotate %283 by %c15_i32 dim 1 : vector<2x256xf32>, i32 -> vector<2x256xf32>
    %c18_83 = arith.constant 18 : index
    %c0_84 = arith.constant 0 : index
    %c0_85 = arith.constant 0 : index
    %285 = vector.load %arg5[%c18_83, %c0_84, %c0_85] : memref<49x2x256xf32, #tpu.memory_space<vmem>>, vector<1x2x256xf32>
    %286 = vector.shape_cast %285 : vector<1x2x256xf32> to vector<2x256xf32>
    %287 = arith.mulf %284, %286 : vector<2x256xf32>
    %288 = arith.addf %276, %287 : vector<2x256xf32>
    %c19 = arith.constant 19 : index
    %289 = memref.load %arg6[%c19] : memref<98xf32, #tpu.memory_space<smem>>
    %c68 = arith.constant 68 : index
    %290 = memref.load %arg6[%c68] : memref<98xf32, #tpu.memory_space<smem>>
    %291 = vector.broadcast %289 : f32 to vector<2x256xf32>
    %292 = arith.mulf %56, %291 : vector<2x256xf32>
    %293 = vector.broadcast %290 : f32 to vector<2x256xf32>
    %294 = arith.mulf %59, %293 : vector<2x256xf32>
    %295 = arith.addf %292, %294 : vector<2x256xf32>
    %c14_i32 = arith.constant 14 : i32
    %296 = tpu.dynamic_rotate %295 by %c14_i32 dim 1 : vector<2x256xf32>, i32 -> vector<2x256xf32>
    %c19_86 = arith.constant 19 : index
    %c0_87 = arith.constant 0 : index
    %c0_88 = arith.constant 0 : index
    %297 = vector.load %arg5[%c19_86, %c0_87, %c0_88] : memref<49x2x256xf32, #tpu.memory_space<vmem>>, vector<1x2x256xf32>
    %298 = vector.shape_cast %297 : vector<1x2x256xf32> to vector<2x256xf32>
    %299 = arith.mulf %296, %298 : vector<2x256xf32>
    %300 = arith.addf %288, %299 : vector<2x256xf32>
    %c20 = arith.constant 20 : index
    %301 = memref.load %arg6[%c20] : memref<98xf32, #tpu.memory_space<smem>>
    %c69 = arith.constant 69 : index
    %302 = memref.load %arg6[%c69] : memref<98xf32, #tpu.memory_space<smem>>
    %303 = vector.broadcast %301 : f32 to vector<2x256xf32>
    %304 = arith.mulf %56, %303 : vector<2x256xf32>
    %305 = vector.broadcast %302 : f32 to vector<2x256xf32>
    %306 = arith.mulf %59, %305 : vector<2x256xf32>
    %307 = arith.addf %304, %306 : vector<2x256xf32>
    %c13_i32 = arith.constant 13 : i32
    %308 = tpu.dynamic_rotate %307 by %c13_i32 dim 1 : vector<2x256xf32>, i32 -> vector<2x256xf32>
    %c20_89 = arith.constant 20 : index
    %c0_90 = arith.constant 0 : index
    %c0_91 = arith.constant 0 : index
    %309 = vector.load %arg5[%c20_89, %c0_90, %c0_91] : memref<49x2x256xf32, #tpu.memory_space<vmem>>, vector<1x2x256xf32>
    %310 = vector.shape_cast %309 : vector<1x2x256xf32> to vector<2x256xf32>
    %311 = arith.mulf %308, %310 : vector<2x256xf32>
    %312 = arith.addf %300, %311 : vector<2x256xf32>
    %c21 = arith.constant 21 : index
    %313 = memref.load %arg6[%c21] : memref<98xf32, #tpu.memory_space<smem>>
    %c70 = arith.constant 70 : index
    %314 = memref.load %arg6[%c70] : memref<98xf32, #tpu.memory_space<smem>>
    %315 = vector.broadcast %313 : f32 to vector<2x256xf32>
    %316 = arith.mulf %56, %315 : vector<2x256xf32>
    %317 = vector.broadcast %314 : f32 to vector<2x256xf32>
    %318 = arith.mulf %59, %317 : vector<2x256xf32>
    %319 = arith.addf %316, %318 : vector<2x256xf32>
    %c3_i32 = arith.constant 3 : i32
    %320 = tpu.dynamic_rotate %319 by %c3_i32 dim 1 : vector<2x256xf32>, i32 -> vector<2x256xf32>
    %c21_92 = arith.constant 21 : index
    %c0_93 = arith.constant 0 : index
    %c0_94 = arith.constant 0 : index
    %321 = vector.load %arg5[%c21_92, %c0_93, %c0_94] : memref<49x2x256xf32, #tpu.memory_space<vmem>>, vector<1x2x256xf32>
    %322 = vector.shape_cast %321 : vector<1x2x256xf32> to vector<2x256xf32>
    %323 = arith.mulf %320, %322 : vector<2x256xf32>
    %324 = arith.addf %312, %323 : vector<2x256xf32>
    %c22 = arith.constant 22 : index
    %325 = memref.load %arg6[%c22] : memref<98xf32, #tpu.memory_space<smem>>
    %c71 = arith.constant 71 : index
    %326 = memref.load %arg6[%c71] : memref<98xf32, #tpu.memory_space<smem>>
    %327 = vector.broadcast %325 : f32 to vector<2x256xf32>
    %328 = arith.mulf %56, %327 : vector<2x256xf32>
    %329 = vector.broadcast %326 : f32 to vector<2x256xf32>
    %330 = arith.mulf %59, %329 : vector<2x256xf32>
    %331 = arith.addf %328, %330 : vector<2x256xf32>
    %c2_i32 = arith.constant 2 : i32
    %332 = tpu.dynamic_rotate %331 by %c2_i32 dim 1 : vector<2x256xf32>, i32 -> vector<2x256xf32>
    %c22_95 = arith.constant 22 : index
    %c0_96 = arith.constant 0 : index
    %c0_97 = arith.constant 0 : index
    %333 = vector.load %arg5[%c22_95, %c0_96, %c0_97] : memref<49x2x256xf32, #tpu.memory_space<vmem>>, vector<1x2x256xf32>
    %334 = vector.shape_cast %333 : vector<1x2x256xf32> to vector<2x256xf32>
    %335 = arith.mulf %332, %334 : vector<2x256xf32>
    %336 = arith.addf %324, %335 : vector<2x256xf32>
    %c23 = arith.constant 23 : index
    %337 = memref.load %arg6[%c23] : memref<98xf32, #tpu.memory_space<smem>>
    %c72 = arith.constant 72 : index
    %338 = memref.load %arg6[%c72] : memref<98xf32, #tpu.memory_space<smem>>
    %339 = vector.broadcast %337 : f32 to vector<2x256xf32>
    %340 = arith.mulf %56, %339 : vector<2x256xf32>
    %341 = vector.broadcast %338 : f32 to vector<2x256xf32>
    %342 = arith.mulf %59, %341 : vector<2x256xf32>
    %343 = arith.addf %340, %342 : vector<2x256xf32>
    %c1_i32 = arith.constant 1 : i32
    %344 = tpu.dynamic_rotate %343 by %c1_i32 dim 1 : vector<2x256xf32>, i32 -> vector<2x256xf32>
    %c23_98 = arith.constant 23 : index
    %c0_99 = arith.constant 0 : index
    %c0_100 = arith.constant 0 : index
    %345 = vector.load %arg5[%c23_98, %c0_99, %c0_100] : memref<49x2x256xf32, #tpu.memory_space<vmem>>, vector<1x2x256xf32>
    %346 = vector.shape_cast %345 : vector<1x2x256xf32> to vector<2x256xf32>
    %347 = arith.mulf %344, %346 : vector<2x256xf32>
    %348 = arith.addf %336, %347 : vector<2x256xf32>
    %c24 = arith.constant 24 : index
    %349 = memref.load %arg6[%c24] : memref<98xf32, #tpu.memory_space<smem>>
    %c73 = arith.constant 73 : index
    %350 = memref.load %arg6[%c73] : memref<98xf32, #tpu.memory_space<smem>>
    %351 = vector.broadcast %349 : f32 to vector<2x256xf32>
    %352 = arith.mulf %56, %351 : vector<2x256xf32>
    %353 = vector.broadcast %350 : f32 to vector<2x256xf32>
    %354 = arith.mulf %59, %353 : vector<2x256xf32>
    %355 = arith.addf %352, %354 : vector<2x256xf32>
    %c24_101 = arith.constant 24 : index
    %c0_102 = arith.constant 0 : index
    %c0_103 = arith.constant 0 : index
    %356 = vector.load %arg5[%c24_101, %c0_102, %c0_103] : memref<49x2x256xf32, #tpu.memory_space<vmem>>, vector<1x2x256xf32>
    %357 = vector.shape_cast %356 : vector<1x2x256xf32> to vector<2x256xf32>
    %358 = arith.mulf %355, %357 : vector<2x256xf32>
    %359 = arith.addf %348, %358 : vector<2x256xf32>
    %c25 = arith.constant 25 : index
    %360 = memref.load %arg6[%c25] : memref<98xf32, #tpu.memory_space<smem>>
    %c74 = arith.constant 74 : index
    %361 = memref.load %arg6[%c74] : memref<98xf32, #tpu.memory_space<smem>>
    %362 = vector.broadcast %360 : f32 to vector<2x256xf32>
    %363 = arith.mulf %56, %362 : vector<2x256xf32>
    %364 = vector.broadcast %361 : f32 to vector<2x256xf32>
    %365 = arith.mulf %59, %364 : vector<2x256xf32>
    %366 = arith.addf %363, %365 : vector<2x256xf32>
    %c255_i32 = arith.constant 255 : i32
    %367 = tpu.dynamic_rotate %366 by %c255_i32 dim 1 : vector<2x256xf32>, i32 -> vector<2x256xf32>
    %c25_104 = arith.constant 25 : index
    %c0_105 = arith.constant 0 : index
    %c0_106 = arith.constant 0 : index
    %368 = vector.load %arg5[%c25_104, %c0_105, %c0_106] : memref<49x2x256xf32, #tpu.memory_space<vmem>>, vector<1x2x256xf32>
    %369 = vector.shape_cast %368 : vector<1x2x256xf32> to vector<2x256xf32>
    %370 = arith.mulf %367, %369 : vector<2x256xf32>
    %371 = arith.addf %359, %370 : vector<2x256xf32>
    %c26 = arith.constant 26 : index
    %372 = memref.load %arg6[%c26] : memref<98xf32, #tpu.memory_space<smem>>
    %c75 = arith.constant 75 : index
    %373 = memref.load %arg6[%c75] : memref<98xf32, #tpu.memory_space<smem>>
    %374 = vector.broadcast %372 : f32 to vector<2x256xf32>
    %375 = arith.mulf %56, %374 : vector<2x256xf32>
    %376 = vector.broadcast %373 : f32 to vector<2x256xf32>
    %377 = arith.mulf %59, %376 : vector<2x256xf32>
    %378 = arith.addf %375, %377 : vector<2x256xf32>
    %c254_i32 = arith.constant 254 : i32
    %379 = tpu.dynamic_rotate %378 by %c254_i32 dim 1 : vector<2x256xf32>, i32 -> vector<2x256xf32>
    %c26_107 = arith.constant 26 : index
    %c0_108 = arith.constant 0 : index
    %c0_109 = arith.constant 0 : index
    %380 = vector.load %arg5[%c26_107, %c0_108, %c0_109] : memref<49x2x256xf32, #tpu.memory_space<vmem>>, vector<1x2x256xf32>
    %381 = vector.shape_cast %380 : vector<1x2x256xf32> to vector<2x256xf32>
    %382 = arith.mulf %379, %381 : vector<2x256xf32>
    %383 = arith.addf %371, %382 : vector<2x256xf32>
    %c27 = arith.constant 27 : index
    %384 = memref.load %arg6[%c27] : memref<98xf32, #tpu.memory_space<smem>>
    %c76 = arith.constant 76 : index
    %385 = memref.load %arg6[%c76] : memref<98xf32, #tpu.memory_space<smem>>
    %386 = vector.broadcast %384 : f32 to vector<2x256xf32>
    %387 = arith.mulf %56, %386 : vector<2x256xf32>
    %388 = vector.broadcast %385 : f32 to vector<2x256xf32>
    %389 = arith.mulf %59, %388 : vector<2x256xf32>
    %390 = arith.addf %387, %389 : vector<2x256xf32>
    %c253_i32 = arith.constant 253 : i32
    %391 = tpu.dynamic_rotate %390 by %c253_i32 dim 1 : vector<2x256xf32>, i32 -> vector<2x256xf32>
    %c27_110 = arith.constant 27 : index
    %c0_111 = arith.constant 0 : index
    %c0_112 = arith.constant 0 : index
    %392 = vector.load %arg5[%c27_110, %c0_111, %c0_112] : memref<49x2x256xf32, #tpu.memory_space<vmem>>, vector<1x2x256xf32>
    %393 = vector.shape_cast %392 : vector<1x2x256xf32> to vector<2x256xf32>
    %394 = arith.mulf %391, %393 : vector<2x256xf32>
    %395 = arith.addf %383, %394 : vector<2x256xf32>
    %c28 = arith.constant 28 : index
    %396 = memref.load %arg6[%c28] : memref<98xf32, #tpu.memory_space<smem>>
    %c77 = arith.constant 77 : index
    %397 = memref.load %arg6[%c77] : memref<98xf32, #tpu.memory_space<smem>>
    %398 = vector.broadcast %396 : f32 to vector<2x256xf32>
    %399 = arith.mulf %56, %398 : vector<2x256xf32>
    %400 = vector.broadcast %397 : f32 to vector<2x256xf32>
    %401 = arith.mulf %59, %400 : vector<2x256xf32>
    %402 = arith.addf %399, %401 : vector<2x256xf32>
    %c243_i32 = arith.constant 243 : i32
    %403 = tpu.dynamic_rotate %402 by %c243_i32 dim 1 : vector<2x256xf32>, i32 -> vector<2x256xf32>
    %c28_113 = arith.constant 28 : index
    %c0_114 = arith.constant 0 : index
    %c0_115 = arith.constant 0 : index
    %404 = vector.load %arg5[%c28_113, %c0_114, %c0_115] : memref<49x2x256xf32, #tpu.memory_space<vmem>>, vector<1x2x256xf32>
    %405 = vector.shape_cast %404 : vector<1x2x256xf32> to vector<2x256xf32>
    %406 = arith.mulf %403, %405 : vector<2x256xf32>
    %407 = arith.addf %395, %406 : vector<2x256xf32>
    %c29 = arith.constant 29 : index
    %408 = memref.load %arg6[%c29] : memref<98xf32, #tpu.memory_space<smem>>
    %c78 = arith.constant 78 : index
    %409 = memref.load %arg6[%c78] : memref<98xf32, #tpu.memory_space<smem>>
    %410 = vector.broadcast %408 : f32 to vector<2x256xf32>
    %411 = arith.mulf %56, %410 : vector<2x256xf32>
    %412 = vector.broadcast %409 : f32 to vector<2x256xf32>
    %413 = arith.mulf %59, %412 : vector<2x256xf32>
    %414 = arith.addf %411, %413 : vector<2x256xf32>
    %c242_i32 = arith.constant 242 : i32
    %415 = tpu.dynamic_rotate %414 by %c242_i32 dim 1 : vector<2x256xf32>, i32 -> vector<2x256xf32>
    %c29_116 = arith.constant 29 : index
    %c0_117 = arith.constant 0 : index
    %c0_118 = arith.constant 0 : index
    %416 = vector.load %arg5[%c29_116, %c0_117, %c0_118] : memref<49x2x256xf32, #tpu.memory_space<vmem>>, vector<1x2x256xf32>
    %417 = vector.shape_cast %416 : vector<1x2x256xf32> to vector<2x256xf32>
    %418 = arith.mulf %415, %417 : vector<2x256xf32>
    %419 = arith.addf %407, %418 : vector<2x256xf32>
    %c30 = arith.constant 30 : index
    %420 = memref.load %arg6[%c30] : memref<98xf32, #tpu.memory_space<smem>>
    %c79 = arith.constant 79 : index
    %421 = memref.load %arg6[%c79] : memref<98xf32, #tpu.memory_space<smem>>
    %422 = vector.broadcast %420 : f32 to vector<2x256xf32>
    %423 = arith.mulf %56, %422 : vector<2x256xf32>
    %424 = vector.broadcast %421 : f32 to vector<2x256xf32>
    %425 = arith.mulf %59, %424 : vector<2x256xf32>
    %426 = arith.addf %423, %425 : vector<2x256xf32>
    %c241_i32 = arith.constant 241 : i32
    %427 = tpu.dynamic_rotate %426 by %c241_i32 dim 1 : vector<2x256xf32>, i32 -> vector<2x256xf32>
    %c30_119 = arith.constant 30 : index
    %c0_120 = arith.constant 0 : index
    %c0_121 = arith.constant 0 : index
    %428 = vector.load %arg5[%c30_119, %c0_120, %c0_121] : memref<49x2x256xf32, #tpu.memory_space<vmem>>, vector<1x2x256xf32>
    %429 = vector.shape_cast %428 : vector<1x2x256xf32> to vector<2x256xf32>
    %430 = arith.mulf %427, %429 : vector<2x256xf32>
    %431 = arith.addf %419, %430 : vector<2x256xf32>
    %c31 = arith.constant 31 : index
    %432 = memref.load %arg6[%c31] : memref<98xf32, #tpu.memory_space<smem>>
    %c80 = arith.constant 80 : index
    %433 = memref.load %arg6[%c80] : memref<98xf32, #tpu.memory_space<smem>>
    %434 = vector.broadcast %432 : f32 to vector<2x256xf32>
    %435 = arith.mulf %56, %434 : vector<2x256xf32>
    %436 = vector.broadcast %433 : f32 to vector<2x256xf32>
    %437 = arith.mulf %59, %436 : vector<2x256xf32>
    %438 = arith.addf %435, %437 : vector<2x256xf32>
    %c240_i32 = arith.constant 240 : i32
    %439 = tpu.dynamic_rotate %438 by %c240_i32 dim 1 : vector<2x256xf32>, i32 -> vector<2x256xf32>
    %c31_122 = arith.constant 31 : index
    %c0_123 = arith.constant 0 : index
    %c0_124 = arith.constant 0 : index
    %440 = vector.load %arg5[%c31_122, %c0_123, %c0_124] : memref<49x2x256xf32, #tpu.memory_space<vmem>>, vector<1x2x256xf32>
    %441 = vector.shape_cast %440 : vector<1x2x256xf32> to vector<2x256xf32>
    %442 = arith.mulf %439, %441 : vector<2x256xf32>
    %443 = arith.addf %431, %442 : vector<2x256xf32>
    %c32 = arith.constant 32 : index
    %444 = memref.load %arg6[%c32] : memref<98xf32, #tpu.memory_space<smem>>
    %c81 = arith.constant 81 : index
    %445 = memref.load %arg6[%c81] : memref<98xf32, #tpu.memory_space<smem>>
    %446 = vector.broadcast %444 : f32 to vector<2x256xf32>
    %447 = arith.mulf %56, %446 : vector<2x256xf32>
    %448 = vector.broadcast %445 : f32 to vector<2x256xf32>
    %449 = arith.mulf %59, %448 : vector<2x256xf32>
    %450 = arith.addf %447, %449 : vector<2x256xf32>
    %c239_i32 = arith.constant 239 : i32
    %451 = tpu.dynamic_rotate %450 by %c239_i32 dim 1 : vector<2x256xf32>, i32 -> vector<2x256xf32>
    %c32_125 = arith.constant 32 : index
    %c0_126 = arith.constant 0 : index
    %c0_127 = arith.constant 0 : index
    %452 = vector.load %arg5[%c32_125, %c0_126, %c0_127] : memref<49x2x256xf32, #tpu.memory_space<vmem>>, vector<1x2x256xf32>
    %453 = vector.shape_cast %452 : vector<1x2x256xf32> to vector<2x256xf32>
    %454 = arith.mulf %451, %453 : vector<2x256xf32>
    %455 = arith.addf %443, %454 : vector<2x256xf32>
    %c33 = arith.constant 33 : index
    %456 = memref.load %arg6[%c33] : memref<98xf32, #tpu.memory_space<smem>>
    %c82 = arith.constant 82 : index
    %457 = memref.load %arg6[%c82] : memref<98xf32, #tpu.memory_space<smem>>
    %458 = vector.broadcast %456 : f32 to vector<2x256xf32>
    %459 = arith.mulf %56, %458 : vector<2x256xf32>
    %460 = vector.broadcast %457 : f32 to vector<2x256xf32>
    %461 = arith.mulf %59, %460 : vector<2x256xf32>
    %462 = arith.addf %459, %461 : vector<2x256xf32>
    %c238_i32 = arith.constant 238 : i32
    %463 = tpu.dynamic_rotate %462 by %c238_i32 dim 1 : vector<2x256xf32>, i32 -> vector<2x256xf32>
    %c33_128 = arith.constant 33 : index
    %c0_129 = arith.constant 0 : index
    %c0_130 = arith.constant 0 : index
    %464 = vector.load %arg5[%c33_128, %c0_129, %c0_130] : memref<49x2x256xf32, #tpu.memory_space<vmem>>, vector<1x2x256xf32>
    %465 = vector.shape_cast %464 : vector<1x2x256xf32> to vector<2x256xf32>
    %466 = arith.mulf %463, %465 : vector<2x256xf32>
    %467 = arith.addf %455, %466 : vector<2x256xf32>
    %c34 = arith.constant 34 : index
    %468 = memref.load %arg6[%c34] : memref<98xf32, #tpu.memory_space<smem>>
    %c83 = arith.constant 83 : index
    %469 = memref.load %arg6[%c83] : memref<98xf32, #tpu.memory_space<smem>>
    %470 = vector.broadcast %468 : f32 to vector<2x256xf32>
    %471 = arith.mulf %56, %470 : vector<2x256xf32>
    %472 = vector.broadcast %469 : f32 to vector<2x256xf32>
    %473 = arith.mulf %59, %472 : vector<2x256xf32>
    %474 = arith.addf %471, %473 : vector<2x256xf32>
    %c237_i32 = arith.constant 237 : i32
    %475 = tpu.dynamic_rotate %474 by %c237_i32 dim 1 : vector<2x256xf32>, i32 -> vector<2x256xf32>
    %c34_131 = arith.constant 34 : index
    %c0_132 = arith.constant 0 : index
    %c0_133 = arith.constant 0 : index
    %476 = vector.load %arg5[%c34_131, %c0_132, %c0_133] : memref<49x2x256xf32, #tpu.memory_space<vmem>>, vector<1x2x256xf32>
    %477 = vector.shape_cast %476 : vector<1x2x256xf32> to vector<2x256xf32>
    %478 = arith.mulf %475, %477 : vector<2x256xf32>
    %479 = arith.addf %467, %478 : vector<2x256xf32>
    %c35 = arith.constant 35 : index
    %480 = memref.load %arg6[%c35] : memref<98xf32, #tpu.memory_space<smem>>
    %c84 = arith.constant 84 : index
    %481 = memref.load %arg6[%c84] : memref<98xf32, #tpu.memory_space<smem>>
    %482 = vector.broadcast %480 : f32 to vector<2x256xf32>
    %483 = arith.mulf %56, %482 : vector<2x256xf32>
    %484 = vector.broadcast %481 : f32 to vector<2x256xf32>
    %485 = arith.mulf %59, %484 : vector<2x256xf32>
    %486 = arith.addf %483, %485 : vector<2x256xf32>
    %c227_i32 = arith.constant 227 : i32
    %487 = tpu.dynamic_rotate %486 by %c227_i32 dim 1 : vector<2x256xf32>, i32 -> vector<2x256xf32>
    %c35_134 = arith.constant 35 : index
    %c0_135 = arith.constant 0 : index
    %c0_136 = arith.constant 0 : index
    %488 = vector.load %arg5[%c35_134, %c0_135, %c0_136] : memref<49x2x256xf32, #tpu.memory_space<vmem>>, vector<1x2x256xf32>
    %489 = vector.shape_cast %488 : vector<1x2x256xf32> to vector<2x256xf32>
    %490 = arith.mulf %487, %489 : vector<2x256xf32>
    %491 = arith.addf %479, %490 : vector<2x256xf32>
    %c36 = arith.constant 36 : index
    %492 = memref.load %arg6[%c36] : memref<98xf32, #tpu.memory_space<smem>>
    %c85 = arith.constant 85 : index
    %493 = memref.load %arg6[%c85] : memref<98xf32, #tpu.memory_space<smem>>
    %494 = vector.broadcast %492 : f32 to vector<2x256xf32>
    %495 = arith.mulf %56, %494 : vector<2x256xf32>
    %496 = vector.broadcast %493 : f32 to vector<2x256xf32>
    %497 = arith.mulf %59, %496 : vector<2x256xf32>
    %498 = arith.addf %495, %497 : vector<2x256xf32>
    %c226_i32 = arith.constant 226 : i32
    %499 = tpu.dynamic_rotate %498 by %c226_i32 dim 1 : vector<2x256xf32>, i32 -> vector<2x256xf32>
    %c36_137 = arith.constant 36 : index
    %c0_138 = arith.constant 0 : index
    %c0_139 = arith.constant 0 : index
    %500 = vector.load %arg5[%c36_137, %c0_138, %c0_139] : memref<49x2x256xf32, #tpu.memory_space<vmem>>, vector<1x2x256xf32>
    %501 = vector.shape_cast %500 : vector<1x2x256xf32> to vector<2x256xf32>
    %502 = arith.mulf %499, %501 : vector<2x256xf32>
    %503 = arith.addf %491, %502 : vector<2x256xf32>
    %c37 = arith.constant 37 : index
    %504 = memref.load %arg6[%c37] : memref<98xf32, #tpu.memory_space<smem>>
    %c86 = arith.constant 86 : index
    %505 = memref.load %arg6[%c86] : memref<98xf32, #tpu.memory_space<smem>>
    %506 = vector.broadcast %504 : f32 to vector<2x256xf32>
    %507 = arith.mulf %56, %506 : vector<2x256xf32>
    %508 = vector.broadcast %505 : f32 to vector<2x256xf32>
    %509 = arith.mulf %59, %508 : vector<2x256xf32>
    %510 = arith.addf %507, %509 : vector<2x256xf32>
    %c225_i32 = arith.constant 225 : i32
    %511 = tpu.dynamic_rotate %510 by %c225_i32 dim 1 : vector<2x256xf32>, i32 -> vector<2x256xf32>
    %c37_140 = arith.constant 37 : index
    %c0_141 = arith.constant 0 : index
    %c0_142 = arith.constant 0 : index
    %512 = vector.load %arg5[%c37_140, %c0_141, %c0_142] : memref<49x2x256xf32, #tpu.memory_space<vmem>>, vector<1x2x256xf32>
    %513 = vector.shape_cast %512 : vector<1x2x256xf32> to vector<2x256xf32>
    %514 = arith.mulf %511, %513 : vector<2x256xf32>
    %515 = arith.addf %503, %514 : vector<2x256xf32>
    %c38 = arith.constant 38 : index
    %516 = memref.load %arg6[%c38] : memref<98xf32, #tpu.memory_space<smem>>
    %c87 = arith.constant 87 : index
    %517 = memref.load %arg6[%c87] : memref<98xf32, #tpu.memory_space<smem>>
    %518 = vector.broadcast %516 : f32 to vector<2x256xf32>
    %519 = arith.mulf %56, %518 : vector<2x256xf32>
    %520 = vector.broadcast %517 : f32 to vector<2x256xf32>
    %521 = arith.mulf %59, %520 : vector<2x256xf32>
    %522 = arith.addf %519, %521 : vector<2x256xf32>
    %c224_i32 = arith.constant 224 : i32
    %523 = tpu.dynamic_rotate %522 by %c224_i32 dim 1 : vector<2x256xf32>, i32 -> vector<2x256xf32>
    %c38_143 = arith.constant 38 : index
    %c0_144 = arith.constant 0 : index
    %c0_145 = arith.constant 0 : index
    %524 = vector.load %arg5[%c38_143, %c0_144, %c0_145] : memref<49x2x256xf32, #tpu.memory_space<vmem>>, vector<1x2x256xf32>
    %525 = vector.shape_cast %524 : vector<1x2x256xf32> to vector<2x256xf32>
    %526 = arith.mulf %523, %525 : vector<2x256xf32>
    %527 = arith.addf %515, %526 : vector<2x256xf32>
    %c39 = arith.constant 39 : index
    %528 = memref.load %arg6[%c39] : memref<98xf32, #tpu.memory_space<smem>>
    %c88 = arith.constant 88 : index
    %529 = memref.load %arg6[%c88] : memref<98xf32, #tpu.memory_space<smem>>
    %530 = vector.broadcast %528 : f32 to vector<2x256xf32>
    %531 = arith.mulf %56, %530 : vector<2x256xf32>
    %532 = vector.broadcast %529 : f32 to vector<2x256xf32>
    %533 = arith.mulf %59, %532 : vector<2x256xf32>
    %534 = arith.addf %531, %533 : vector<2x256xf32>
    %c223_i32 = arith.constant 223 : i32
    %535 = tpu.dynamic_rotate %534 by %c223_i32 dim 1 : vector<2x256xf32>, i32 -> vector<2x256xf32>
    %c39_146 = arith.constant 39 : index
    %c0_147 = arith.constant 0 : index
    %c0_148 = arith.constant 0 : index
    %536 = vector.load %arg5[%c39_146, %c0_147, %c0_148] : memref<49x2x256xf32, #tpu.memory_space<vmem>>, vector<1x2x256xf32>
    %537 = vector.shape_cast %536 : vector<1x2x256xf32> to vector<2x256xf32>
    %538 = arith.mulf %535, %537 : vector<2x256xf32>
    %539 = arith.addf %527, %538 : vector<2x256xf32>
    %c40 = arith.constant 40 : index
    %540 = memref.load %arg6[%c40] : memref<98xf32, #tpu.memory_space<smem>>
    %c89 = arith.constant 89 : index
    %541 = memref.load %arg6[%c89] : memref<98xf32, #tpu.memory_space<smem>>
    %542 = vector.broadcast %540 : f32 to vector<2x256xf32>
    %543 = arith.mulf %56, %542 : vector<2x256xf32>
    %544 = vector.broadcast %541 : f32 to vector<2x256xf32>
    %545 = arith.mulf %59, %544 : vector<2x256xf32>
    %546 = arith.addf %543, %545 : vector<2x256xf32>
    %c222_i32 = arith.constant 222 : i32
    %547 = tpu.dynamic_rotate %546 by %c222_i32 dim 1 : vector<2x256xf32>, i32 -> vector<2x256xf32>
    %c40_149 = arith.constant 40 : index
    %c0_150 = arith.constant 0 : index
    %c0_151 = arith.constant 0 : index
    %548 = vector.load %arg5[%c40_149, %c0_150, %c0_151] : memref<49x2x256xf32, #tpu.memory_space<vmem>>, vector<1x2x256xf32>
    %549 = vector.shape_cast %548 : vector<1x2x256xf32> to vector<2x256xf32>
    %550 = arith.mulf %547, %549 : vector<2x256xf32>
    %551 = arith.addf %539, %550 : vector<2x256xf32>
    %c41 = arith.constant 41 : index
    %552 = memref.load %arg6[%c41] : memref<98xf32, #tpu.memory_space<smem>>
    %c90 = arith.constant 90 : index
    %553 = memref.load %arg6[%c90] : memref<98xf32, #tpu.memory_space<smem>>
    %554 = vector.broadcast %552 : f32 to vector<2x256xf32>
    %555 = arith.mulf %56, %554 : vector<2x256xf32>
    %556 = vector.broadcast %553 : f32 to vector<2x256xf32>
    %557 = arith.mulf %59, %556 : vector<2x256xf32>
    %558 = arith.addf %555, %557 : vector<2x256xf32>
    %c221_i32 = arith.constant 221 : i32
    %559 = tpu.dynamic_rotate %558 by %c221_i32 dim 1 : vector<2x256xf32>, i32 -> vector<2x256xf32>
    %c41_152 = arith.constant 41 : index
    %c0_153 = arith.constant 0 : index
    %c0_154 = arith.constant 0 : index
    %560 = vector.load %arg5[%c41_152, %c0_153, %c0_154] : memref<49x2x256xf32, #tpu.memory_space<vmem>>, vector<1x2x256xf32>
    %561 = vector.shape_cast %560 : vector<1x2x256xf32> to vector<2x256xf32>
    %562 = arith.mulf %559, %561 : vector<2x256xf32>
    %563 = arith.addf %551, %562 : vector<2x256xf32>
    %c42 = arith.constant 42 : index
    %564 = memref.load %arg6[%c42] : memref<98xf32, #tpu.memory_space<smem>>
    %c91 = arith.constant 91 : index
    %565 = memref.load %arg6[%c91] : memref<98xf32, #tpu.memory_space<smem>>
    %566 = vector.broadcast %564 : f32 to vector<2x256xf32>
    %567 = arith.mulf %56, %566 : vector<2x256xf32>
    %568 = vector.broadcast %565 : f32 to vector<2x256xf32>
    %569 = arith.mulf %59, %568 : vector<2x256xf32>
    %570 = arith.addf %567, %569 : vector<2x256xf32>
    %c211_i32 = arith.constant 211 : i32
    %571 = tpu.dynamic_rotate %570 by %c211_i32 dim 1 : vector<2x256xf32>, i32 -> vector<2x256xf32>
    %c42_155 = arith.constant 42 : index
    %c0_156 = arith.constant 0 : index
    %c0_157 = arith.constant 0 : index
    %572 = vector.load %arg5[%c42_155, %c0_156, %c0_157] : memref<49x2x256xf32, #tpu.memory_space<vmem>>, vector<1x2x256xf32>
    %573 = vector.shape_cast %572 : vector<1x2x256xf32> to vector<2x256xf32>
    %574 = arith.mulf %571, %573 : vector<2x256xf32>
    %575 = arith.addf %563, %574 : vector<2x256xf32>
    %c43 = arith.constant 43 : index
    %576 = memref.load %arg6[%c43] : memref<98xf32, #tpu.memory_space<smem>>
    %c92 = arith.constant 92 : index
    %577 = memref.load %arg6[%c92] : memref<98xf32, #tpu.memory_space<smem>>
    %578 = vector.broadcast %576 : f32 to vector<2x256xf32>
    %579 = arith.mulf %56, %578 : vector<2x256xf32>
    %580 = vector.broadcast %577 : f32 to vector<2x256xf32>
    %581 = arith.mulf %59, %580 : vector<2x256xf32>
    %582 = arith.addf %579, %581 : vector<2x256xf32>
    %c210_i32 = arith.constant 210 : i32
    %583 = tpu.dynamic_rotate %582 by %c210_i32 dim 1 : vector<2x256xf32>, i32 -> vector<2x256xf32>
    %c43_158 = arith.constant 43 : index
    %c0_159 = arith.constant 0 : index
    %c0_160 = arith.constant 0 : index
    %584 = vector.load %arg5[%c43_158, %c0_159, %c0_160] : memref<49x2x256xf32, #tpu.memory_space<vmem>>, vector<1x2x256xf32>
    %585 = vector.shape_cast %584 : vector<1x2x256xf32> to vector<2x256xf32>
    %586 = arith.mulf %583, %585 : vector<2x256xf32>
    %587 = arith.addf %575, %586 : vector<2x256xf32>
    %c44 = arith.constant 44 : index
    %588 = memref.load %arg6[%c44] : memref<98xf32, #tpu.memory_space<smem>>
    %c93 = arith.constant 93 : index
    %589 = memref.load %arg6[%c93] : memref<98xf32, #tpu.memory_space<smem>>
    %590 = vector.broadcast %588 : f32 to vector<2x256xf32>
    %591 = arith.mulf %56, %590 : vector<2x256xf32>
    %592 = vector.broadcast %589 : f32 to vector<2x256xf32>
    %593 = arith.mulf %59, %592 : vector<2x256xf32>
    %594 = arith.addf %591, %593 : vector<2x256xf32>
    %c209_i32 = arith.constant 209 : i32
    %595 = tpu.dynamic_rotate %594 by %c209_i32 dim 1 : vector<2x256xf32>, i32 -> vector<2x256xf32>
    %c44_161 = arith.constant 44 : index
    %c0_162 = arith.constant 0 : index
    %c0_163 = arith.constant 0 : index
    %596 = vector.load %arg5[%c44_161, %c0_162, %c0_163] : memref<49x2x256xf32, #tpu.memory_space<vmem>>, vector<1x2x256xf32>
    %597 = vector.shape_cast %596 : vector<1x2x256xf32> to vector<2x256xf32>
    %598 = arith.mulf %595, %597 : vector<2x256xf32>
    %599 = arith.addf %587, %598 : vector<2x256xf32>
    %c45 = arith.constant 45 : index
    %600 = memref.load %arg6[%c45] : memref<98xf32, #tpu.memory_space<smem>>
    %c94 = arith.constant 94 : index
    %601 = memref.load %arg6[%c94] : memref<98xf32, #tpu.memory_space<smem>>
    %602 = vector.broadcast %600 : f32 to vector<2x256xf32>
    %603 = arith.mulf %56, %602 : vector<2x256xf32>
    %604 = vector.broadcast %601 : f32 to vector<2x256xf32>
    %605 = arith.mulf %59, %604 : vector<2x256xf32>
    %606 = arith.addf %603, %605 : vector<2x256xf32>
    %c208_i32 = arith.constant 208 : i32
    %607 = tpu.dynamic_rotate %606 by %c208_i32 dim 1 : vector<2x256xf32>, i32 -> vector<2x256xf32>
    %c45_164 = arith.constant 45 : index
    %c0_165 = arith.constant 0 : index
    %c0_166 = arith.constant 0 : index
    %608 = vector.load %arg5[%c45_164, %c0_165, %c0_166] : memref<49x2x256xf32, #tpu.memory_space<vmem>>, vector<1x2x256xf32>
    %609 = vector.shape_cast %608 : vector<1x2x256xf32> to vector<2x256xf32>
    %610 = arith.mulf %607, %609 : vector<2x256xf32>
    %611 = arith.addf %599, %610 : vector<2x256xf32>
    %c46 = arith.constant 46 : index
    %612 = memref.load %arg6[%c46] : memref<98xf32, #tpu.memory_space<smem>>
    %c95 = arith.constant 95 : index
    %613 = memref.load %arg6[%c95] : memref<98xf32, #tpu.memory_space<smem>>
    %614 = vector.broadcast %612 : f32 to vector<2x256xf32>
    %615 = arith.mulf %56, %614 : vector<2x256xf32>
    %616 = vector.broadcast %613 : f32 to vector<2x256xf32>
    %617 = arith.mulf %59, %616 : vector<2x256xf32>
    %618 = arith.addf %615, %617 : vector<2x256xf32>
    %c207_i32 = arith.constant 207 : i32
    %619 = tpu.dynamic_rotate %618 by %c207_i32 dim 1 : vector<2x256xf32>, i32 -> vector<2x256xf32>
    %c46_167 = arith.constant 46 : index
    %c0_168 = arith.constant 0 : index
    %c0_169 = arith.constant 0 : index
    %620 = vector.load %arg5[%c46_167, %c0_168, %c0_169] : memref<49x2x256xf32, #tpu.memory_space<vmem>>, vector<1x2x256xf32>
    %621 = vector.shape_cast %620 : vector<1x2x256xf32> to vector<2x256xf32>
    %622 = arith.mulf %619, %621 : vector<2x256xf32>
    %623 = arith.addf %611, %622 : vector<2x256xf32>
    %c47 = arith.constant 47 : index
    %624 = memref.load %arg6[%c47] : memref<98xf32, #tpu.memory_space<smem>>
    %c96 = arith.constant 96 : index
    %625 = memref.load %arg6[%c96] : memref<98xf32, #tpu.memory_space<smem>>
    %626 = vector.broadcast %624 : f32 to vector<2x256xf32>
    %627 = arith.mulf %56, %626 : vector<2x256xf32>
    %628 = vector.broadcast %625 : f32 to vector<2x256xf32>
    %629 = arith.mulf %59, %628 : vector<2x256xf32>
    %630 = arith.addf %627, %629 : vector<2x256xf32>
    %c206_i32 = arith.constant 206 : i32
    %631 = tpu.dynamic_rotate %630 by %c206_i32 dim 1 : vector<2x256xf32>, i32 -> vector<2x256xf32>
    %c47_170 = arith.constant 47 : index
    %c0_171 = arith.constant 0 : index
    %c0_172 = arith.constant 0 : index
    %632 = vector.load %arg5[%c47_170, %c0_171, %c0_172] : memref<49x2x256xf32, #tpu.memory_space<vmem>>, vector<1x2x256xf32>
    %633 = vector.shape_cast %632 : vector<1x2x256xf32> to vector<2x256xf32>
    %634 = arith.mulf %631, %633 : vector<2x256xf32>
    %635 = arith.addf %623, %634 : vector<2x256xf32>
    %c48 = arith.constant 48 : index
    %636 = memref.load %arg6[%c48] : memref<98xf32, #tpu.memory_space<smem>>
    %c97 = arith.constant 97 : index
    %637 = memref.load %arg6[%c97] : memref<98xf32, #tpu.memory_space<smem>>
    %638 = vector.broadcast %636 : f32 to vector<2x256xf32>
    %639 = arith.mulf %56, %638 : vector<2x256xf32>
    %640 = vector.broadcast %637 : f32 to vector<2x256xf32>
    %641 = arith.mulf %59, %640 : vector<2x256xf32>
    %642 = arith.addf %639, %641 : vector<2x256xf32>
    %c205_i32 = arith.constant 205 : i32
    %643 = tpu.dynamic_rotate %642 by %c205_i32 dim 1 : vector<2x256xf32>, i32 -> vector<2x256xf32>
    %c48_173 = arith.constant 48 : index
    %c0_174 = arith.constant 0 : index
    %c0_175 = arith.constant 0 : index
    %644 = vector.load %arg5[%c48_173, %c0_174, %c0_175] : memref<49x2x256xf32, #tpu.memory_space<vmem>>, vector<1x2x256xf32>
    %645 = vector.shape_cast %644 : vector<1x2x256xf32> to vector<2x256xf32>
    %646 = arith.mulf %643, %645 : vector<2x256xf32>
    %647 = arith.addf %635, %646 : vector<2x256xf32>
    %648 = vector.shape_cast %647 : vector<2x256xf32> to vector<1x2x256xf32>
    %cst_176 = arith.constant dense<0.000000e+00> : vector<1xf32>
    %649 = vector.multi_reduction <add>, %648, %cst_176 [1, 2] : vector<1x2x256xf32> to vector<1xf32>
    %650 = vector.shape_cast %649 : vector<1xf32> to vector<1x1x1xf32>
    %651 = vector.extract %650[0, 0, 0] : f32 from vector<1x1x1xf32>
    %cst_177 = arith.constant 5.120000e+02 : f32
    %652 = arith.divf %651, %cst_177 : f32
    %653 = vector.broadcast %652 : f32 to vector<2x256xf32>
    %654 = arith.subf %647, %653 : vector<2x256xf32>
    %655 = arith.mulf %654, %654 : vector<2x256xf32>
    %656 = vector.shape_cast %655 : vector<2x256xf32> to vector<1x2x256xf32>
    %cst_178 = arith.constant dense<0.000000e+00> : vector<1xf32>
    %657 = vector.multi_reduction <add>, %656, %cst_178 [1, 2] : vector<1x2x256xf32> to vector<1xf32>
    %658 = vector.shape_cast %657 : vector<1xf32> to vector<1x1x1xf32>
    %659 = vector.extract %658[0, 0, 0] : f32 from vector<1x1x1xf32>
    %cst_179 = arith.constant 5.120000e+02 : f32
    %660 = arith.divf %659, %cst_179 : f32
    %661 = vector.broadcast %652 : f32 to vector<2x256xf32>
    %662 = arith.subf %647, %661 : vector<2x256xf32>
    %cst_180 = arith.constant 9.99999974E-6 : f32
    %663 = arith.addf %660, %cst_180 : f32
    %664 = math.rsqrt %663 : f32
    %665 = vector.broadcast %664 : f32 to vector<2x256xf32>
    %666 = arith.mulf %662, %665 : vector<2x256xf32>
    %667 = vector.shape_cast %666 : vector<2x256xf32> to vector<1x2x256xf32>
    %cst_181 = arith.constant dense<0.000000e+00> : vector<1xf32>
    %668 = vector.multi_reduction <add>, %667, %cst_181 [1, 2] : vector<1x2x256xf32> to vector<1xf32>
    %669 = vector.shape_cast %668 : vector<1xf32> to vector<1x1x1xf32>
    %670 = vector.extract %669[0, 0, 0] : f32 from vector<1x1x1xf32>
    %cst_182 = arith.constant 5.120000e+02 : f32
    %671 = arith.divf %670, %cst_182 : f32
    %672 = vector.broadcast %671 : f32 to vector<2x256xf32>
    %673 = arith.subf %666, %672 : vector<2x256xf32>
    %674 = arith.mulf %673, %673 : vector<2x256xf32>
    %675 = vector.shape_cast %674 : vector<2x256xf32> to vector<1x2x256xf32>
    %cst_183 = arith.constant dense<0.000000e+00> : vector<1xf32>
    %676 = vector.multi_reduction <add>, %675, %cst_183 [1, 2] : vector<1x2x256xf32> to vector<1xf32>
    %677 = vector.shape_cast %676 : vector<1xf32> to vector<1x1x1xf32>
    %678 = vector.extract %677[0, 0, 0] : f32 from vector<1x1x1xf32>
    %cst_184 = arith.constant 0.00195694715 : f32
    %679 = arith.mulf %678, %cst_184 : f32
    %cst_185 = arith.constant 6.28318548 : f32
    %680 = arith.mulf %cst_185, %679 : f32
    %681 = math.rsqrt %680 : f32
    %682 = vector.broadcast %671 : f32 to vector<2x256xf32>
    %683 = arith.subf %666, %682 : vector<2x256xf32>
    %684 = arith.mulf %683, %683 : vector<2x256xf32>
    %cst_186 = arith.constant 0.000000e+00 : f32
    %685 = vector.broadcast %cst_186 : f32 to vector<2x256xf32>
    %686 = arith.subf %685, %684 : vector<2x256xf32>
    %cst_187 = arith.constant 5.000000e-01 : f32
    %687 = arith.divf %cst_187, %679 : f32
    %688 = vector.broadcast %687 : f32 to vector<2x256xf32>
    %689 = arith.mulf %686, %688 : vector<2x256xf32>
    %690 = math.exp %689 : vector<2x256xf32>
    %691 = vector.broadcast %681 : f32 to vector<2x256xf32>
    %692 = arith.mulf %690, %691 : vector<2x256xf32>
    %c0_188 = arith.constant 0 : index
    %c0_189 = arith.constant 0 : index
    %c0_190 = arith.constant 0 : index
    %693 = vector.load %arg7[%c0_188, %c0_189, %c0_190] : memref<2x32x256xf32, #tpu.memory_space<vmem>>, vector<2x32x256xf32>
    %694 = vector.shape_cast %692 : vector<2x256xf32> to vector<2x1x256xf32>
    %695 = vector.broadcast %694 : vector<2x1x256xf32> to vector<2x32x256xf32>
    %696 = arith.mulf %693, %695 : vector<2x32x256xf32>
    %c0_191 = arith.constant 0 : index
    %c0_192 = arith.constant 0 : index
    %c0_193 = arith.constant 0 : index
    %697 = vector.load %arg7[%c0_191, %c0_192, %c0_193] : memref<2x32x256xf32, #tpu.memory_space<vmem>>, vector<2x32x256xf32>
    tpu.vector_store %arg7[%c0_191, %c0_192, %c0_193], %696 {strides = array<i32>} : memref<2x32x256xf32, #tpu.memory_space<vmem>>, vector<2x32x256xf32>,
    return
  }
}

</mosaic_0001>

<llo_original>
// kernel: amm_forward.1
$region0: #{amm_forward.1}
  #allocation0 [shape = 'u32[]', space=smem, size = 0x4, offset = 0x4, fixed_abs, tag = 'smem constant byte address 0x4 - core index']
  #allocation1 [shape = 'u32[144,128]{1,0:T(1,128)}', space=vmem, size = 0x12000, scoped, tag = 'internal scratch']
  %s0 = inlined_call_operand.vmem [shape: f32[2,32,256], index: 0, kind: input, shape index: {}]
  %s1 = inlined_call_operand.vmem [shape: f32[2,32], index: 1, kind: input, shape index: {}]
  %s2 = inlined_call_operand.vmem [shape: f32[1,2], index: 2, kind: input, shape index: {}]
  %s3 = inlined_call_operand.vmem [shape: f32[2,32], index: 3, kind: input, shape index: {}]
  %s4 = inlined_call_operand.vmem [shape: f32[1,32], index: 4, kind: input, shape index: {}]
  %s5 = inlined_call_operand.vmem [shape: f32[49,2,256], index: 5, kind: input, shape index: {}]
  %s6 = inlined_call_operand.vmem [shape: f32[98], index: 6, kind: input, shape index: {}]
  %s7 = inlined_call_operand.vmem [shape: f32[2,32,256], index: 7, kind: output, shape index: {}]
  %s8 = sld [smem:[#allocation0]]
  $region42: #{amm_forward.1} parent=0
    _
  %s10 = ssub.s32 1, %s8
  %s11 = scalar_select 0, %s10, %s8
  $region1: #{amm_forward.1} parent=0
    #allocation2 [shape = 'u8[512]{0}', space=smem, size = 0x200, scoped, tag = 'input window, operand 6, single buffered']
    #allocation3 [shape = 's32[1]{0}', space=sflag, size = 0x4, scoped, tag = 'scoped memory for amm_forward.1']
    %12 = vsyncpa [#allocation3], 0
    // Predicated region
    $region2: #{amm_forward.1} parent=1 // pred_check
      _
    $region3: #{amm_forward.1} parent=1 // pred_check_branch
      %14 = sbr.rel (0) target = $region5
    $region4: #{amm_forward.1} parent=1 // pred_region
      _
    $region5: #{amm_forward.1} parent=1 // pred_fallthru
      _
    // Predicated region
    $region6: #{amm_forward.1} parent=1 // pred_check
      _
    $region7: #{amm_forward.1} parent=1 // pred_check_branch
      %16 = sbr.rel (0) target = $region9
    $region8: #{amm_forward.1} parent=1 // pred_region
      _
    $region9: #{amm_forward.1} parent=1 // pred_fallthru
      _
    // Predicated region
    $region10: #{amm_forward.1} parent=1 // pred_check
      _
    $region11: #{amm_forward.1} parent=1 // pred_check_branch
      %18 = sbr.rel (0) target = $region13
    $region12: #{amm_forward.1} parent=1 // pred_region
      _
    $region13: #{amm_forward.1} parent=1 // pred_fallthru
      _
    // Predicated region
    $region14: #{amm_forward.1} parent=1 // pred_check
      _
    $region15: #{amm_forward.1} parent=1 // pred_check_branch
      %20 = sbr.rel (0) target = $region17
    $region16: #{amm_forward.1} parent=1 // pred_region
      _
    $region17: #{amm_forward.1} parent=1 // pred_fallthru
      _
    // Predicated region
    $region18: #{amm_forward.1} parent=1 // pred_check
      _
    $region19: #{amm_forward.1} parent=1 // pred_check_branch
      %22 = sbr.rel (0) target = $region21
    $region20: #{amm_forward.1} parent=1 // pred_region
      _
    $region21: #{amm_forward.1} parent=1 // pred_fallthru
      _
    // Predicated region
    $region22: #{amm_forward.1} parent=1 // pred_check
      _
    $region23: #{amm_forward.1} parent=1 // pred_check_branch
      %24 = sbr.rel (0) target = $region25
    $region24: #{amm_forward.1} parent=1 // pred_region
      _
    $region25: #{amm_forward.1} parent=1 // pred_fallthru
      _
    // Predicated region
    $region26: #{amm_forward.1} parent=1 // pred_check
      _
    $region27: #{amm_forward.1} parent=1 // pred_check_branch
      %26 = sbr.rel (0) target = $region29
    $region28: #{amm_forward.1} parent=1 // pred_region
      %s28 = ssub.s32 16, 16
      %29 = vsyncadd [#allocation3], %s28
      %s31 = sshll.u32 %s6, 4
      %s32 = int_to_ptr.vmem [resolvable:$true] %s31
      %34 = dma.vmem_to_smem %s32, 16, [#allocation2], [#allocation3]
    $region29: #{amm_forward.1} parent=1 // pred_fallthru
      _
    // Predicated region
    $region30: #{amm_forward.1} parent=1 // pred_check
      _
    $region31: #{amm_forward.1} parent=1 // pred_check_branch
      %36 = sbr.rel (0) target = $region33
    $region32: #{amm_forward.1} parent=1 // pred_region
      %37 = dma.done [#allocation3], 16
    $region33: #{amm_forward.1} parent=1 // pred_fallthru
      _
    %38 = sfence
    %v39 = vld [vmem:[%s0] sm:$0xff]
    %v40 = vld [vmem:[%s0 + $0x8] sm:$0xff]
    %v41 = vld [vmem:[%s0 + $0x10] sm:$0xff]
    %v42 = vld [vmem:[%s0 + $0x18] sm:$0xff]
    %v43 = vld [vmem:[%s0 + $0x20] sm:$0xff]
    %v44 = vld [vmem:[%s0 + $0x28] sm:$0xff]
    %v45 = vld [vmem:[%s0 + $0x30] sm:$0xff]
    %v46 = vld [vmem:[%s0 + $0x38] sm:$0xff]
    %v47 = vld [vmem:[%s0 + $0x40] sm:$0xff]
    %v48 = vld [vmem:[%s0 + $0x48] sm:$0xff]
    %v49 = vld [vmem:[%s0 + $0x50] sm:$0xff]
    %v50 = vld [vmem:[%s0 + $0x58] sm:$0xff]
    %v51 = vld [vmem:[%s0 + $0x60] sm:$0xff]
    %v52 = vld [vmem:[%s0 + $0x68] sm:$0xff]
    %v53 = vld [vmem:[%s0 + $0x70] sm:$0xff]
    %v54 = vld [vmem:[%s0 + $0x78] sm:$0xff]
    %v55 = vadd.f32 %v39, %v40
    %56 = vadd.xlane.f32.xlu0 %v55
    %v57 = vpop.xlane.xlu0 %56
    %v58 = vadd.f32 %v41, %v42
    %59 = vadd.xlane.f32.xlu0 %v58
    %v60 = vpop.xlane.xlu0 %59
    %v61 = vadd.f32 %v43, %v44
    %62 = vadd.xlane.f32.xlu0 %v61
    %v63 = vpop.xlane.xlu0 %62
    %v64 = vadd.f32 %v45, %v46
    %65 = vadd.xlane.f32.xlu0 %v64
    %v66 = vpop.xlane.xlu0 %65
    %v67 = vadd.f32 %v47, %v48
    %68 = vadd.xlane.f32.xlu0 %v67
    %v69 = vpop.xlane.xlu0 %68
    %v70 = vadd.f32 %v49, %v50
    %71 = vadd.xlane.f32.xlu0 %v70
    %v72 = vpop.xlane.xlu0 %71
    %v73 = vadd.f32 %v51, %v52
    %74 = vadd.xlane.f32.xlu0 %v73
    %v75 = vpop.xlane.xlu0 %74
    %v76 = vadd.f32 %v53, %v54
    %77 = vadd.xlane.f32.xlu0 %v76
    %v78 = vpop.xlane.xlu0 %77
    %v79 = vrcp.pop 256.0
    %v80 = vmul.f32 %v57, %v79
    %v81 = vmul.f32 %v60, %v79
    %v82 = vmul.f32 %v63, %v79
    %v83 = vmul.f32 %v66, %v79
    %v84 = vmul.f32 %v69, %v79
    %v85 = vmul.f32 %v72, %v79
    %v86 = vmul.f32 %v75, %v79
    %v87 = vmul.f32 %v78, %v79
    %v88 = vld [vmem:[%s1] sm:$0x3]
    %v90 = vlaneseq
    %v91 = vshrl.u32 %v90, 7
    %v92 = vsub.s32 0, %v91
    %v93 = vrot.slane %v88, %v92
    %95 = vbcast.lane.b32.xlu0 %v93, 256
    %v96 = vpop.permute.xlu0 %95
    %s98 = sor.u32 256, 8
    %99 = vbcast.lane.b32.xlu0 %v93, %s98
    %v100 = vpop.permute.xlu0 %99
    %s102 = sor.u32 256, 16
    %103 = vbcast.lane.b32.xlu0 %v93, %s102
    %v104 = vpop.permute.xlu0 %103
    %s106 = sor.u32 256, 24
    %107 = vbcast.lane.b32.xlu0 %v93, %s106
    %v108 = vpop.permute.xlu0 %107
    %v109 = vlaneseq
    %v110 = vshrl.u32 %v109, 7
    %v111 = vsub.s32 1, %v110
    %v112 = vrot.slane %v88, %v111
    %114 = vbcast.lane.b32.xlu0 %v112, 256
    %v115 = vpop.permute.xlu0 %114
    %s117 = sor.u32 256, 8
    %118 = vbcast.lane.b32.xlu0 %v112, %s117
    %v119 = vpop.permute.xlu0 %118
    %s121 = sor.u32 256, 16
    %122 = vbcast.lane.b32.xlu0 %v112, %s121
    %v123 = vpop.permute.xlu0 %122
    %s125 = sor.u32 256, 24
    %126 = vbcast.lane.b32.xlu0 %v112, %s125
    %v127 = vpop.permute.xlu0 %126
    %v136 = vmul.f32 %v80, %v96
    %v137 = vmul.f32 %v81, %v100
    %v138 = vmul.f32 %v82, %v104
    %v139 = vmul.f32 %v83, %v108
    %v140 = vmul.f32 %v80, %v115
    %v141 = vmul.f32 %v81, %v119
    %v142 = vmul.f32 %v82, %v123
    %v143 = vmul.f32 %v83, %v127
    %v144 = vmul.f32 %v84, %v96
    %v145 = vmul.f32 %v85, %v100
    %v146 = vmul.f32 %v86, %v104
    %v147 = vmul.f32 %v87, %v108
    %v148 = vmul.f32 %v84, %v115
    %v149 = vmul.f32 %v85, %v119
    %v150 = vmul.f32 %v86, %v123
    %v151 = vmul.f32 %v87, %v127
    %168 = vset.pattern.permute.xlu0 0
    %169 = vperm.xlu0 %168, %v136
    %v170 = vpop.permute.xlu0 %169
    %171 = vset.pattern.permute.xlu0 0
    %172 = vperm.xlu0 %171, %v137
    %v173 = vpop.permute.xlu0 %172
    %174 = vset.pattern.permute.xlu0 0
    %175 = vperm.xlu0 %174, %v138
    %v176 = vpop.permute.xlu0 %175
    %177 = vset.pattern.permute.xlu0 0
    %178 = vperm.xlu0 %177, %v139
    %v179 = vpop.permute.xlu0 %178
    %180 = vset.pattern.permute.xlu0 0
    %181 = vperm.xlu0 %180, %v140
    %v182 = vpop.permute.xlu0 %181
    %183 = vset.pattern.permute.xlu0 0
    %184 = vperm.xlu0 %183, %v141
    %v185 = vpop.permute.xlu0 %184
    %186 = vset.pattern.permute.xlu0 0
    %187 = vperm.xlu0 %186, %v142
    %v188 = vpop.permute.xlu0 %187
    %189 = vset.pattern.permute.xlu0 0
    %190 = vperm.xlu0 %189, %v143
    %v191 = vpop.permute.xlu0 %190
    %192 = vset.pattern.permute.xlu0 0
    %193 = vperm.xlu0 %192, %v144
    %v194 = vpop.permute.xlu0 %193
    %195 = vset.pattern.permute.xlu0 0
    %196 = vperm.xlu0 %195, %v145
    %v197 = vpop.permute.xlu0 %196
    %198 = vset.pattern.permute.xlu0 0
    %199 = vperm.xlu0 %198, %v146
    %v200 = vpop.permute.xlu0 %199
    %201 = vset.pattern.permute.xlu0 0
    %202 = vperm.xlu0 %201, %v147
    %v203 = vpop.permute.xlu0 %202
    %204 = vset.pattern.permute.xlu0 0
    %205 = vperm.xlu0 %204, %v148
    %v206 = vpop.permute.xlu0 %205
    %207 = vset.pattern.permute.xlu0 0
    %208 = vperm.xlu0 %207, %v149
    %v209 = vpop.permute.xlu0 %208
    %210 = vset.pattern.permute.xlu0 0
    %211 = vperm.xlu0 %210, %v150
    %v212 = vpop.permute.xlu0 %211
    %213 = vset.pattern.permute.xlu0 0
    %214 = vperm.xlu0 %213, %v151
    %v215 = vpop.permute.xlu0 %214
    %v216 = vlaneseq
    %v217 = vand.u32 %v216, 127
    %v218 = vlaneseq
    %v219 = vshrl.u32 %v218, 7
    %v220 = vsub.s32 %v217, %v219
    %v221 = vrot.slane %v170, %v220
    %v222 = vadd.s32 %v217, 4294967288
    %v223 = vlaneseq
    %v224 = vshrl.u32 %v223, 7
    %v225 = vsub.s32 %v222, %v224
    %v226 = vrot.slane %v173, %v225
    %vm227 = vcmask 130112
    %v228 = vsel %vm227, %v226, %v221
    %v229 = vadd.s32 %v217, 4294967280
    %v230 = vlaneseq
    %v231 = vshrl.u32 %v230, 7
    %v232 = vsub.s32 %v229, %v231
    %v233 = vrot.slane %v176, %v232
    %vm234 = vcmask 195712
    %v235 = vsel %vm234, %v233, %v228
    %v236 = vadd.s32 %v217, 4294967272
    %v237 = vlaneseq
    %v238 = vshrl.u32 %v237, 7
    %v239 = vsub.s32 %v236, %v238
    %v240 = vrot.slane %v179, %v239
    %vm241 = vcmask 261312
    %v242 = vsel %vm241, %v240, %v235
    %v243 = vlaneseq
    %v244 = vshrl.u32 %v243, 7
    %v245 = vsub.s32 %v217, %v244
    %v246 = vrot.slane %v182, %v245
    %v247 = vlaneseq
    %v248 = vshrl.u32 %v247, 7
    %v249 = vsub.s32 %v222, %v248
    %v250 = vrot.slane %v185, %v249
    %v251 = vsel %vm227, %v250, %v246
    %v252 = vlaneseq
    %v253 = vshrl.u32 %v252, 7
    %v254 = vsub.s32 %v229, %v253
    %v255 = vrot.slane %v188, %v254
    %v256 = vsel %vm234, %v255, %v251
    %v257 = vlaneseq
    %v258 = vshrl.u32 %v257, 7
    %v259 = vsub.s32 %v236, %v258
    %v260 = vrot.slane %v191, %v259
    %v261 = vsel %vm241, %v260, %v256
    %v262 = vlaneseq
    %v263 = vshrl.u32 %v262, 7
    %v264 = vsub.s32 %v217, %v263
    %v265 = vrot.slane %v194, %v264
    %v266 = vlaneseq
    %v267 = vshrl.u32 %v266, 7
    %v268 = vsub.s32 %v222, %v267
    %v269 = vrot.slane %v197, %v268
    %v270 = vsel %vm227, %v269, %v265
    %v271 = vlaneseq
    %v272 = vshrl.u32 %v271, 7
    %v273 = vsub.s32 %v229, %v272
    %v274 = vrot.slane %v200, %v273
    %v275 = vsel %vm234, %v274, %v270
    %v276 = vlaneseq
    %v277 = vshrl.u32 %v276, 7
    %v278 = vsub.s32 %v236, %v277
    %v279 = vrot.slane %v203, %v278
    %v280 = vsel %vm241, %v279, %v275
    %v281 = vlaneseq
    %v282 = vshrl.u32 %v281, 7
    %v283 = vsub.s32 %v217, %v282
    %v284 = vrot.slane %v206, %v283
    %v285 = vlaneseq
    %v286 = vshrl.u32 %v285, 7
    %v287 = vsub.s32 %v222, %v286
    %v288 = vrot.slane %v209, %v287
    %v289 = vsel %vm227, %v288, %v284
    %v290 = vlaneseq
    %v291 = vshrl.u32 %v290, 7
    %v292 = vsub.s32 %v229, %v291
    %v293 = vrot.slane %v212, %v292
    %v294 = vsel %vm234, %v293, %v289
    %v295 = vlaneseq
    %v296 = vshrl.u32 %v295, 7
    %v297 = vsub.s32 %v236, %v296
    %v298 = vrot.slane %v215, %v297
    %v299 = vsel %vm241, %v298, %v294
    %vm300 = vcmask 1041409
    %v301 = vsel %vm300, %v261, %v242
    %v302 = vsel %vm300, %v299, %v280
    %vm305 = vcmask 254976
    %v306 = vsel %vm305, %v301, 0.0
    %307 = vadd.xlane.f32.xlu0 %v306
    %v308 = vpop.xlane.xlu0 %307
    %v309 = vsel %vm305, %v302, 0.0
    %310 = vadd.xlane.f32.xlu0 %v309
    %v311 = vpop.xlane.xlu0 %310
    %v312 = vld [vmem:[%s2] sm:$0x1]
    %v314 = vlaneseq
    %v315 = vshrl.u32 %v314, 7
    %v316 = vsub.s32 0, %v315
    %v317 = vrot.slane %v312, %v316
    %319 = vbcast.lane.b32.xlu0 %v317, 256
    %v320 = vpop.permute.xlu0 %319
    %v322 = vadd.f32 %v308, %v320
    %v323 = vadd.f32 %v311, %v320
    %v324 = vmax.f32 %v322, 0.0
    %v325 = vmax.f32 %v323, 0.0
    %v326 = vld [vmem:[%s3] sm:$0x3]
    %328 = vset.pattern.permute.xlu0 0
    %329 = vperm.xlu0 %328, %v324
    %v330 = vpop.permute.xlu0 %329
    %333 = vset.pattern.permute.xlu0 0
    %334 = vperm.xlu0 %333, %v325
    %v335 = vpop.permute.xlu0 %334
    %v337 = vmul.f32 %v330, %v326
    %v338 = vmul.f32 %v335, %v326
    %v339 = vsel %vm305, %v337, 0.0
    %v340 = vrot.slane %v339, 4
    %v341 = vadd.f32 %v339, %v340
    %v342 = vrot.slane %v341, 2
    %v343 = vadd.f32 %v341, %v342
    %v344 = vrot.slane %v343, 1
    %v345 = vadd.f32 %v343, %v344
    %v346 = vsel %vm305, %v338, 0.0
    %v347 = vrot.slane %v346, 4
    %v348 = vadd.f32 %v346, %v347
    %v349 = vrot.slane %v348, 2
    %v350 = vadd.f32 %v348, %v349
    %v351 = vrot.slane %v350, 1
    %v352 = vadd.f32 %v350, %v351
    %v353 = vld [vmem:[%s4] sm:$0x1]
    %v355 = vlaneseq
    %v356 = vshrl.u32 %v355, 7
    %v357 = vsub.s32 0, %v356
    %v358 = vrot.slane %v353, %v357
    %v360 = vadd.f32 %v345, %v358
    %v361 = vadd.f32 %v352, %v358
    %v364 = vrot.slane %v361, 7
    %v365 = vsel %vm300, %v364, %v360
    %v367 = vsel %vm305, %v365, 0.0
    %368 = vadd.xlane.f32.xlu0 %v367
    %v369 = vpop.xlane.xlu0 %368
    %v370 = vrot.slane %v369, 4
    %v371 = vadd.f32 %v369, %v370
    %v372 = vrot.slane %v371, 2
    %v373 = vadd.f32 %v371, %v372
    %v374 = vrot.slane %v373, 1
    %v375 = vadd.f32 %v373, %v374
    %s376 = vtos %v375
    %v377 = vrcp.pop 64.0
    %s378 = vtos %v377
    %s379 = smul.f32 %s376, %s378
    %v380 = vstv %s379
    %v381 = vsub.f32 %v360, %v380
    %v382 = vsub.f32 %v361, %v380
    %v383 = vmul.f32 %v381, %v381
    %v384 = vmul.f32 %v382, %v382
    %v387 = vrot.slane %v384, 7
    %v388 = vsel %vm300, %v387, %v383
    %v390 = vsel %vm305, %v388, 0.0
    %391 = vadd.xlane.f32.xlu0 %v390
    %v392 = vpop.xlane.xlu0 %391
    %v393 = vrot.slane %v392, 4
    %v394 = vadd.f32 %v392, %v393
    %v395 = vrot.slane %v394, 2
    %v396 = vadd.f32 %v394, %v395
    %v397 = vrot.slane %v396, 1
    %v398 = vadd.f32 %v396, %v397
    %s399 = vtos %v398
    %s400 = smul.f32 %s399, 0.015873017
    %s401 = smul.f32 %s400, 6.2831855
    %v402 = vstv %s401
    %v403 = vrsqrt.pop %v402
    %s404 = vtos %v403
    %v405 = vsub.f32 0.0, %v383
    %v406 = vsub.f32 0.0, %v384
    %v407 = vstv %s400
    %v408 = vrcp.pop %v407
    %s409 = vtos %v408
    %s410 = smul.f32 0.5, %s409
    %v411 = vstv %s410
    %v412 = vmul.f32 %v405, %v411
    %v413 = vmul.f32 %v406, %v411
    %v414 = vmul.f32 %v412, 1.442695
    %v415 = vpow.pop %v414
    %v416 = vmul.f32 %v413, 1.442695
    %v417 = vpow.pop %v416
    %v418 = vstv %s404
    %v419 = vmul.f32 %v415, %v418
    %v420 = vmul.f32 %v417, %v418
    %v421 = vlaneseq
    %v422 = vshrl.u32 %v421, 7
    %v423 = vsub.s32 0, %v422
    %v424 = vrot.slane %v419, %v423
    %426 = vbcast.lane.b32.xlu0 %v424, 256
    %v427 = vpop.permute.xlu0 %426
    %s429 = sor.u32 256, 8
    %430 = vbcast.lane.b32.xlu0 %v424, %s429
    %v431 = vpop.permute.xlu0 %430
    %s433 = sor.u32 256, 16
    %434 = vbcast.lane.b32.xlu0 %v424, %s433
    %v435 = vpop.permute.xlu0 %434
    %s437 = sor.u32 256, 24
    %438 = vbcast.lane.b32.xlu0 %v424, %s437
    %v439 = vpop.permute.xlu0 %438
    %v440 = vlaneseq
    %v441 = vshrl.u32 %v440, 7
    %v442 = vsub.s32 0, %v441
    %v443 = vrot.slane %v420, %v442
    %445 = vbcast.lane.b32.xlu0 %v443, 256
    %v446 = vpop.permute.xlu0 %445
    %s448 = sor.u32 256, 8
    %449 = vbcast.lane.b32.xlu0 %v443, %s448
    %v450 = vpop.permute.xlu0 %449
    %s452 = sor.u32 256, 16
    %453 = vbcast.lane.b32.xlu0 %v443, %s452
    %v454 = vpop.permute.xlu0 %453
    %s456 = sor.u32 256, 24
    %457 = vbcast.lane.b32.xlu0 %v443, %s456
    %v458 = vpop.permute.xlu0 %457
    %v459 = vmul.f32 %v39, %v427
    %v460 = vmul.f32 %v40, %v427
    %v461 = vmul.f32 %v41, %v431
    %v462 = vmul.f32 %v42, %v431
    %v463 = vmul.f32 %v43, %v435
    %v464 = vmul.f32 %v44, %v435
    %v465 = vmul.f32 %v45, %v439
    %v466 = vmul.f32 %v46, %v439
    %v467 = vmul.f32 %v47, %v446
    %v468 = vmul.f32 %v48, %v446
    %v469 = vmul.f32 %v49, %v450
    %v470 = vmul.f32 %v50, %v450
    %v471 = vmul.f32 %v51, %v454
    %v472 = vmul.f32 %v52, %v454
    %v473 = vmul.f32 %v53, %v458
    %v474 = vmul.f32 %v54, %v458
    %475 = vst [vmem:[%s7] sm:$0xff] %v459
    %476 = vst [vmem:[%s7 + $0x8] sm:$0xff] %v460
    %477 = vst [vmem:[%s7 + $0x10] sm:$0xff] %v461
    %478 = vst [vmem:[%s7 + $0x18] sm:$0xff] %v462
    %479 = vst [vmem:[%s7 + $0x20] sm:$0xff] %v463
    %480 = vst [vmem:[%s7 + $0x28] sm:$0xff] %v464
    %481 = vst [vmem:[%s7 + $0x30] sm:$0xff] %v465
    %482 = vst [vmem:[%s7 + $0x38] sm:$0xff] %v466
    %483 = vst [vmem:[%s7 + $0x40] sm:$0xff] %v467
    %484 = vst [vmem:[%s7 + $0x48] sm:$0xff] %v468
    %485 = vst [vmem:[%s7 + $0x50] sm:$0xff] %v469
    %486 = vst [vmem:[%s7 + $0x58] sm:$0xff] %v470
    %487 = vst [vmem:[%s7 + $0x60] sm:$0xff] %v471
    %488 = vst [vmem:[%s7 + $0x68] sm:$0xff] %v472
    %489 = vst [vmem:[%s7 + $0x70] sm:$0xff] %v473
    %490 = vst [vmem:[%s7 + $0x78] sm:$0xff] %v474
    %v491 = vmax.f32 %v459, %v461
    %v492 = vmax.f32 %v491, %v463
    %v493 = vmax.f32 %v492, %v465
    %v494 = vrot.slane %v493, 4
    %v495 = vmax.f32 %v493, %v494
    %v496 = vrot.slane %v495, 2
    %v497 = vmax.f32 %v495, %v496
    %v498 = vrot.slane %v497, 1
    %v499 = vmax.f32 %v497, %v498
    %v500 = vmax.f32 %v460, %v462
    %v501 = vmax.f32 %v500, %v464
    %v502 = vmax.f32 %v501, %v466
    %v503 = vrot.slane %v502, 4
    %v504 = vmax.f32 %v502, %v503
    %v505 = vrot.slane %v504, 2
    %v506 = vmax.f32 %v504, %v505
    %v507 = vrot.slane %v506, 1
    %v508 = vmax.f32 %v506, %v507
    %v509 = vmax.f32 %v467, %v469
    %v510 = vmax.f32 %v509, %v471
    %v511 = vmax.f32 %v510, %v473
    %v512 = vrot.slane %v511, 4
    %v513 = vmax.f32 %v511, %v512
    %v514 = vrot.slane %v513, 2
    %v515 = vmax.f32 %v513, %v514
    %v516 = vrot.slane %v515, 1
    %v517 = vmax.f32 %v515, %v516
    %v518 = vmax.f32 %v468, %v470
    %v519 = vmax.f32 %v518, %v472
    %v520 = vmax.f32 %v519, %v474
    %v521 = vrot.slane %v520, 4
    %v522 = vmax.f32 %v520, %v521
    %v523 = vrot.slane %v522, 2
    %v524 = vmax.f32 %v522, %v523
    %v525 = vrot.slane %v524, 1
    %v526 = vmax.f32 %v524, %v525
    %v527 = vadd.f32 %v459, %v461
    %v528 = vadd.f32 %v527, %v463
    %v529 = vadd.f32 %v528, %v465
    %v530 = vrot.slane %v529, 4
    %v531 = vadd.f32 %v529, %v530
    %v532 = vrot.slane %v531, 2
    %v533 = vadd.f32 %v531, %v532
    %v534 = vrot.slane %v533, 1
    %v535 = vadd.f32 %v533, %v534
    %v536 = vadd.f32 %v460, %v462
    %v537 = vadd.f32 %v536, %v464
    %v538 = vadd.f32 %v537, %v466
    %v539 = vrot.slane %v538, 4
    %v540 = vadd.f32 %v538, %v539
    %v541 = vrot.slane %v540, 2
    %v542 = vadd.f32 %v540, %v541
    %v543 = vrot.slane %v542, 1
    %v544 = vadd.f32 %v542, %v543
    %v545 = vadd.f32 %v467, %v469
    %v546 = vadd.f32 %v545, %v471
    %v547 = vadd.f32 %v546, %v473
    %v548 = vrot.slane %v547, 4
    %v549 = vadd.f32 %v547, %v548
    %v550 = vrot.slane %v549, 2
    %v551 = vadd.f32 %v549, %v550
    %v552 = vrot.slane %v551, 1
    %v553 = vadd.f32 %v551, %v552
    %v554 = vadd.f32 %v468, %v470
    %v555 = vadd.f32 %v554, %v472
    %v556 = vadd.f32 %v555, %v474
    %v557 = vrot.slane %v556, 4
    %v558 = vadd.f32 %v556, %v557
    %v559 = vrot.slane %v558, 2
    %v560 = vadd.f32 %v558, %v559
    %v561 = vrot.slane %v560, 1
    %v562 = vadd.f32 %v560, %v561
    %v563 = vrcp.pop 32.0
    %v564 = vmul.f32 %v535, %v563
    %v565 = vmul.f32 %v544, %v563
    %v566 = vmul.f32 %v553, %v563
    %v567 = vmul.f32 %v562, %v563
    %s568 = sld [smem:[#allocation2]]
    %s569 = sld [smem:[#allocation2 + $0x31]]
    %v570 = vstv %s568
    %v571 = vmul.f32 %v499, %v570
    %v572 = vmul.f32 %v508, %v570
    %v573 = vmul.f32 %v517, %v570
    %v574 = vmul.f32 %v526, %v570
    %v575 = vstv %s569
    %v576 = vmul.f32 %v564, %v575
    %v577 = vmul.f32 %v565, %v575
    %v578 = vmul.f32 %v566, %v575
    %v579 = vmul.f32 %v567, %v575
    %v580 = vadd.f32 %v571, %v576
    %v581 = vadd.f32 %v572, %v577
    %v582 = vadd.f32 %v573, %v578
    %v583 = vadd.f32 %v574, %v579
    %v588 = vsel %vm300, %v582, %v580
    %v589 = vsel %vm300, %v583, %v581
    %592 = vrot.lane.b32.xlu0 %v588, 51
    %v593 = vpop.permute.xlu0 %592
    %594 = vrot.lane.b32.xlu0 %v589, 51
    %v595 = vpop.permute.xlu0 %594
    %vm596 = vcmp.lt.s32.totalorder %v217, 51
    %v597 = vsel %vm596, %v593, %v595
    %v598 = vsel %vm596, %v595, %v593
    %v599 = vld [vmem:[%s5] sm:$0xf]
    %v602 = vunpack.c.l.s4 1983009808
    %v603 = vunpack.c.0.s8 %v602
    %v604 = vlaneseq
    %v605 = vshrl.u32 %v604, 7
    %v606 = vsub.s32 %v603, %v605
    %v607 = vrot.slane %v599, %v606
    %v608 = vcombine.high %v607, %v607
    %v611 = vmul.f32 %v598, %v607
    %v612 = vmul.f32 %v597, %v608
    %v613 = vadd.f32 %v611, 0.0
    %v614 = vadd.f32 %v612, 0.0
    %s615 = sld [smem:[#allocation2 + $0x1]]
    %s616 = sld [smem:[#allocation2 + $0x32]]
    %v617 = vstv %s615
    %v618 = vmul.f32 %v499, %v617
    %v619 = vmul.f32 %v508, %v617
    %v620 = vmul.f32 %v517, %v617
    %v621 = vmul.f32 %v526, %v617
    %v622 = vstv %s616
    %v623 = vmul.f32 %v564, %v622
    %v624 = vmul.f32 %v565, %v622
    %v625 = vmul.f32 %v566, %v622
    %v626 = vmul.f32 %v567, %v622
    %v627 = vadd.f32 %v618, %v623
    %v628 = vadd.f32 %v619, %v624
    %v629 = vadd.f32 %v620, %v625
    %v630 = vadd.f32 %v621, %v626
    %v635 = vsel %vm300, %v629, %v627
    %v636 = vsel %vm300, %v630, %v628
    %639 = vrot.lane.b32.xlu0 %v635, 50
    %v640 = vpop.permute.xlu0 %639
    %641 = vrot.lane.b32.xlu0 %v636, 50
    %v642 = vpop.permute.xlu0 %641
    %vm643 = vcmp.lt.s32.totalorder %v217, 50
    %v644 = vsel %vm643, %v640, %v642
    %v645 = vsel %vm643, %v642, %v640
    %s646 = scalar_lea.vmem %s5, 4
    %v647 = vld [vmem:[%s646] sm:$0xf]
    %v650 = vunpack.c.l.s4 1983009808
    %v651 = vunpack.c.0.s8 %v650
    %v652 = vlaneseq
    %v653 = vshrl.u32 %v652, 7
    %v654 = vsub.s32 %v651, %v653
    %v655 = vrot.slane %v647, %v654
    %v656 = vcombine.high %v655, %v655
    %v659 = vmul.f32 %v645, %v655
    %v660 = vmul.f32 %v644, %v656
    %v661 = vadd.f32 %v613, %v659
    %v662 = vadd.f32 %v614, %v660
    %s663 = sld [smem:[#allocation2 + $0x2]]
    %s664 = sld [smem:[#allocation2 + $0x33]]
    %v665 = vstv %s663
    %v666 = vmul.f32 %v499, %v665
    %v667 = vmul.f32 %v508, %v665
    %v668 = vmul.f32 %v517, %v665
    %v669 = vmul.f32 %v526, %v665
    %v670 = vstv %s664
    %v671 = vmul.f32 %v564, %v670
    %v672 = vmul.f32 %v565, %v670
    %v673 = vmul.f32 %v566, %v670
    %v674 = vmul.f32 %v567, %v670
    %v675 = vadd.f32 %v666, %v671
    %v676 = vadd.f32 %v667, %v672
    %v677 = vadd.f32 %v668, %v673
    %v678 = vadd.f32 %v669, %v674
    %v683 = vsel %vm300, %v677, %v675
    %v684 = vsel %vm300, %v678, %v676
    %687 = vrot.lane.b32.xlu0 %v683, 49
    %v688 = vpop.permute.xlu0 %687
    %689 = vrot.lane.b32.xlu0 %v684, 49
    %v690 = vpop.permute.xlu0 %689
    %vm691 = vcmp.lt.s32.totalorder %v217, 49
    %v692 = vsel %vm691, %v688, %v690
    %v693 = vsel %vm691, %v690, %v688
    %s694 = scalar_lea.vmem %s5, 8
    %v695 = vld [vmem:[%s694] sm:$0xf]
    %v698 = vunpack.c.l.s4 1983009808
    %v699 = vunpack.c.0.s8 %v698
    %v700 = vlaneseq
    %v701 = vshrl.u32 %v700, 7
    %v702 = vsub.s32 %v699, %v701
    %v703 = vrot.slane %v695, %v702
    %v704 = vcombine.high %v703, %v703
    %v707 = vmul.f32 %v693, %v703
    %v708 = vmul.f32 %v692, %v704
    %v709 = vadd.f32 %v661, %v707
    %v710 = vadd.f32 %v662, %v708
    %s711 = sld [smem:[#allocation2 + $0x3]]
    %s712 = sld [smem:[#allocation2 + $0x34]]
    %v713 = vstv %s711
    %v714 = vmul.f32 %v499, %v713
    %v715 = vmul.f32 %v508, %v713
    %v716 = vmul.f32 %v517, %v713
    %v717 = vmul.f32 %v526, %v713
    %v718 = vstv %s712
    %v719 = vmul.f32 %v564, %v718
    %v720 = vmul.f32 %v565, %v718
    %v721 = vmul.f32 %v566, %v718
    %v722 = vmul.f32 %v567, %v718
    %v723 = vadd.f32 %v714, %v719
    %v724 = vadd.f32 %v715, %v720
    %v725 = vadd.f32 %v716, %v721
    %v726 = vadd.f32 %v717, %v722
    %v731 = vsel %vm300, %v725, %v723
    %v732 = vsel %vm300, %v726, %v724
    %735 = vrot.lane.b32.xlu0 %v731, 48
    %v736 = vpop.permute.xlu0 %735
    %737 = vrot.lane.b32.xlu0 %v732, 48
    %v738 = vpop.permute.xlu0 %737
    %vm739 = vcmp.lt.s32.totalorder %v217, 48
    %v740 = vsel %vm739, %v736, %v738
    %v741 = vsel %vm739, %v738, %v736
    %s742 = scalar_lea.vmem %s5, 12
    %v743 = vld [vmem:[%s742] sm:$0xf]
    %v746 = vunpack.c.l.s4 1983009808
    %v747 = vunpack.c.0.s8 %v746
    %v748 = vlaneseq
    %v749 = vshrl.u32 %v748, 7
    %v750 = vsub.s32 %v747, %v749
    %v751 = vrot.slane %v743, %v750
    %v752 = vcombine.high %v751, %v751
    %v755 = vmul.f32 %v741, %v751
    %v756 = vmul.f32 %v740, %v752
    %v757 = vadd.f32 %v709, %v755
    %v758 = vadd.f32 %v710, %v756
    %s759 = sld [smem:[#allocation2 + $0x4]]
    %s760 = sld [smem:[#allocation2 + $0x35]]
    %v761 = vstv %s759
    %v762 = vmul.f32 %v499, %v761
    %v763 = vmul.f32 %v508, %v761
    %v764 = vmul.f32 %v517, %v761
    %v765 = vmul.f32 %v526, %v761
    %v766 = vstv %s760
    %v767 = vmul.f32 %v564, %v766
    %v768 = vmul.f32 %v565, %v766
    %v769 = vmul.f32 %v566, %v766
    %v770 = vmul.f32 %v567, %v766
    %v771 = vadd.f32 %v762, %v767
    %v772 = vadd.f32 %v763, %v768
    %v773 = vadd.f32 %v764, %v769
    %v774 = vadd.f32 %v765, %v770
    %v779 = vsel %vm300, %v773, %v771
    %v780 = vsel %vm300, %v774, %v772
    %783 = vrot.lane.b32.xlu0 %v779, 47
    %v784 = vpop.permute.xlu0 %783
    %785 = vrot.lane.b32.xlu0 %v780, 47
    %v786 = vpop.permute.xlu0 %785
    %vm787 = vcmp.lt.s32.totalorder %v217, 47
    %v788 = vsel %vm787, %v784, %v786
    %v789 = vsel %vm787, %v786, %v784
    %s790 = scalar_lea.vmem %s5, 16
    %v791 = vld [vmem:[%s790] sm:$0xf]
    %v794 = vunpack.c.l.s4 1983009808
    %v795 = vunpack.c.0.s8 %v794
    %v796 = vlaneseq
    %v797 = vshrl.u32 %v796, 7
    %v798 = vsub.s32 %v795, %v797
    %v799 = vrot.slane %v791, %v798
    %v800 = vcombine.high %v799, %v799
    %v803 = vmul.f32 %v789, %v799
    %v804 = vmul.f32 %v788, %v800
    %v805 = vadd.f32 %v757, %v803
    %v806 = vadd.f32 %v758, %v804
    %s807 = sld [smem:[#allocation2 + $0x5]]
    %s808 = sld [smem:[#allocation2 + $0x36]]
    %v809 = vstv %s807
    %v810 = vmul.f32 %v499, %v809
    %v811 = vmul.f32 %v508, %v809
    %v812 = vmul.f32 %v517, %v809
    %v813 = vmul.f32 %v526, %v809
    %v814 = vstv %s808
    %v815 = vmul.f32 %v564, %v814
    %v816 = vmul.f32 %v565, %v814
    %v817 = vmul.f32 %v566, %v814
    %v818 = vmul.f32 %v567, %v814
    %v819 = vadd.f32 %v810, %v815
    %v820 = vadd.f32 %v811, %v816
    %v821 = vadd.f32 %v812, %v817
    %v822 = vadd.f32 %v813, %v818
    %v827 = vsel %vm300, %v821, %v819
    %v828 = vsel %vm300, %v822, %v820
    %831 = vrot.lane.b32.xlu0 %v827, 46
    %v832 = vpop.permute.xlu0 %831
    %833 = vrot.lane.b32.xlu0 %v828, 46
    %v834 = vpop.permute.xlu0 %833
    %vm835 = vcmp.lt.s32.totalorder %v217, 46
    %v836 = vsel %vm835, %v832, %v834
    %v837 = vsel %vm835, %v834, %v832
    %s838 = scalar_lea.vmem %s5, 20
    %v839 = vld [vmem:[%s838] sm:$0xf]
    %v842 = vunpack.c.l.s4 1983009808
    %v843 = vunpack.c.0.s8 %v842
    %v844 = vlaneseq
    %v845 = vshrl.u32 %v844, 7
    %v846 = vsub.s32 %v843, %v845
    %v847 = vrot.slane %v839, %v846
    %v848 = vcombine.high %v847, %v847
    %v851 = vmul.f32 %v837, %v847
    %v852 = vmul.f32 %v836, %v848
    %v853 = vadd.f32 %v805, %v851
    %v854 = vadd.f32 %v806, %v852
    %s855 = sld [smem:[#allocation2 + $0x6]]
    %s856 = sld [smem:[#allocation2 + $0x37]]
    %v857 = vstv %s855
    %v858 = vmul.f32 %v499, %v857
    %v859 = vmul.f32 %v508, %v857
    %v860 = vmul.f32 %v517, %v857
    %v861 = vmul.f32 %v526, %v857
    %v862 = vstv %s856
    %v863 = vmul.f32 %v564, %v862
    %v864 = vmul.f32 %v565, %v862
    %v865 = vmul.f32 %v566, %v862
    %v866 = vmul.f32 %v567, %v862
    %v867 = vadd.f32 %v858, %v863
    %v868 = vadd.f32 %v859, %v864
    %v869 = vadd.f32 %v860, %v865
    %v870 = vadd.f32 %v861, %v866
    %v875 = vsel %vm300, %v869, %v867
    %v876 = vsel %vm300, %v870, %v868
    %879 = vrot.lane.b32.xlu0 %v875, 45
    %v880 = vpop.permute.xlu0 %879
    %881 = vrot.lane.b32.xlu0 %v876, 45
    %v882 = vpop.permute.xlu0 %881
    %vm883 = vcmp.lt.s32.totalorder %v217, 45
    %v884 = vsel %vm883, %v880, %v882
    %v885 = vsel %vm883, %v882, %v880
    %s886 = scalar_lea.vmem %s5, 24
    %v887 = vld [vmem:[%s886] sm:$0xf]
    %v890 = vunpack.c.l.s4 1983009808
    %v891 = vunpack.c.0.s8 %v890
    %v892 = vlaneseq
    %v893 = vshrl.u32 %v892, 7
    %v894 = vsub.s32 %v891, %v893
    %v895 = vrot.slane %v887, %v894
    %v896 = vcombine.high %v895, %v895
    %v899 = vmul.f32 %v885, %v895
    %v900 = vmul.f32 %v884, %v896
    %v901 = vadd.f32 %v853, %v899
    %v902 = vadd.f32 %v854, %v900
    %s903 = sld [smem:[#allocation2 + $0x7]]
    %s904 = sld [smem:[#allocation2 + $0x38]]
    %v905 = vstv %s903
    %v906 = vmul.f32 %v499, %v905
    %v907 = vmul.f32 %v508, %v905
    %v908 = vmul.f32 %v517, %v905
    %v909 = vmul.f32 %v526, %v905
    %v910 = vstv %s904
    %v911 = vmul.f32 %v564, %v910
    %v912 = vmul.f32 %v565, %v910
    %v913 = vmul.f32 %v566, %v910
    %v914 = vmul.f32 %v567, %v910
    %v915 = vadd.f32 %v906, %v911
    %v916 = vadd.f32 %v907, %v912
    %v917 = vadd.f32 %v908, %v913
    %v918 = vadd.f32 %v909, %v914
    %v923 = vsel %vm300, %v917, %v915
    %v924 = vsel %vm300, %v918, %v916
    %927 = vrot.lane.b32.xlu0 %v923, 35
    %v928 = vpop.permute.xlu0 %927
    %929 = vrot.lane.b32.xlu0 %v924, 35
    %v930 = vpop.permute.xlu0 %929
    %vm931 = vcmp.lt.s32.totalorder %v217, 35
    %v932 = vsel %vm931, %v928, %v930
    %v933 = vsel %vm931, %v930, %v928
    %s934 = scalar_lea.vmem %s5, 28
    %v935 = vld [vmem:[%s934] sm:$0xf]
    %v938 = vunpack.c.l.s4 1983009808
    %v939 = vunpack.c.0.s8 %v938
    %v940 = vlaneseq
    %v941 = vshrl.u32 %v940, 7
    %v942 = vsub.s32 %v939, %v941
    %v943 = vrot.slane %v935, %v942
    %v944 = vcombine.high %v943, %v943
    %v947 = vmul.f32 %v933, %v943
    %v948 = vmul.f32 %v932, %v944
    %v949 = vadd.f32 %v901, %v947
    %v950 = vadd.f32 %v902, %v948
    %s951 = sld [smem:[#allocation2 + $0x8]]
    %s952 = sld [smem:[#allocation2 + $0x39]]
    %v953 = vstv %s951
    %v954 = vmul.f32 %v499, %v953
    %v955 = vmul.f32 %v508, %v953
    %v956 = vmul.f32 %v517, %v953
    %v957 = vmul.f32 %v526, %v953
    %v958 = vstv %s952
    %v959 = vmul.f32 %v564, %v958
    %v960 = vmul.f32 %v565, %v958
    %v961 = vmul.f32 %v566, %v958
    %v962 = vmul.f32 %v567, %v958
    %v963 = vadd.f32 %v954, %v959
    %v964 = vadd.f32 %v955, %v960
    %v965 = vadd.f32 %v956, %v961
    %v966 = vadd.f32 %v957, %v962
    %v971 = vsel %vm300, %v965, %v963
    %v972 = vsel %vm300, %v966, %v964
    %975 = vrot.lane.b32.xlu0 %v971, 34
    %v976 = vpop.permute.xlu0 %975
    %977 = vrot.lane.b32.xlu0 %v972, 34
    %v978 = vpop.permute.xlu0 %977
    %vm979 = vcmp.lt.s32.totalorder %v217, 34
    %v980 = vsel %vm979, %v976, %v978
    %v981 = vsel %vm979, %v978, %v976
    %s982 = scalar_lea.vmem %s5, 32
    %v983 = vld [vmem:[%s982] sm:$0xf]
    %v986 = vunpack.c.l.s4 1983009808
    %v987 = vunpack.c.0.s8 %v986
    %v988 = vlaneseq
    %v989 = vshrl.u32 %v988, 7
    %v990 = vsub.s32 %v987, %v989
    %v991 = vrot.slane %v983, %v990
    %v992 = vcombine.high %v991, %v991
    %v995 = vmul.f32 %v981, %v991
    %v996 = vmul.f32 %v980, %v992
    %v997 = vadd.f32 %v949, %v995
    %v998 = vadd.f32 %v950, %v996
    %s999 = sld [smem:[#allocation2 + $0x9]]
    %s1000 = sld [smem:[#allocation2 + $0x3a]]
    %v1001 = vstv %s999
    %v1002 = vmul.f32 %v499, %v1001
    %v1003 = vmul.f32 %v508, %v1001
    %v1004 = vmul.f32 %v517, %v1001
    %v1005 = vmul.f32 %v526, %v1001
    %v1006 = vstv %s1000
    %v1007 = vmul.f32 %v564, %v1006
    %v1008 = vmul.f32 %v565, %v1006
    %v1009 = vmul.f32 %v566, %v1006
    %v1010 = vmul.f32 %v567, %v1006
    %v1011 = vadd.f32 %v1002, %v1007
    %v1012 = vadd.f32 %v1003, %v1008
    %v1013 = vadd.f32 %v1004, %v1009
    %v1014 = vadd.f32 %v1005, %v1010
    %v1019 = vsel %vm300, %v1013, %v1011
    %v1020 = vsel %vm300, %v1014, %v1012
    %1023 = vrot.lane.b32.xlu0 %v1019, 33
    %v1024 = vpop.permute.xlu0 %1023
    %1025 = vrot.lane.b32.xlu0 %v1020, 33
    %v1026 = vpop.permute.xlu0 %1025
    %vm1027 = vcmp.lt.s32.totalorder %v217, 33
    %v1028 = vsel %vm1027, %v1024, %v1026
    %v1029 = vsel %vm1027, %v1026, %v1024
    %s1030 = scalar_lea.vmem %s5, 36
    %v1031 = vld [vmem:[%s1030] sm:$0xf]
    %v1034 = vunpack.c.l.s4 1983009808
    %v1035 = vunpack.c.0.s8 %v1034
    %v1036 = vlaneseq
    %v1037 = vshrl.u32 %v1036, 7
    %v1038 = vsub.s32 %v1035, %v1037
    %v1039 = vrot.slane %v1031, %v1038
    %v1040 = vcombine.high %v1039, %v1039
    %v1043 = vmul.f32 %v1029, %v1039
    %v1044 = vmul.f32 %v1028, %v1040
    %v1045 = vadd.f32 %v997, %v1043
    %v1046 = vadd.f32 %v998, %v1044
    %s1047 = sld [smem:[#allocation2 + $0xa]]
    %s1048 = sld [smem:[#allocation2 + $0x3b]]
    %v1049 = vstv %s1047
    %v1050 = vmul.f32 %v499, %v1049
    %v1051 = vmul.f32 %v508, %v1049
    %v1052 = vmul.f32 %v517, %v1049
    %v1053 = vmul.f32 %v526, %v1049
    %v1054 = vstv %s1048
    %v1055 = vmul.f32 %v564, %v1054
    %v1056 = vmul.f32 %v565, %v1054
    %v1057 = vmul.f32 %v566, %v1054
    %v1058 = vmul.f32 %v567, %v1054
    %v1059 = vadd.f32 %v1050, %v1055
    %v1060 = vadd.f32 %v1051, %v1056
    %v1061 = vadd.f32 %v1052, %v1057
    %v1062 = vadd.f32 %v1053, %v1058
    %v1067 = vsel %vm300, %v1061, %v1059
    %v1068 = vsel %vm300, %v1062, %v1060
    %1071 = vrot.lane.b32.xlu0 %v1067, 32
    %v1072 = vpop.permute.xlu0 %1071
    %1073 = vrot.lane.b32.xlu0 %v1068, 32
    %v1074 = vpop.permute.xlu0 %1073
    %vm1075 = vcmp.lt.s32.totalorder %v217, 32
    %v1076 = vsel %vm1075, %v1072, %v1074
    %v1077 = vsel %vm1075, %v1074, %v1072
    %s1078 = scalar_lea.vmem %s5, 40
    %v1079 = vld [vmem:[%s1078] sm:$0xf]
    %v1082 = vunpack.c.l.s4 1983009808
    %v1083 = vunpack.c.0.s8 %v1082
    %v1084 = vlaneseq
    %v1085 = vshrl.u32 %v1084, 7
    %v1086 = vsub.s32 %v1083, %v1085
    %v1087 = vrot.slane %v1079, %v1086
    %v1088 = vcombine.high %v1087, %v1087
    %v1091 = vmul.f32 %v1077, %v1087
    %v1092 = vmul.f32 %v1076, %v1088
    %v1093 = vadd.f32 %v1045, %v1091
    %v1094 = vadd.f32 %v1046, %v1092
    %s1095 = sld [smem:[#allocation2 + $0xb]]
    %s1096 = sld [smem:[#allocation2 + $0x3c]]
    %v1097 = vstv %s1095
    %v1098 = vmul.f32 %v499, %v1097
    %v1099 = vmul.f32 %v508, %v1097
    %v1100 = vmul.f32 %v517, %v1097
    %v1101 = vmul.f32 %v526, %v1097
    %v1102 = vstv %s1096
    %v1103 = vmul.f32 %v564, %v1102
    %v1104 = vmul.f32 %v565, %v1102
    %v1105 = vmul.f32 %v566, %v1102
    %v1106 = vmul.f32 %v567, %v1102
    %v1107 = vadd.f32 %v1098, %v1103
    %v1108 = vadd.f32 %v1099, %v1104
    %v1109 = vadd.f32 %v1100, %v1105
    %v1110 = vadd.f32 %v1101, %v1106
    %v1115 = vsel %vm300, %v1109, %v1107
    %v1116 = vsel %vm300, %v1110, %v1108
    %1119 = vrot.lane.b32.xlu0 %v1115, 31
    %v1120 = vpop.permute.xlu0 %1119
    %1121 = vrot.lane.b32.xlu0 %v1116, 31
    %v1122 = vpop.permute.xlu0 %1121
    %vm1123 = vcmp.lt.s32.totalorder %v217, 31
    %v1124 = vsel %vm1123, %v1120, %v1122
    %v1125 = vsel %vm1123, %v1122, %v1120
    %s1126 = scalar_lea.vmem %s5, 44
    %v1127 = vld [vmem:[%s1126] sm:$0xf]
    %v1130 = vunpack.c.l.s4 1983009808
    %v1131 = vunpack.c.0.s8 %v1130
    %v1132 = vlaneseq
    %v1133 = vshrl.u32 %v1132, 7
    %v1134 = vsub.s32 %v1131, %v1133
    %v1135 = vrot.slane %v1127, %v1134
    %v1136 = vcombine.high %v1135, %v1135
    %v1139 = vmul.f32 %v1125, %v1135
    %v1140 = vmul.f32 %v1124, %v1136
    %v1141 = vadd.f32 %v1093, %v1139
    %v1142 = vadd.f32 %v1094, %v1140
    %s1143 = sld [smem:[#allocation2 + $0xc]]
    %s1144 = sld [smem:[#allocation2 + $0x3d]]
    %v1145 = vstv %s1143
    %v1146 = vmul.f32 %v499, %v1145
    %v1147 = vmul.f32 %v508, %v1145
    %v1148 = vmul.f32 %v517, %v1145
    %v1149 = vmul.f32 %v526, %v1145
    %v1150 = vstv %s1144
    %v1151 = vmul.f32 %v564, %v1150
    %v1152 = vmul.f32 %v565, %v1150
    %v1153 = vmul.f32 %v566, %v1150
    %v1154 = vmul.f32 %v567, %v1150
    %v1155 = vadd.f32 %v1146, %v1151
    %v1156 = vadd.f32 %v1147, %v1152
    %v1157 = vadd.f32 %v1148, %v1153
    %v1158 = vadd.f32 %v1149, %v1154
    %v1163 = vsel %vm300, %v1157, %v1155
    %v1164 = vsel %vm300, %v1158, %v1156
    %1167 = vrot.lane.b32.xlu0 %v1163, 30
    %v1168 = vpop.permute.xlu0 %1167
    %1169 = vrot.lane.b32.xlu0 %v1164, 30
    %v1170 = vpop.permute.xlu0 %1169
    %vm1171 = vcmp.lt.s32.totalorder %v217, 30
    %v1172 = vsel %vm1171, %v1168, %v1170
    %v1173 = vsel %vm1171, %v1170, %v1168
    %s1174 = scalar_lea.vmem %s5, 48
    %v1175 = vld [vmem:[%s1174] sm:$0xf]
    %v1178 = vunpack.c.l.s4 1983009808
    %v1179 = vunpack.c.0.s8 %v1178
    %v1180 = vlaneseq
    %v1181 = vshrl.u32 %v1180, 7
    %v1182 = vsub.s32 %v1179, %v1181
    %v1183 = vrot.slane %v1175, %v1182
    %v1184 = vcombine.high %v1183, %v1183
    %v1187 = vmul.f32 %v1173, %v1183
    %v1188 = vmul.f32 %v1172, %v1184
    %v1189 = vadd.f32 %v1141, %v1187
    %v1190 = vadd.f32 %v1142, %v1188
    %s1191 = sld [smem:[#allocation2 + $0xd]]
    %s1192 = sld [smem:[#allocation2 + $0x3e]]
    %v1193 = vstv %s1191
    %v1194 = vmul.f32 %v499, %v1193
    %v1195 = vmul.f32 %v508, %v1193
    %v1196 = vmul.f32 %v517, %v1193
    %v1197 = vmul.f32 %v526, %v1193
    %v1198 = vstv %s1192
    %v1199 = vmul.f32 %v564, %v1198
    %v1200 = vmul.f32 %v565, %v1198
    %v1201 = vmul.f32 %v566, %v1198
    %v1202 = vmul.f32 %v567, %v1198
    %v1203 = vadd.f32 %v1194, %v1199
    %v1204 = vadd.f32 %v1195, %v1200
    %v1205 = vadd.f32 %v1196, %v1201
    %v1206 = vadd.f32 %v1197, %v1202
    %v1211 = vsel %vm300, %v1205, %v1203
    %v1212 = vsel %vm300, %v1206, %v1204
    %1215 = vrot.lane.b32.xlu0 %v1211, 29
    %v1216 = vpop.permute.xlu0 %1215
    %1217 = vrot.lane.b32.xlu0 %v1212, 29
    %v1218 = vpop.permute.xlu0 %1217
    %vm1219 = vcmp.lt.s32.totalorder %v217, 29
    %v1220 = vsel %vm1219, %v1216, %v1218
    %v1221 = vsel %vm1219, %v1218, %v1216
    %s1222 = scalar_lea.vmem %s5, 52
    %v1223 = vld [vmem:[%s1222] sm:$0xf]
    %v1226 = vunpack.c.l.s4 1983009808
    %v1227 = vunpack.c.0.s8 %v1226
    %v1228 = vlaneseq
    %v1229 = vshrl.u32 %v1228, 7
    %v1230 = vsub.s32 %v1227, %v1229
    %v1231 = vrot.slane %v1223, %v1230
    %v1232 = vcombine.high %v1231, %v1231
    %v1235 = vmul.f32 %v1221, %v1231
    %v1236 = vmul.f32 %v1220, %v1232
    %v1237 = vadd.f32 %v1189, %v1235
    %v1238 = vadd.f32 %v1190, %v1236
    %s1239 = sld [smem:[#allocation2 + $0xe]]
    %s1240 = sld [smem:[#allocation2 + $0x3f]]
    %v1241 = vstv %s1239
    %v1242 = vmul.f32 %v499, %v1241
    %v1243 = vmul.f32 %v508, %v1241
    %v1244 = vmul.f32 %v517, %v1241
    %v1245 = vmul.f32 %v526, %v1241
    %v1246 = vstv %s1240
    %v1247 = vmul.f32 %v564, %v1246
    %v1248 = vmul.f32 %v565, %v1246
    %v1249 = vmul.f32 %v566, %v1246
    %v1250 = vmul.f32 %v567, %v1246
    %v1251 = vadd.f32 %v1242, %v1247
    %v1252 = vadd.f32 %v1243, %v1248
    %v1253 = vadd.f32 %v1244, %v1249
    %v1254 = vadd.f32 %v1245, %v1250
    %v1259 = vsel %vm300, %v1253, %v1251
    %v1260 = vsel %vm300, %v1254, %v1252
    %1263 = vrot.lane.b32.xlu0 %v1259, 19
    %v1264 = vpop.permute.xlu0 %1263
    %1265 = vrot.lane.b32.xlu0 %v1260, 19
    %v1266 = vpop.permute.xlu0 %1265
    %vm1267 = vcmp.lt.s32.totalorder %v217, 19
    %v1268 = vsel %vm1267, %v1264, %v1266
    %v1269 = vsel %vm1267, %v1266, %v1264
    %s1270 = scalar_lea.vmem %s5, 56
    %v1271 = vld [vmem:[%s1270] sm:$0xf]
    %v1274 = vunpack.c.l.s4 1983009808
    %v1275 = vunpack.c.0.s8 %v1274
    %v1276 = vlaneseq
    %v1277 = vshrl.u32 %v1276, 7
    %v1278 = vsub.s32 %v1275, %v1277
    %v1279 = vrot.slane %v1271, %v1278
    %v1280 = vcombine.high %v1279, %v1279
    %v1283 = vmul.f32 %v1269, %v1279
    %v1284 = vmul.f32 %v1268, %v1280
    %v1285 = vadd.f32 %v1237, %v1283
    %v1286 = vadd.f32 %v1238, %v1284
    %s1287 = sld [smem:[#allocation2 + $0xf]]
    %s1288 = sld [smem:[#allocation2 + $0x40]]
    %v1289 = vstv %s1287
    %v1290 = vmul.f32 %v499, %v1289
    %v1291 = vmul.f32 %v508, %v1289
    %v1292 = vmul.f32 %v517, %v1289
    %v1293 = vmul.f32 %v526, %v1289
    %v1294 = vstv %s1288
    %v1295 = vmul.f32 %v564, %v1294
    %v1296 = vmul.f32 %v565, %v1294
    %v1297 = vmul.f32 %v566, %v1294
    %v1298 = vmul.f32 %v567, %v1294
    %v1299 = vadd.f32 %v1290, %v1295
    %v1300 = vadd.f32 %v1291, %v1296
    %v1301 = vadd.f32 %v1292, %v1297
    %v1302 = vadd.f32 %v1293, %v1298
    %v1307 = vsel %vm300, %v1301, %v1299
    %v1308 = vsel %vm300, %v1302, %v1300
    %1311 = vrot.lane.b32.xlu0 %v1307, 18
    %v1312 = vpop.permute.xlu0 %1311
    %1313 = vrot.lane.b32.xlu0 %v1308, 18
    %v1314 = vpop.permute.xlu0 %1313
    %vm1315 = vcmp.lt.s32.totalorder %v217, 18
    %v1316 = vsel %vm1315, %v1312, %v1314
    %v1317 = vsel %vm1315, %v1314, %v1312
    %s1318 = scalar_lea.vmem %s5, 60
    %v1319 = vld [vmem:[%s1318] sm:$0xf]
    %v1322 = vunpack.c.l.s4 1983009808
    %v1323 = vunpack.c.0.s8 %v1322
    %v1324 = vlaneseq
    %v1325 = vshrl.u32 %v1324, 7
    %v1326 = vsub.s32 %v1323, %v1325
    %v1327 = vrot.slane %v1319, %v1326
    %v1328 = vcombine.high %v1327, %v1327
    %v1331 = vmul.f32 %v1317, %v1327
    %v1332 = vmul.f32 %v1316, %v1328
    %v1333 = vadd.f32 %v1285, %v1331
    %v1334 = vadd.f32 %v1286, %v1332
    %s1335 = sld [smem:[#allocation2 + $0x10]]
    %s1336 = sld [smem:[#allocation2 + $0x41]]
    %v1337 = vstv %s1335
    %v1338 = vmul.f32 %v499, %v1337
    %v1339 = vmul.f32 %v508, %v1337
    %v1340 = vmul.f32 %v517, %v1337
    %v1341 = vmul.f32 %v526, %v1337
    %v1342 = vstv %s1336
    %v1343 = vmul.f32 %v564, %v1342
    %v1344 = vmul.f32 %v565, %v1342
    %v1345 = vmul.f32 %v566, %v1342
    %v1346 = vmul.f32 %v567, %v1342
    %v1347 = vadd.f32 %v1338, %v1343
    %v1348 = vadd.f32 %v1339, %v1344
    %v1349 = vadd.f32 %v1340, %v1345
    %v1350 = vadd.f32 %v1341, %v1346
    %v1355 = vsel %vm300, %v1349, %v1347
    %v1356 = vsel %vm300, %v1350, %v1348
    %1359 = vrot.lane.b32.xlu0 %v1355, 17
    %v1360 = vpop.permute.xlu0 %1359
    %1361 = vrot.lane.b32.xlu0 %v1356, 17
    %v1362 = vpop.permute.xlu0 %1361
    %vm1363 = vcmp.lt.s32.totalorder %v217, 17
    %v1364 = vsel %vm1363, %v1360, %v1362
    %v1365 = vsel %vm1363, %v1362, %v1360
    %s1366 = scalar_lea.vmem %s5, 64
    %v1367 = vld [vmem:[%s1366] sm:$0xf]
    %v1370 = vunpack.c.l.s4 1983009808
    %v1371 = vunpack.c.0.s8 %v1370
    %v1372 = vlaneseq
    %v1373 = vshrl.u32 %v1372, 7
    %v1374 = vsub.s32 %v1371, %v1373
    %v1375 = vrot.slane %v1367, %v1374
    %v1376 = vcombine.high %v1375, %v1375
    %v1379 = vmul.f32 %v1365, %v1375
    %v1380 = vmul.f32 %v1364, %v1376
    %v1381 = vadd.f32 %v1333, %v1379
    %v1382 = vadd.f32 %v1334, %v1380
    %s1383 = sld [smem:[#allocation2 + $0x11]]
    %s1384 = sld [smem:[#allocation2 + $0x42]]
    %v1385 = vstv %s1383
    %v1386 = vmul.f32 %v499, %v1385
    %v1387 = vmul.f32 %v508, %v1385
    %v1388 = vmul.f32 %v517, %v1385
    %v1389 = vmul.f32 %v526, %v1385
    %v1390 = vstv %s1384
    %v1391 = vmul.f32 %v564, %v1390
    %v1392 = vmul.f32 %v565, %v1390
    %v1393 = vmul.f32 %v566, %v1390
    %v1394 = vmul.f32 %v567, %v1390
    %v1395 = vadd.f32 %v1386, %v1391
    %v1396 = vadd.f32 %v1387, %v1392
    %v1397 = vadd.f32 %v1388, %v1393
    %v1398 = vadd.f32 %v1389, %v1394
    %v1403 = vsel %vm300, %v1397, %v1395
    %v1404 = vsel %vm300, %v1398, %v1396
    %1407 = vrot.lane.b32.xlu0 %v1403, 16
    %v1408 = vpop.permute.xlu0 %1407
    %1409 = vrot.lane.b32.xlu0 %v1404, 16
    %v1410 = vpop.permute.xlu0 %1409
    %vm1411 = vcmp.lt.s32.totalorder %v217, 16
    %v1412 = vsel %vm1411, %v1408, %v1410
    %v1413 = vsel %vm1411, %v1410, %v1408
    %s1414 = scalar_lea.vmem %s5, 68
    %v1415 = vld [vmem:[%s1414] sm:$0xf]
    %v1418 = vunpack.c.l.s4 1983009808
    %v1419 = vunpack.c.0.s8 %v1418
    %v1420 = vlaneseq
    %v1421 = vshrl.u32 %v1420, 7
    %v1422 = vsub.s32 %v1419, %v1421
    %v1423 = vrot.slane %v1415, %v1422
    %v1424 = vcombine.high %v1423, %v1423
    %v1427 = vmul.f32 %v1413, %v1423
    %v1428 = vmul.f32 %v1412, %v1424
    %v1429 = vadd.f32 %v1381, %v1427
    %v1430 = vadd.f32 %v1382, %v1428
    %s1431 = sld [smem:[#allocation2 + $0x12]]
    %s1432 = sld [smem:[#allocation2 + $0x43]]
    %v1433 = vstv %s1431
    %v1434 = vmul.f32 %v499, %v1433
    %v1435 = vmul.f32 %v508, %v1433
    %v1436 = vmul.f32 %v517, %v1433
    %v1437 = vmul.f32 %v526, %v1433
    %v1438 = vstv %s1432
    %v1439 = vmul.f32 %v564, %v1438
    %v1440 = vmul.f32 %v565, %v1438
    %v1441 = vmul.f32 %v566, %v1438
    %v1442 = vmul.f32 %v567, %v1438
    %v1443 = vadd.f32 %v1434, %v1439
    %v1444 = vadd.f32 %v1435, %v1440
    %v1445 = vadd.f32 %v1436, %v1441
    %v1446 = vadd.f32 %v1437, %v1442
    %v1451 = vsel %vm300, %v1445, %v1443
    %v1452 = vsel %vm300, %v1446, %v1444
    %1455 = vrot.lane.b32.xlu0 %v1451, 15
    %v1456 = vpop.permute.xlu0 %1455
    %1457 = vrot.lane.b32.xlu0 %v1452, 15
    %v1458 = vpop.permute.xlu0 %1457
    %vm1459 = vcmp.lt.s32.totalorder %v217, 15
    %v1460 = vsel %vm1459, %v1456, %v1458
    %v1461 = vsel %vm1459, %v1458, %v1456
    %s1462 = scalar_lea.vmem %s5, 72
    %v1463 = vld [vmem:[%s1462] sm:$0xf]
    %v1466 = vunpack.c.l.s4 1983009808
    %v1467 = vunpack.c.0.s8 %v1466
    %v1468 = vlaneseq
    %v1469 = vshrl.u32 %v1468, 7
    %v1470 = vsub.s32 %v1467, %v1469
    %v1471 = vrot.slane %v1463, %v1470
    %v1472 = vcombine.high %v1471, %v1471
    %v1475 = vmul.f32 %v1461, %v1471
    %v1476 = vmul.f32 %v1460, %v1472
    %v1477 = vadd.f32 %v1429, %v1475
    %v1478 = vadd.f32 %v1430, %v1476
    %s1479 = sld [smem:[#allocation2 + $0x13]]
    %s1480 = sld [smem:[#allocation2 + $0x44]]
    %v1481 = vstv %s1479
    %v1482 = vmul.f32 %v499, %v1481
    %v1483 = vmul.f32 %v508, %v1481
    %v1484 = vmul.f32 %v517, %v1481
    %v1485 = vmul.f32 %v526, %v1481
    %v1486 = vstv %s1480
    %v1487 = vmul.f32 %v564, %v1486
    %v1488 = vmul.f32 %v565, %v1486
    %v1489 = vmul.f32 %v566, %v1486
    %v1490 = vmul.f32 %v567, %v1486
    %v1491 = vadd.f32 %v1482, %v1487
    %v1492 = vadd.f32 %v1483, %v1488
    %v1493 = vadd.f32 %v1484, %v1489
    %v1494 = vadd.f32 %v1485, %v1490
    %v1499 = vsel %vm300, %v1493, %v1491
    %v1500 = vsel %vm300, %v1494, %v1492
    %1503 = vrot.lane.b32.xlu0 %v1499, 14
    %v1504 = vpop.permute.xlu0 %1503
    %1505 = vrot.lane.b32.xlu0 %v1500, 14
    %v1506 = vpop.permute.xlu0 %1505
    %vm1507 = vcmp.lt.s32.totalorder %v217, 14
    %v1508 = vsel %vm1507, %v1504, %v1506
    %v1509 = vsel %vm1507, %v1506, %v1504
    %s1510 = scalar_lea.vmem %s5, 76
    %v1511 = vld [vmem:[%s1510] sm:$0xf]
    %v1514 = vunpack.c.l.s4 1983009808
    %v1515 = vunpack.c.0.s8 %v1514
    %v1516 = vlaneseq
    %v1517 = vshrl.u32 %v1516, 7
    %v1518 = vsub.s32 %v1515, %v1517
    %v1519 = vrot.slane %v1511, %v1518
    %v1520 = vcombine.high %v1519, %v1519
    %v1523 = vmul.f32 %v1509, %v1519
    %v1524 = vmul.f32 %v1508, %v1520
    %v1525 = vadd.f32 %v1477, %v1523
    %v1526 = vadd.f32 %v1478, %v1524
    %s1527 = sld [smem:[#allocation2 + $0x14]]
    %s1528 = sld [smem:[#allocation2 + $0x45]]
    %v1529 = vstv %s1527
    %v1530 = vmul.f32 %v499, %v1529
    %v1531 = vmul.f32 %v508, %v1529
    %v1532 = vmul.f32 %v517, %v1529
    %v1533 = vmul.f32 %v526, %v1529
    %v1534 = vstv %s1528
    %v1535 = vmul.f32 %v564, %v1534
    %v1536 = vmul.f32 %v565, %v1534
    %v1537 = vmul.f32 %v566, %v1534
    %v1538 = vmul.f32 %v567, %v1534
    %v1539 = vadd.f32 %v1530, %v1535
    %v1540 = vadd.f32 %v1531, %v1536
    %v1541 = vadd.f32 %v1532, %v1537
    %v1542 = vadd.f32 %v1533, %v1538
    %v1547 = vsel %vm300, %v1541, %v1539
    %v1548 = vsel %vm300, %v1542, %v1540
    %1551 = vrot.lane.b32.xlu0 %v1547, 13
    %v1552 = vpop.permute.xlu0 %1551
    %1553 = vrot.lane.b32.xlu0 %v1548, 13
    %v1554 = vpop.permute.xlu0 %1553
    %vm1555 = vcmp.lt.s32.totalorder %v217, 13
    %v1556 = vsel %vm1555, %v1552, %v1554
    %v1557 = vsel %vm1555, %v1554, %v1552
    %s1558 = scalar_lea.vmem %s5, 80
    %v1559 = vld [vmem:[%s1558] sm:$0xf]
    %v1562 = vunpack.c.l.s4 1983009808
    %v1563 = vunpack.c.0.s8 %v1562
    %v1564 = vlaneseq
    %v1565 = vshrl.u32 %v1564, 7
    %v1566 = vsub.s32 %v1563, %v1565
    %v1567 = vrot.slane %v1559, %v1566
    %v1568 = vcombine.high %v1567, %v1567
    %v1571 = vmul.f32 %v1557, %v1567
    %v1572 = vmul.f32 %v1556, %v1568
    %v1573 = vadd.f32 %v1525, %v1571
    %v1574 = vadd.f32 %v1526, %v1572
    %s1575 = sld [smem:[#allocation2 + $0x15]]
    %s1576 = sld [smem:[#allocation2 + $0x46]]
    %v1577 = vstv %s1575
    %v1578 = vmul.f32 %v499, %v1577
    %v1579 = vmul.f32 %v508, %v1577
    %v1580 = vmul.f32 %v517, %v1577
    %v1581 = vmul.f32 %v526, %v1577
    %v1582 = vstv %s1576
    %v1583 = vmul.f32 %v564, %v1582
    %v1584 = vmul.f32 %v565, %v1582
    %v1585 = vmul.f32 %v566, %v1582
    %v1586 = vmul.f32 %v567, %v1582
    %v1587 = vadd.f32 %v1578, %v1583
    %v1588 = vadd.f32 %v1579, %v1584
    %v1589 = vadd.f32 %v1580, %v1585
    %v1590 = vadd.f32 %v1581, %v1586
    %v1595 = vsel %vm300, %v1589, %v1587
    %v1596 = vsel %vm300, %v1590, %v1588
    %1599 = vrot.lane.b32.xlu0 %v1595, 3
    %v1600 = vpop.permute.xlu0 %1599
    %1601 = vrot.lane.b32.xlu0 %v1596, 3
    %v1602 = vpop.permute.xlu0 %1601
    %vm1603 = vcmp.lt.s32.totalorder %v217, 3
    %v1604 = vsel %vm1603, %v1600, %v1602
    %v1605 = vsel %vm1603, %v1602, %v1600
    %s1606 = scalar_lea.vmem %s5, 84
    %v1607 = vld [vmem:[%s1606] sm:$0xf]
    %v1610 = vunpack.c.l.s4 1983009808
    %v1611 = vunpack.c.0.s8 %v1610
    %v1612 = vlaneseq
    %v1613 = vshrl.u32 %v1612, 7
    %v1614 = vsub.s32 %v1611, %v1613
    %v1615 = vrot.slane %v1607, %v1614
    %v1616 = vcombine.high %v1615, %v1615
    %v1619 = vmul.f32 %v1605, %v1615
    %v1620 = vmul.f32 %v1604, %v1616
    %v1621 = vadd.f32 %v1573, %v1619
    %v1622 = vadd.f32 %v1574, %v1620
    %s1623 = sld [smem:[#allocation2 + $0x16]]
    %s1624 = sld [smem:[#allocation2 + $0x47]]
    %v1625 = vstv %s1623
    %v1626 = vmul.f32 %v499, %v1625
    %v1627 = vmul.f32 %v508, %v1625
    %v1628 = vmul.f32 %v517, %v1625
    %v1629 = vmul.f32 %v526, %v1625
    %v1630 = vstv %s1624
    %v1631 = vmul.f32 %v564, %v1630
    %v1632 = vmul.f32 %v565, %v1630
    %v1633 = vmul.f32 %v566, %v1630
    %v1634 = vmul.f32 %v567, %v1630
    %v1635 = vadd.f32 %v1626, %v1631
    %v1636 = vadd.f32 %v1627, %v1632
    %v1637 = vadd.f32 %v1628, %v1633
    %v1638 = vadd.f32 %v1629, %v1634
    %v1643 = vsel %vm300, %v1637, %v1635
    %v1644 = vsel %vm300, %v1638, %v1636
    %1647 = vrot.lane.b32.xlu0 %v1643, 2
    %v1648 = vpop.permute.xlu0 %1647
    %1649 = vrot.lane.b32.xlu0 %v1644, 2
    %v1650 = vpop.permute.xlu0 %1649
    %vm1651 = vcmp.lt.s32.totalorder %v217, 2
    %v1652 = vsel %vm1651, %v1648, %v1650
    %v1653 = vsel %vm1651, %v1650, %v1648
    %s1654 = scalar_lea.vmem %s5, 88
    %v1655 = vld [vmem:[%s1654] sm:$0xf]
    %v1658 = vunpack.c.l.s4 1983009808
    %v1659 = vunpack.c.0.s8 %v1658
    %v1660 = vlaneseq
    %v1661 = vshrl.u32 %v1660, 7
    %v1662 = vsub.s32 %v1659, %v1661
    %v1663 = vrot.slane %v1655, %v1662
    %v1664 = vcombine.high %v1663, %v1663
    %v1667 = vmul.f32 %v1653, %v1663
    %v1668 = vmul.f32 %v1652, %v1664
    %v1669 = vadd.f32 %v1621, %v1667
    %v1670 = vadd.f32 %v1622, %v1668
    %s1671 = sld [smem:[#allocation2 + $0x17]]
    %s1672 = sld [smem:[#allocation2 + $0x48]]
    %v1673 = vstv %s1671
    %v1674 = vmul.f32 %v499, %v1673
    %v1675 = vmul.f32 %v508, %v1673
    %v1676 = vmul.f32 %v517, %v1673
    %v1677 = vmul.f32 %v526, %v1673
    %v1678 = vstv %s1672
    %v1679 = vmul.f32 %v564, %v1678
    %v1680 = vmul.f32 %v565, %v1678
    %v1681 = vmul.f32 %v566, %v1678
    %v1682 = vmul.f32 %v567, %v1678
    %v1683 = vadd.f32 %v1674, %v1679
    %v1684 = vadd.f32 %v1675, %v1680
    %v1685 = vadd.f32 %v1676, %v1681
    %v1686 = vadd.f32 %v1677, %v1682
    %v1691 = vsel %vm300, %v1685, %v1683
    %v1692 = vsel %vm300, %v1686, %v1684
    %1695 = vrot.lane.b32.xlu0 %v1691, 1
    %v1696 = vpop.permute.xlu0 %1695
    %1697 = vrot.lane.b32.xlu0 %v1692, 1
    %v1698 = vpop.permute.xlu0 %1697
    %vm1699 = vcmp.lt.s32.totalorder %v217, 1
    %v1700 = vsel %vm1699, %v1696, %v1698
    %v1701 = vsel %vm1699, %v1698, %v1696
    %s1702 = scalar_lea.vmem %s5, 92
    %v1703 = vld [vmem:[%s1702] sm:$0xf]
    %v1706 = vunpack.c.l.s4 1983009808
    %v1707 = vunpack.c.0.s8 %v1706
    %v1708 = vlaneseq
    %v1709 = vshrl.u32 %v1708, 7
    %v1710 = vsub.s32 %v1707, %v1709
    %v1711 = vrot.slane %v1703, %v1710
    %v1712 = vcombine.high %v1711, %v1711
    %v1715 = vmul.f32 %v1701, %v1711
    %v1716 = vmul.f32 %v1700, %v1712
    %v1717 = vadd.f32 %v1669, %v1715
    %v1718 = vadd.f32 %v1670, %v1716
    %s1719 = sld [smem:[#allocation2 + $0x18]]
    %s1720 = sld [smem:[#allocation2 + $0x49]]
    %v1721 = vstv %s1719
    %v1722 = vmul.f32 %v499, %v1721
    %v1723 = vmul.f32 %v508, %v1721
    %v1724 = vmul.f32 %v517, %v1721
    %v1725 = vmul.f32 %v526, %v1721
    %v1726 = vstv %s1720
    %v1727 = vmul.f32 %v564, %v1726
    %v1728 = vmul.f32 %v565, %v1726
    %v1729 = vmul.f32 %v566, %v1726
    %v1730 = vmul.f32 %v567, %v1726
    %v1731 = vadd.f32 %v1722, %v1727
    %v1732 = vadd.f32 %v1723, %v1728
    %v1733 = vadd.f32 %v1724, %v1729
    %v1734 = vadd.f32 %v1725, %v1730
    %s1735 = scalar_lea.vmem %s5, 96
    %v1736 = vld [vmem:[%s1735] sm:$0xf]
    %v1739 = vunpack.c.l.s4 1983009808
    %v1740 = vunpack.c.0.s8 %v1739
    %v1741 = vlaneseq
    %v1742 = vshrl.u32 %v1741, 7
    %v1743 = vsub.s32 %v1740, %v1742
    %v1744 = vrot.slane %v1736, %v1743
    %v1745 = vcombine.high %v1744, %v1744
    %v1746 = vrot.slane %v1744, 1
    %v1747 = vrot.slane %v1745, 1
    %v1752 = vmul.f32 %v1731, %v1744
    %v1753 = vmul.f32 %v1732, %v1745
    %v1754 = vmul.f32 %v1733, %v1746
    %v1755 = vmul.f32 %v1734, %v1747
    %v1760 = vrot.slane %v1754, 7
    %v1761 = vsel %vm300, %v1760, %v1752
    %v1762 = vrot.slane %v1755, 7
    %v1763 = vsel %vm300, %v1762, %v1753
    %v1766 = vadd.f32 %v1717, %v1761
    %v1767 = vadd.f32 %v1718, %v1763
    %s1768 = sld [smem:[#allocation2 + $0x19]]
    %s1769 = sld [smem:[#allocation2 + $0x4a]]
    %v1770 = vstv %s1768
    %v1771 = vmul.f32 %v499, %v1770
    %v1772 = vmul.f32 %v508, %v1770
    %v1773 = vmul.f32 %v517, %v1770
    %v1774 = vmul.f32 %v526, %v1770
    %v1775 = vstv %s1769
    %v1776 = vmul.f32 %v564, %v1775
    %v1777 = vmul.f32 %v565, %v1775
    %v1778 = vmul.f32 %v566, %v1775
    %v1779 = vmul.f32 %v567, %v1775
    %v1780 = vadd.f32 %v1771, %v1776
    %v1781 = vadd.f32 %v1772, %v1777
    %v1782 = vadd.f32 %v1773, %v1778
    %v1783 = vadd.f32 %v1774, %v1779
    %v1788 = vsel %vm300, %v1782, %v1780
    %v1789 = vsel %vm300, %v1783, %v1781
    %1792 = vrot.lane.b32.xlu0 %v1788, 127
    %v1793 = vpop.permute.xlu0 %1792
    %1794 = vrot.lane.b32.xlu0 %v1789, 127
    %v1795 = vpop.permute.xlu0 %1794
    %vm1796 = vcmp.lt.s32.totalorder %v217, 127
    %v1797 = vsel %vm1796, %v1793, %v1795
    %v1798 = vsel %vm1796, %v1795, %v1793
    %s1799 = scalar_lea.vmem %s5, 100
    %v1800 = vld [vmem:[%s1799] sm:$0xf]
    %v1803 = vunpack.c.l.s4 1983009808
    %v1804 = vunpack.c.0.s8 %v1803
    %v1805 = vlaneseq
    %v1806 = vshrl.u32 %v1805, 7
    %v1807 = vsub.s32 %v1804, %v1806
    %v1808 = vrot.slane %v1800, %v1807
    %v1809 = vcombine.high %v1808, %v1808
    %v1812 = vmul.f32 %v1797, %v1808
    %v1813 = vmul.f32 %v1798, %v1809
    %v1814 = vadd.f32 %v1766, %v1812
    %v1815 = vadd.f32 %v1767, %v1813
    %s1816 = sld [smem:[#allocation2 + $0x1a]]
    %s1817 = sld [smem:[#allocation2 + $0x4b]]
    %v1818 = vstv %s1816
    %v1819 = vmul.f32 %v499, %v1818
    %v1820 = vmul.f32 %v508, %v1818
    %v1821 = vmul.f32 %v517, %v1818
    %v1822 = vmul.f32 %v526, %v1818
    %v1823 = vstv %s1817
    %v1824 = vmul.f32 %v564, %v1823
    %v1825 = vmul.f32 %v565, %v1823
    %v1826 = vmul.f32 %v566, %v1823
    %v1827 = vmul.f32 %v567, %v1823
    %v1828 = vadd.f32 %v1819, %v1824
    %v1829 = vadd.f32 %v1820, %v1825
    %v1830 = vadd.f32 %v1821, %v1826
    %v1831 = vadd.f32 %v1822, %v1827
    %v1836 = vsel %vm300, %v1830, %v1828
    %v1837 = vsel %vm300, %v1831, %v1829
    %1840 = vrot.lane.b32.xlu0 %v1836, 126
    %v1841 = vpop.permute.xlu0 %1840
    %1842 = vrot.lane.b32.xlu0 %v1837, 126
    %v1843 = vpop.permute.xlu0 %1842
    %vm1844 = vcmp.lt.s32.totalorder %v217, 126
    %v1845 = vsel %vm1844, %v1841, %v1843
    %v1846 = vsel %vm1844, %v1843, %v1841
    %s1847 = scalar_lea.vmem %s5, 104
    %v1848 = vld [vmem:[%s1847] sm:$0xf]
    %v1851 = vunpack.c.l.s4 1983009808
    %v1852 = vunpack.c.0.s8 %v1851
    %v1853 = vlaneseq
    %v1854 = vshrl.u32 %v1853, 7
    %v1855 = vsub.s32 %v1852, %v1854
    %v1856 = vrot.slane %v1848, %v1855
    %v1857 = vcombine.high %v1856, %v1856
    %v1860 = vmul.f32 %v1845, %v1856
    %v1861 = vmul.f32 %v1846, %v1857
    %v1862 = vadd.f32 %v1814, %v1860
    %v1863 = vadd.f32 %v1815, %v1861
    %s1864 = sld [smem:[#allocation2 + $0x1b]]
    %s1865 = sld [smem:[#allocation2 + $0x4c]]
    %v1866 = vstv %s1864
    %v1867 = vmul.f32 %v499, %v1866
    %v1868 = vmul.f32 %v508, %v1866
    %v1869 = vmul.f32 %v517, %v1866
    %v1870 = vmul.f32 %v526, %v1866
    %v1871 = vstv %s1865
    %v1872 = vmul.f32 %v564, %v1871
    %v1873 = vmul.f32 %v565, %v1871
    %v1874 = vmul.f32 %v566, %v1871
    %v1875 = vmul.f32 %v567, %v1871
    %v1876 = vadd.f32 %v1867, %v1872
    %v1877 = vadd.f32 %v1868, %v1873
    %v1878 = vadd.f32 %v1869, %v1874
    %v1879 = vadd.f32 %v1870, %v1875
    %v1884 = vsel %vm300, %v1878, %v1876
    %v1885 = vsel %vm300, %v1879, %v1877
    %1888 = vrot.lane.b32.xlu0 %v1884, 125
    %v1889 = vpop.permute.xlu0 %1888
    %1890 = vrot.lane.b32.xlu0 %v1885, 125
    %v1891 = vpop.permute.xlu0 %1890
    %vm1892 = vcmp.lt.s32.totalorder %v217, 125
    %v1893 = vsel %vm1892, %v1889, %v1891
    %v1894 = vsel %vm1892, %v1891, %v1889
    %s1895 = scalar_lea.vmem %s5, 108
    %v1896 = vld [vmem:[%s1895] sm:$0xf]
    %v1899 = vunpack.c.l.s4 1983009808
    %v1900 = vunpack.c.0.s8 %v1899
    %v1901 = vlaneseq
    %v1902 = vshrl.u32 %v1901, 7
    %v1903 = vsub.s32 %v1900, %v1902
    %v1904 = vrot.slane %v1896, %v1903
    %v1905 = vcombine.high %v1904, %v1904
    %v1908 = vmul.f32 %v1893, %v1904
    %v1909 = vmul.f32 %v1894, %v1905
    %v1910 = vadd.f32 %v1862, %v1908
    %v1911 = vadd.f32 %v1863, %v1909
    %s1912 = sld [smem:[#allocation2 + $0x1c]]
    %s1913 = sld [smem:[#allocation2 + $0x4d]]
    %v1914 = vstv %s1912
    %v1915 = vmul.f32 %v499, %v1914
    %v1916 = vmul.f32 %v508, %v1914
    %v1917 = vmul.f32 %v517, %v1914
    %v1918 = vmul.f32 %v526, %v1914
    %v1919 = vstv %s1913
    %v1920 = vmul.f32 %v564, %v1919
    %v1921 = vmul.f32 %v565, %v1919
    %v1922 = vmul.f32 %v566, %v1919
    %v1923 = vmul.f32 %v567, %v1919
    %v1924 = vadd.f32 %v1915, %v1920
    %v1925 = vadd.f32 %v1916, %v1921
    %v1926 = vadd.f32 %v1917, %v1922
    %v1927 = vadd.f32 %v1918, %v1923
    %v1932 = vsel %vm300, %v1926, %v1924
    %v1933 = vsel %vm300, %v1927, %v1925
    %1936 = vrot.lane.b32.xlu0 %v1932, 115
    %v1937 = vpop.permute.xlu0 %1936
    %1938 = vrot.lane.b32.xlu0 %v1933, 115
    %v1939 = vpop.permute.xlu0 %1938
    %vm1940 = vcmp.lt.s32.totalorder %v217, 115
    %v1941 = vsel %vm1940, %v1937, %v1939
    %v1942 = vsel %vm1940, %v1939, %v1937
    %s1943 = scalar_lea.vmem %s5, 112
    %v1944 = vld [vmem:[%s1943] sm:$0xf]
    %v1947 = vunpack.c.l.s4 1983009808
    %v1948 = vunpack.c.0.s8 %v1947
    %v1949 = vlaneseq
    %v1950 = vshrl.u32 %v1949, 7
    %v1951 = vsub.s32 %v1948, %v1950
    %v1952 = vrot.slane %v1944, %v1951
    %v1953 = vcombine.high %v1952, %v1952
    %v1956 = vmul.f32 %v1941, %v1952
    %v1957 = vmul.f32 %v1942, %v1953
    %v1958 = vadd.f32 %v1910, %v1956
    %v1959 = vadd.f32 %v1911, %v1957
    %s1960 = sld [smem:[#allocation2 + $0x1d]]
    %s1961 = sld [smem:[#allocation2 + $0x4e]]
    %v1962 = vstv %s1960
    %v1963 = vmul.f32 %v499, %v1962
    %v1964 = vmul.f32 %v508, %v1962
    %v1965 = vmul.f32 %v517, %v1962
    %v1966 = vmul.f32 %v526, %v1962
    %v1967 = vstv %s1961
    %v1968 = vmul.f32 %v564, %v1967
    %v1969 = vmul.f32 %v565, %v1967
    %v1970 = vmul.f32 %v566, %v1967
    %v1971 = vmul.f32 %v567, %v1967
    %v1972 = vadd.f32 %v1963, %v1968
    %v1973 = vadd.f32 %v1964, %v1969
    %v1974 = vadd.f32 %v1965, %v1970
    %v1975 = vadd.f32 %v1966, %v1971
    %v1980 = vsel %vm300, %v1974, %v1972
    %v1981 = vsel %vm300, %v1975, %v1973
    %1984 = vrot.lane.b32.xlu0 %v1980, 114
    %v1985 = vpop.permute.xlu0 %1984
    %1986 = vrot.lane.b32.xlu0 %v1981, 114
    %v1987 = vpop.permute.xlu0 %1986
    %vm1988 = vcmp.lt.s32.totalorder %v217, 114
    %v1989 = vsel %vm1988, %v1985, %v1987
    %v1990 = vsel %vm1988, %v1987, %v1985
    %s1991 = scalar_lea.vmem %s5, 116
    %v1992 = vld [vmem:[%s1991] sm:$0xf]
    %v1995 = vunpack.c.l.s4 1983009808
    %v1996 = vunpack.c.0.s8 %v1995
    %v1997 = vlaneseq
    %v1998 = vshrl.u32 %v1997, 7
    %v1999 = vsub.s32 %v1996, %v1998
    %v2000 = vrot.slane %v1992, %v1999
    %v2001 = vcombine.high %v2000, %v2000
    %v2004 = vmul.f32 %v1989, %v2000
    %v2005 = vmul.f32 %v1990, %v2001
    %v2006 = vadd.f32 %v1958, %v2004
    %v2007 = vadd.f32 %v1959, %v2005
    %s2008 = sld [smem:[#allocation2 + $0x1e]]
    %s2009 = sld [smem:[#allocation2 + $0x4f]]
    %v2010 = vstv %s2008
    %v2011 = vmul.f32 %v499, %v2010
    %v2012 = vmul.f32 %v508, %v2010
    %v2013 = vmul.f32 %v517, %v2010
    %v2014 = vmul.f32 %v526, %v2010
    %v2015 = vstv %s2009
    %v2016 = vmul.f32 %v564, %v2015
    %v2017 = vmul.f32 %v565, %v2015
    %v2018 = vmul.f32 %v566, %v2015
    %v2019 = vmul.f32 %v567, %v2015
    %v2020 = vadd.f32 %v2011, %v2016
    %v2021 = vadd.f32 %v2012, %v2017
    %v2022 = vadd.f32 %v2013, %v2018
    %v2023 = vadd.f32 %v2014, %v2019
    %v2028 = vsel %vm300, %v2022, %v2020
    %v2029 = vsel %vm300, %v2023, %v2021
    %2032 = vrot.lane.b32.xlu0 %v2028, 113
    %v2033 = vpop.permute.xlu0 %2032
    %2034 = vrot.lane.b32.xlu0 %v2029, 113
    %v2035 = vpop.permute.xlu0 %2034
    %vm2036 = vcmp.lt.s32.totalorder %v217, 113
    %v2037 = vsel %vm2036, %v2033, %v2035
    %v2038 = vsel %vm2036, %v2035, %v2033
    %s2039 = scalar_lea.vmem %s5, 120
    %v2040 = vld [vmem:[%s2039] sm:$0xf]
    %v2043 = vunpack.c.l.s4 1983009808
    %v2044 = vunpack.c.0.s8 %v2043
    %v2045 = vlaneseq
    %v2046 = vshrl.u32 %v2045, 7
    %v2047 = vsub.s32 %v2044, %v2046
    %v2048 = vrot.slane %v2040, %v2047
    %v2049 = vcombine.high %v2048, %v2048
    %v2052 = vmul.f32 %v2037, %v2048
    %v2053 = vmul.f32 %v2038, %v2049
    %v2054 = vadd.f32 %v2006, %v2052
    %v2055 = vadd.f32 %v2007, %v2053
    %s2056 = sld [smem:[#allocation2 + $0x1f]]
    %s2057 = sld [smem:[#allocation2 + $0x50]]
    %v2058 = vstv %s2056
    %v2059 = vmul.f32 %v499, %v2058
    %v2060 = vmul.f32 %v508, %v2058
    %v2061 = vmul.f32 %v517, %v2058
    %v2062 = vmul.f32 %v526, %v2058
    %v2063 = vstv %s2057
    %v2064 = vmul.f32 %v564, %v2063
    %v2065 = vmul.f32 %v565, %v2063
    %v2066 = vmul.f32 %v566, %v2063
    %v2067 = vmul.f32 %v567, %v2063
    %v2068 = vadd.f32 %v2059, %v2064
    %v2069 = vadd.f32 %v2060, %v2065
    %v2070 = vadd.f32 %v2061, %v2066
    %v2071 = vadd.f32 %v2062, %v2067
    %v2076 = vsel %vm300, %v2070, %v2068
    %v2077 = vsel %vm300, %v2071, %v2069
    %2080 = vrot.lane.b32.xlu0 %v2076, 112
    %v2081 = vpop.permute.xlu0 %2080
    %2082 = vrot.lane.b32.xlu0 %v2077, 112
    %v2083 = vpop.permute.xlu0 %2082
    %vm2084 = vcmp.lt.s32.totalorder %v217, 112
    %v2085 = vsel %vm2084, %v2081, %v2083
    %v2086 = vsel %vm2084, %v2083, %v2081
    %s2087 = scalar_lea.vmem %s5, 124
    %v2088 = vld [vmem:[%s2087] sm:$0xf]
    %v2091 = vunpack.c.l.s4 1983009808
    %v2092 = vunpack.c.0.s8 %v2091
    %v2093 = vlaneseq
    %v2094 = vshrl.u32 %v2093, 7
    %v2095 = vsub.s32 %v2092, %v2094
    %v2096 = vrot.slane %v2088, %v2095
    %v2097 = vcombine.high %v2096, %v2096
    %v2100 = vmul.f32 %v2085, %v2096
    %v2101 = vmul.f32 %v2086, %v2097
    %v2102 = vadd.f32 %v2054, %v2100
    %v2103 = vadd.f32 %v2055, %v2101
    %s2104 = sld [smem:[#allocation2 + $0x20]]
    %s2105 = sld [smem:[#allocation2 + $0x51]]
    %v2106 = vstv %s2104
    %v2107 = vmul.f32 %v499, %v2106
    %v2108 = vmul.f32 %v508, %v2106
    %v2109 = vmul.f32 %v517, %v2106
    %v2110 = vmul.f32 %v526, %v2106
    %v2111 = vstv %s2105
    %v2112 = vmul.f32 %v564, %v2111
    %v2113 = vmul.f32 %v565, %v2111
    %v2114 = vmul.f32 %v566, %v2111
    %v2115 = vmul.f32 %v567, %v2111
    %v2116 = vadd.f32 %v2107, %v2112
    %v2117 = vadd.f32 %v2108, %v2113
    %v2118 = vadd.f32 %v2109, %v2114
    %v2119 = vadd.f32 %v2110, %v2115
    %v2124 = vsel %vm300, %v2118, %v2116
    %v2125 = vsel %vm300, %v2119, %v2117
    %2128 = vrot.lane.b32.xlu0 %v2124, 111
    %v2129 = vpop.permute.xlu0 %2128
    %2130 = vrot.lane.b32.xlu0 %v2125, 111
    %v2131 = vpop.permute.xlu0 %2130
    %vm2132 = vcmp.lt.s32.totalorder %v217, 111
    %v2133 = vsel %vm2132, %v2129, %v2131
    %v2134 = vsel %vm2132, %v2131, %v2129
    %s2135 = scalar_lea.vmem %s5, 128
    %v2136 = vld [vmem:[%s2135] sm:$0xf]
    %v2139 = vunpack.c.l.s4 1983009808
    %v2140 = vunpack.c.0.s8 %v2139
    %v2141 = vlaneseq
    %v2142 = vshrl.u32 %v2141, 7
    %v2143 = vsub.s32 %v2140, %v2142
    %v2144 = vrot.slane %v2136, %v2143
    %v2145 = vcombine.high %v2144, %v2144
    %v2148 = vmul.f32 %v2133, %v2144
    %v2149 = vmul.f32 %v2134, %v2145
    %v2150 = vadd.f32 %v2102, %v2148
    %v2151 = vadd.f32 %v2103, %v2149
    %s2152 = sld [smem:[#allocation2 + $0x21]]
    %s2153 = sld [smem:[#allocation2 + $0x52]]
    %v2154 = vstv %s2152
    %v2155 = vmul.f32 %v499, %v2154
    %v2156 = vmul.f32 %v508, %v2154
    %v2157 = vmul.f32 %v517, %v2154
    %v2158 = vmul.f32 %v526, %v2154
    %v2159 = vstv %s2153
    %v2160 = vmul.f32 %v564, %v2159
    %v2161 = vmul.f32 %v565, %v2159
    %v2162 = vmul.f32 %v566, %v2159
    %v2163 = vmul.f32 %v567, %v2159
    %v2164 = vadd.f32 %v2155, %v2160
    %v2165 = vadd.f32 %v2156, %v2161
    %v2166 = vadd.f32 %v2157, %v2162
    %v2167 = vadd.f32 %v2158, %v2163
    %v2172 = vsel %vm300, %v2166, %v2164
    %v2173 = vsel %vm300, %v2167, %v2165
    %2176 = vrot.lane.b32.xlu0 %v2172, 110
    %v2177 = vpop.permute.xlu0 %2176
    %2178 = vrot.lane.b32.xlu0 %v2173, 110
    %v2179 = vpop.permute.xlu0 %2178
    %vm2180 = vcmp.lt.s32.totalorder %v217, 110
    %v2181 = vsel %vm2180, %v2177, %v2179
    %v2182 = vsel %vm2180, %v2179, %v2177
    %s2183 = scalar_lea.vmem %s5, 132
    %v2184 = vld [vmem:[%s2183] sm:$0xf]
    %v2187 = vunpack.c.l.s4 1983009808
    %v2188 = vunpack.c.0.s8 %v2187
    %v2189 = vlaneseq
    %v2190 = vshrl.u32 %v2189, 7
    %v2191 = vsub.s32 %v2188, %v2190
    %v2192 = vrot.slane %v2184, %v2191
    %v2193 = vcombine.high %v2192, %v2192
    %v2196 = vmul.f32 %v2181, %v2192
    %v2197 = vmul.f32 %v2182, %v2193
    %v2198 = vadd.f32 %v2150, %v2196
    %v2199 = vadd.f32 %v2151, %v2197
    %s2200 = sld [smem:[#allocation2 + $0x22]]
    %s2201 = sld [smem:[#allocation2 + $0x53]]
    %v2202 = vstv %s2200
    %v2203 = vmul.f32 %v499, %v2202
    %v2204 = vmul.f32 %v508, %v2202
    %v2205 = vmul.f32 %v517, %v2202
    %v2206 = vmul.f32 %v526, %v2202
    %v2207 = vstv %s2201
    %v2208 = vmul.f32 %v564, %v2207
    %v2209 = vmul.f32 %v565, %v2207
    %v2210 = vmul.f32 %v566, %v2207
    %v2211 = vmul.f32 %v567, %v2207
    %v2212 = vadd.f32 %v2203, %v2208
    %v2213 = vadd.f32 %v2204, %v2209
    %v2214 = vadd.f32 %v2205, %v2210
    %v2215 = vadd.f32 %v2206, %v2211
    %v2220 = vsel %vm300, %v2214, %v2212
    %v2221 = vsel %vm300, %v2215, %v2213
    %2224 = vrot.lane.b32.xlu0 %v2220, 109
    %v2225 = vpop.permute.xlu0 %2224
    %2226 = vrot.lane.b32.xlu0 %v2221, 109
    %v2227 = vpop.permute.xlu0 %2226
    %vm2228 = vcmp.lt.s32.totalorder %v217, 109
    %v2229 = vsel %vm2228, %v2225, %v2227
    %v2230 = vsel %vm2228, %v2227, %v2225
    %s2231 = scalar_lea.vmem %s5, 136
    %v2232 = vld [vmem:[%s2231] sm:$0xf]
    %v2235 = vunpack.c.l.s4 1983009808
    %v2236 = vunpack.c.0.s8 %v2235
    %v2237 = vlaneseq
    %v2238 = vshrl.u32 %v2237, 7
    %v2239 = vsub.s32 %v2236, %v2238
    %v2240 = vrot.slane %v2232, %v2239
    %v2241 = vcombine.high %v2240, %v2240
    %v2244 = vmul.f32 %v2229, %v2240
    %v2245 = vmul.f32 %v2230, %v2241
    %v2246 = vadd.f32 %v2198, %v2244
    %v2247 = vadd.f32 %v2199, %v2245
    %s2248 = sld [smem:[#allocation2 + $0x23]]
    %s2249 = sld [smem:[#allocation2 + $0x54]]
    %v2250 = vstv %s2248
    %v2251 = vmul.f32 %v499, %v2250
    %v2252 = vmul.f32 %v508, %v2250
    %v2253 = vmul.f32 %v517, %v2250
    %v2254 = vmul.f32 %v526, %v2250
    %v2255 = vstv %s2249
    %v2256 = vmul.f32 %v564, %v2255
    %v2257 = vmul.f32 %v565, %v2255
    %v2258 = vmul.f32 %v566, %v2255
    %v2259 = vmul.f32 %v567, %v2255
    %v2260 = vadd.f32 %v2251, %v2256
    %v2261 = vadd.f32 %v2252, %v2257
    %v2262 = vadd.f32 %v2253, %v2258
    %v2263 = vadd.f32 %v2254, %v2259
    %v2268 = vsel %vm300, %v2262, %v2260
    %v2269 = vsel %vm300, %v2263, %v2261
    %2272 = vrot.lane.b32.xlu0 %v2268, 99
    %v2273 = vpop.permute.xlu0 %2272
    %2274 = vrot.lane.b32.xlu0 %v2269, 99
    %v2275 = vpop.permute.xlu0 %2274
    %vm2276 = vcmp.lt.s32.totalorder %v217, 99
    %v2277 = vsel %vm2276, %v2273, %v2275
    %v2278 = vsel %vm2276, %v2275, %v2273
    %s2279 = scalar_lea.vmem %s5, 140
    %v2280 = vld [vmem:[%s2279] sm:$0xf]
    %v2283 = vunpack.c.l.s4 1983009808
    %v2284 = vunpack.c.0.s8 %v2283
    %v2285 = vlaneseq
    %v2286 = vshrl.u32 %v2285, 7
    %v2287 = vsub.s32 %v2284, %v2286
    %v2288 = vrot.slane %v2280, %v2287
    %v2289 = vcombine.high %v2288, %v2288
    %v2292 = vmul.f32 %v2277, %v2288
    %v2293 = vmul.f32 %v2278, %v2289
    %v2294 = vadd.f32 %v2246, %v2292
    %v2295 = vadd.f32 %v2247, %v2293
    %s2296 = sld [smem:[#allocation2 + $0x24]]
    %s2297 = sld [smem:[#allocation2 + $0x55]]
    %v2298 = vstv %s2296
    %v2299 = vmul.f32 %v499, %v2298
    %v2300 = vmul.f32 %v508, %v2298
    %v2301 = vmul.f32 %v517, %v2298
    %v2302 = vmul.f32 %v526, %v2298
    %v2303 = vstv %s2297
    %v2304 = vmul.f32 %v564, %v2303
    %v2305 = vmul.f32 %v565, %v2303
    %v2306 = vmul.f32 %v566, %v2303
    %v2307 = vmul.f32 %v567, %v2303
    %v2308 = vadd.f32 %v2299, %v2304
    %v2309 = vadd.f32 %v2300, %v2305
    %v2310 = vadd.f32 %v2301, %v2306
    %v2311 = vadd.f32 %v2302, %v2307
    %v2316 = vsel %vm300, %v2310, %v2308
    %v2317 = vsel %vm300, %v2311, %v2309
    %2320 = vrot.lane.b32.xlu0 %v2316, 98
    %v2321 = vpop.permute.xlu0 %2320
    %2322 = vrot.lane.b32.xlu0 %v2317, 98
    %v2323 = vpop.permute.xlu0 %2322
    %vm2324 = vcmp.lt.s32.totalorder %v217, 98
    %v2325 = vsel %vm2324, %v2321, %v2323
    %v2326 = vsel %vm2324, %v2323, %v2321
    %s2327 = scalar_lea.vmem %s5, 144
    %v2328 = vld [vmem:[%s2327] sm:$0xf]
    %v2331 = vunpack.c.l.s4 1983009808
    %v2332 = vunpack.c.0.s8 %v2331
    %v2333 = vlaneseq
    %v2334 = vshrl.u32 %v2333, 7
    %v2335 = vsub.s32 %v2332, %v2334
    %v2336 = vrot.slane %v2328, %v2335
    %v2337 = vcombine.high %v2336, %v2336
    %v2340 = vmul.f32 %v2325, %v2336
    %v2341 = vmul.f32 %v2326, %v2337
    %v2342 = vadd.f32 %v2294, %v2340
    %v2343 = vadd.f32 %v2295, %v2341
    %s2344 = sld [smem:[#allocation2 + $0x25]]
    %s2345 = sld [smem:[#allocation2 + $0x56]]
    %v2346 = vstv %s2344
    %v2347 = vmul.f32 %v499, %v2346
    %v2348 = vmul.f32 %v508, %v2346
    %v2349 = vmul.f32 %v517, %v2346
    %v2350 = vmul.f32 %v526, %v2346
    %v2351 = vstv %s2345
    %v2352 = vmul.f32 %v564, %v2351
    %v2353 = vmul.f32 %v565, %v2351
    %v2354 = vmul.f32 %v566, %v2351
    %v2355 = vmul.f32 %v567, %v2351
    %v2356 = vadd.f32 %v2347, %v2352
    %v2357 = vadd.f32 %v2348, %v2353
    %v2358 = vadd.f32 %v2349, %v2354
    %v2359 = vadd.f32 %v2350, %v2355
    %v2364 = vsel %vm300, %v2358, %v2356
    %v2365 = vsel %vm300, %v2359, %v2357
    %2368 = vrot.lane.b32.xlu0 %v2364, 97
    %v2369 = vpop.permute.xlu0 %2368
    %2370 = vrot.lane.b32.xlu0 %v2365, 97
    %v2371 = vpop.permute.xlu0 %2370
    %vm2372 = vcmp.lt.s32.totalorder %v217, 97
    %v2373 = vsel %vm2372, %v2369, %v2371
    %v2374 = vsel %vm2372, %v2371, %v2369
    %s2375 = scalar_lea.vmem %s5, 148
    %v2376 = vld [vmem:[%s2375] sm:$0xf]
    %v2379 = vunpack.c.l.s4 1983009808
    %v2380 = vunpack.c.0.s8 %v2379
    %v2381 = vlaneseq
    %v2382 = vshrl.u32 %v2381, 7
    %v2383 = vsub.s32 %v2380, %v2382
    %v2384 = vrot.slane %v2376, %v2383
    %v2385 = vcombine.high %v2384, %v2384
    %v2388 = vmul.f32 %v2373, %v2384
    %v2389 = vmul.f32 %v2374, %v2385
    %v2390 = vadd.f32 %v2342, %v2388
    %v2391 = vadd.f32 %v2343, %v2389
    %s2392 = sld [smem:[#allocation2 + $0x26]]
    %s2393 = sld [smem:[#allocation2 + $0x57]]
    %v2394 = vstv %s2392
    %v2395 = vmul.f32 %v499, %v2394
    %v2396 = vmul.f32 %v508, %v2394
    %v2397 = vmul.f32 %v517, %v2394
    %v2398 = vmul.f32 %v526, %v2394
    %v2399 = vstv %s2393
    %v2400 = vmul.f32 %v564, %v2399
    %v2401 = vmul.f32 %v565, %v2399
    %v2402 = vmul.f32 %v566, %v2399
    %v2403 = vmul.f32 %v567, %v2399
    %v2404 = vadd.f32 %v2395, %v2400
    %v2405 = vadd.f32 %v2396, %v2401
    %v2406 = vadd.f32 %v2397, %v2402
    %v2407 = vadd.f32 %v2398, %v2403
    %v2412 = vsel %vm300, %v2406, %v2404
    %v2413 = vsel %vm300, %v2407, %v2405
    %2416 = vrot.lane.b32.xlu0 %v2412, 96
    %v2417 = vpop.permute.xlu0 %2416
    %2418 = vrot.lane.b32.xlu0 %v2413, 96
    %v2419 = vpop.permute.xlu0 %2418
    %vm2420 = vcmp.lt.s32.totalorder %v217, 96
    %v2421 = vsel %vm2420, %v2417, %v2419
    %v2422 = vsel %vm2420, %v2419, %v2417
    %s2423 = scalar_lea.vmem %s5, 152
    %v2424 = vld [vmem:[%s2423] sm:$0xf]
    %v2427 = vunpack.c.l.s4 1983009808
    %v2428 = vunpack.c.0.s8 %v2427
    %v2429 = vlaneseq
    %v2430 = vshrl.u32 %v2429, 7
    %v2431 = vsub.s32 %v2428, %v2430
    %v2432 = vrot.slane %v2424, %v2431
    %v2433 = vcombine.high %v2432, %v2432
    %v2436 = vmul.f32 %v2421, %v2432
    %v2437 = vmul.f32 %v2422, %v2433
    %v2438 = vadd.f32 %v2390, %v2436
    %v2439 = vadd.f32 %v2391, %v2437
    %s2440 = sld [smem:[#allocation2 + $0x27]]
    %s2441 = sld [smem:[#allocation2 + $0x58]]
    %v2442 = vstv %s2440
    %v2443 = vmul.f32 %v499, %v2442
    %v2444 = vmul.f32 %v508, %v2442
    %v2445 = vmul.f32 %v517, %v2442
    %v2446 = vmul.f32 %v526, %v2442
    %v2447 = vstv %s2441
    %v2448 = vmul.f32 %v564, %v2447
    %v2449 = vmul.f32 %v565, %v2447
    %v2450 = vmul.f32 %v566, %v2447
    %v2451 = vmul.f32 %v567, %v2447
    %v2452 = vadd.f32 %v2443, %v2448
    %v2453 = vadd.f32 %v2444, %v2449
    %v2454 = vadd.f32 %v2445, %v2450
    %v2455 = vadd.f32 %v2446, %v2451
    %v2460 = vsel %vm300, %v2454, %v2452
    %v2461 = vsel %vm300, %v2455, %v2453
    %2464 = vrot.lane.b32.xlu0 %v2460, 95
    %v2465 = vpop.permute.xlu0 %2464
    %2466 = vrot.lane.b32.xlu0 %v2461, 95
    %v2467 = vpop.permute.xlu0 %2466
    %vm2468 = vcmp.lt.s32.totalorder %v217, 95
    %v2469 = vsel %vm2468, %v2465, %v2467
    %v2470 = vsel %vm2468, %v2467, %v2465
    %s2471 = scalar_lea.vmem %s5, 156
    %v2472 = vld [vmem:[%s2471] sm:$0xf]
    %v2475 = vunpack.c.l.s4 1983009808
    %v2476 = vunpack.c.0.s8 %v2475
    %v2477 = vlaneseq
    %v2478 = vshrl.u32 %v2477, 7
    %v2479 = vsub.s32 %v2476, %v2478
    %v2480 = vrot.slane %v2472, %v2479
    %v2481 = vcombine.high %v2480, %v2480
    %v2484 = vmul.f32 %v2469, %v2480
    %v2485 = vmul.f32 %v2470, %v2481
    %v2486 = vadd.f32 %v2438, %v2484
    %v2487 = vadd.f32 %v2439, %v2485
    %s2488 = sld [smem:[#allocation2 + $0x28]]
    %s2489 = sld [smem:[#allocation2 + $0x59]]
    %v2490 = vstv %s2488
    %v2491 = vmul.f32 %v499, %v2490
    %v2492 = vmul.f32 %v508, %v2490
    %v2493 = vmul.f32 %v517, %v2490
    %v2494 = vmul.f32 %v526, %v2490
    %v2495 = vstv %s2489
    %v2496 = vmul.f32 %v564, %v2495
    %v2497 = vmul.f32 %v565, %v2495
    %v2498 = vmul.f32 %v566, %v2495
    %v2499 = vmul.f32 %v567, %v2495
    %v2500 = vadd.f32 %v2491, %v2496
    %v2501 = vadd.f32 %v2492, %v2497
    %v2502 = vadd.f32 %v2493, %v2498
    %v2503 = vadd.f32 %v2494, %v2499
    %v2508 = vsel %vm300, %v2502, %v2500
    %v2509 = vsel %vm300, %v2503, %v2501
    %2512 = vrot.lane.b32.xlu0 %v2508, 94
    %v2513 = vpop.permute.xlu0 %2512
    %2514 = vrot.lane.b32.xlu0 %v2509, 94
    %v2515 = vpop.permute.xlu0 %2514
    %vm2516 = vcmp.lt.s32.totalorder %v217, 94
    %v2517 = vsel %vm2516, %v2513, %v2515
    %v2518 = vsel %vm2516, %v2515, %v2513
    %s2519 = scalar_lea.vmem %s5, 160
    %v2520 = vld [vmem:[%s2519] sm:$0xf]
    %v2523 = vunpack.c.l.s4 1983009808
    %v2524 = vunpack.c.0.s8 %v2523
    %v2525 = vlaneseq
    %v2526 = vshrl.u32 %v2525, 7
    %v2527 = vsub.s32 %v2524, %v2526
    %v2528 = vrot.slane %v2520, %v2527
    %v2529 = vcombine.high %v2528, %v2528
    %v2532 = vmul.f32 %v2517, %v2528
    %v2533 = vmul.f32 %v2518, %v2529
    %v2534 = vadd.f32 %v2486, %v2532
    %v2535 = vadd.f32 %v2487, %v2533
    %s2536 = sld [smem:[#allocation2 + $0x29]]
    %s2537 = sld [smem:[#allocation2 + $0x5a]]
    %v2538 = vstv %s2536
    %v2539 = vmul.f32 %v499, %v2538
    %v2540 = vmul.f32 %v508, %v2538
    %v2541 = vmul.f32 %v517, %v2538
    %v2542 = vmul.f32 %v526, %v2538
    %v2543 = vstv %s2537
    %v2544 = vmul.f32 %v564, %v2543
    %v2545 = vmul.f32 %v565, %v2543
    %v2546 = vmul.f32 %v566, %v2543
    %v2547 = vmul.f32 %v567, %v2543
    %v2548 = vadd.f32 %v2539, %v2544
    %v2549 = vadd.f32 %v2540, %v2545
    %v2550 = vadd.f32 %v2541, %v2546
    %v2551 = vadd.f32 %v2542, %v2547
    %v2556 = vsel %vm300, %v2550, %v2548
    %v2557 = vsel %vm300, %v2551, %v2549
    %2560 = vrot.lane.b32.xlu0 %v2556, 93
    %v2561 = vpop.permute.xlu0 %2560
    %2562 = vrot.lane.b32.xlu0 %v2557, 93
    %v2563 = vpop.permute.xlu0 %2562
    %vm2564 = vcmp.lt.s32.totalorder %v217, 93
    %v2565 = vsel %vm2564, %v2561, %v2563
    %v2566 = vsel %vm2564, %v2563, %v2561
    %s2567 = scalar_lea.vmem %s5, 164
    %v2568 = vld [vmem:[%s2567] sm:$0xf]
    %v2571 = vunpack.c.l.s4 1983009808
    %v2572 = vunpack.c.0.s8 %v2571
    %v2573 = vlaneseq
    %v2574 = vshrl.u32 %v2573, 7
    %v2575 = vsub.s32 %v2572, %v2574
    %v2576 = vrot.slane %v2568, %v2575
    %v2577 = vcombine.high %v2576, %v2576
    %v2580 = vmul.f32 %v2565, %v2576
    %v2581 = vmul.f32 %v2566, %v2577
    %v2582 = vadd.f32 %v2534, %v2580
    %v2583 = vadd.f32 %v2535, %v2581
    %s2584 = sld [smem:[#allocation2 + $0x2a]]
    %s2585 = sld [smem:[#allocation2 + $0x5b]]
    %v2586 = vstv %s2584
    %v2587 = vmul.f32 %v499, %v2586
    %v2588 = vmul.f32 %v508, %v2586
    %v2589 = vmul.f32 %v517, %v2586
    %v2590 = vmul.f32 %v526, %v2586
    %v2591 = vstv %s2585
    %v2592 = vmul.f32 %v564, %v2591
    %v2593 = vmul.f32 %v565, %v2591
    %v2594 = vmul.f32 %v566, %v2591
    %v2595 = vmul.f32 %v567, %v2591
    %v2596 = vadd.f32 %v2587, %v2592
    %v2597 = vadd.f32 %v2588, %v2593
    %v2598 = vadd.f32 %v2589, %v2594
    %v2599 = vadd.f32 %v2590, %v2595
    %v2604 = vsel %vm300, %v2598, %v2596
    %v2605 = vsel %vm300, %v2599, %v2597
    %2608 = vrot.lane.b32.xlu0 %v2604, 83
    %v2609 = vpop.permute.xlu0 %2608
    %2610 = vrot.lane.b32.xlu0 %v2605, 83
    %v2611 = vpop.permute.xlu0 %2610
    %vm2612 = vcmp.lt.s32.totalorder %v217, 83
    %v2613 = vsel %vm2612, %v2609, %v2611
    %v2614 = vsel %vm2612, %v2611, %v2609
    %s2615 = scalar_lea.vmem %s5, 168
    %v2616 = vld [vmem:[%s2615] sm:$0xf]
    %v2619 = vunpack.c.l.s4 1983009808
    %v2620 = vunpack.c.0.s8 %v2619
    %v2621 = vlaneseq
    %v2622 = vshrl.u32 %v2621, 7
    %v2623 = vsub.s32 %v2620, %v2622
    %v2624 = vrot.slane %v2616, %v2623
    %v2625 = vcombine.high %v2624, %v2624
    %v2628 = vmul.f32 %v2613, %v2624
    %v2629 = vmul.f32 %v2614, %v2625
    %v2630 = vadd.f32 %v2582, %v2628
    %v2631 = vadd.f32 %v2583, %v2629
    %s2632 = sld [smem:[#allocation2 + $0x2b]]
    %s2633 = sld [smem:[#allocation2 + $0x5c]]
    %v2634 = vstv %s2632
    %v2635 = vmul.f32 %v499, %v2634
    %v2636 = vmul.f32 %v508, %v2634
    %v2637 = vmul.f32 %v517, %v2634
    %v2638 = vmul.f32 %v526, %v2634
    %v2639 = vstv %s2633
    %v2640 = vmul.f32 %v564, %v2639
    %v2641 = vmul.f32 %v565, %v2639
    %v2642 = vmul.f32 %v566, %v2639
    %v2643 = vmul.f32 %v567, %v2639
    %v2644 = vadd.f32 %v2635, %v2640
    %v2645 = vadd.f32 %v2636, %v2641
    %v2646 = vadd.f32 %v2637, %v2642
    %v2647 = vadd.f32 %v2638, %v2643
    %v2652 = vsel %vm300, %v2646, %v2644
    %v2653 = vsel %vm300, %v2647, %v2645
    %2656 = vrot.lane.b32.xlu0 %v2652, 82
    %v2657 = vpop.permute.xlu0 %2656
    %2658 = vrot.lane.b32.xlu0 %v2653, 82
    %v2659 = vpop.permute.xlu0 %2658
    %vm2660 = vcmp.lt.s32.totalorder %v217, 82
    %v2661 = vsel %vm2660, %v2657, %v2659
    %v2662 = vsel %vm2660, %v2659, %v2657
    %s2663 = scalar_lea.vmem %s5, 172
    %v2664 = vld [vmem:[%s2663] sm:$0xf]
    %v2667 = vunpack.c.l.s4 1983009808
    %v2668 = vunpack.c.0.s8 %v2667
    %v2669 = vlaneseq
    %v2670 = vshrl.u32 %v2669, 7
    %v2671 = vsub.s32 %v2668, %v2670
    %v2672 = vrot.slane %v2664, %v2671
    %v2673 = vcombine.high %v2672, %v2672
    %v2676 = vmul.f32 %v2661, %v2672
    %v2677 = vmul.f32 %v2662, %v2673
    %v2678 = vadd.f32 %v2630, %v2676
    %v2679 = vadd.f32 %v2631, %v2677
    %s2680 = sld [smem:[#allocation2 + $0x2c]]
    %s2681 = sld [smem:[#allocation2 + $0x5d]]
    %v2682 = vstv %s2680
    %v2683 = vmul.f32 %v499, %v2682
    %v2684 = vmul.f32 %v508, %v2682
    %v2685 = vmul.f32 %v517, %v2682
    %v2686 = vmul.f32 %v526, %v2682
    %v2687 = vstv %s2681
    %v2688 = vmul.f32 %v564, %v2687
    %v2689 = vmul.f32 %v565, %v2687
    %v2690 = vmul.f32 %v566, %v2687
    %v2691 = vmul.f32 %v567, %v2687
    %v2692 = vadd.f32 %v2683, %v2688
    %v2693 = vadd.f32 %v2684, %v2689
    %v2694 = vadd.f32 %v2685, %v2690
    %v2695 = vadd.f32 %v2686, %v2691
    %v2700 = vsel %vm300, %v2694, %v2692
    %v2701 = vsel %vm300, %v2695, %v2693
    %2704 = vrot.lane.b32.xlu0 %v2700, 81
    %v2705 = vpop.permute.xlu0 %2704
    %2706 = vrot.lane.b32.xlu0 %v2701, 81
    %v2707 = vpop.permute.xlu0 %2706
    %vm2708 = vcmp.lt.s32.totalorder %v217, 81
    %v2709 = vsel %vm2708, %v2705, %v2707
    %v2710 = vsel %vm2708, %v2707, %v2705
    %s2711 = scalar_lea.vmem %s5, 176
    %v2712 = vld [vmem:[%s2711] sm:$0xf]
    %v2715 = vunpack.c.l.s4 1983009808
    %v2716 = vunpack.c.0.s8 %v2715
    %v2717 = vlaneseq
    %v2718 = vshrl.u32 %v2717, 7
    %v2719 = vsub.s32 %v2716, %v2718
    %v2720 = vrot.slane %v2712, %v2719
    %v2721 = vcombine.high %v2720, %v2720
    %v2724 = vmul.f32 %v2709, %v2720
    %v2725 = vmul.f32 %v2710, %v2721
    %v2726 = vadd.f32 %v2678, %v2724
    %v2727 = vadd.f32 %v2679, %v2725
    %s2728 = sld [smem:[#allocation2 + $0x2d]]
    %s2729 = sld [smem:[#allocation2 + $0x5e]]
    %v2730 = vstv %s2728
    %v2731 = vmul.f32 %v499, %v2730
    %v2732 = vmul.f32 %v508, %v2730
    %v2733 = vmul.f32 %v517, %v2730
    %v2734 = vmul.f32 %v526, %v2730
    %v2735 = vstv %s2729
    %v2736 = vmul.f32 %v564, %v2735
    %v2737 = vmul.f32 %v565, %v2735
    %v2738 = vmul.f32 %v566, %v2735
    %v2739 = vmul.f32 %v567, %v2735
    %v2740 = vadd.f32 %v2731, %v2736
    %v2741 = vadd.f32 %v2732, %v2737
    %v2742 = vadd.f32 %v2733, %v2738
    %v2743 = vadd.f32 %v2734, %v2739
    %v2748 = vsel %vm300, %v2742, %v2740
    %v2749 = vsel %vm300, %v2743, %v2741
    %2752 = vrot.lane.b32.xlu0 %v2748, 80
    %v2753 = vpop.permute.xlu0 %2752
    %2754 = vrot.lane.b32.xlu0 %v2749, 80
    %v2755 = vpop.permute.xlu0 %2754
    %vm2756 = vcmp.lt.s32.totalorder %v217, 80
    %v2757 = vsel %vm2756, %v2753, %v2755
    %v2758 = vsel %vm2756, %v2755, %v2753
    %s2759 = scalar_lea.vmem %s5, 180
    %v2760 = vld [vmem:[%s2759] sm:$0xf]
    %v2763 = vunpack.c.l.s4 1983009808
    %v2764 = vunpack.c.0.s8 %v2763
    %v2765 = vlaneseq
    %v2766 = vshrl.u32 %v2765, 7
    %v2767 = vsub.s32 %v2764, %v2766
    %v2768 = vrot.slane %v2760, %v2767
    %v2769 = vcombine.high %v2768, %v2768
    %v2772 = vmul.f32 %v2757, %v2768
    %v2773 = vmul.f32 %v2758, %v2769
    %v2774 = vadd.f32 %v2726, %v2772
    %v2775 = vadd.f32 %v2727, %v2773
    %s2776 = sld [smem:[#allocation2 + $0x2e]]
    %s2777 = sld [smem:[#allocation2 + $0x5f]]
    %v2778 = vstv %s2776
    %v2779 = vmul.f32 %v499, %v2778
    %v2780 = vmul.f32 %v508, %v2778
    %v2781 = vmul.f32 %v517, %v2778
    %v2782 = vmul.f32 %v526, %v2778
    %v2783 = vstv %s2777
    %v2784 = vmul.f32 %v564, %v2783
    %v2785 = vmul.f32 %v565, %v2783
    %v2786 = vmul.f32 %v566, %v2783
    %v2787 = vmul.f32 %v567, %v2783
    %v2788 = vadd.f32 %v2779, %v2784
    %v2789 = vadd.f32 %v2780, %v2785
    %v2790 = vadd.f32 %v2781, %v2786
    %v2791 = vadd.f32 %v2782, %v2787
    %v2796 = vsel %vm300, %v2790, %v2788
    %v2797 = vsel %vm300, %v2791, %v2789
    %2800 = vrot.lane.b32.xlu0 %v2796, 79
    %v2801 = vpop.permute.xlu0 %2800
    %2802 = vrot.lane.b32.xlu0 %v2797, 79
    %v2803 = vpop.permute.xlu0 %2802
    %vm2804 = vcmp.lt.s32.totalorder %v217, 79
    %v2805 = vsel %vm2804, %v2801, %v2803
    %v2806 = vsel %vm2804, %v2803, %v2801
    %s2807 = scalar_lea.vmem %s5, 184
    %v2808 = vld [vmem:[%s2807] sm:$0xf]
    %v2811 = vunpack.c.l.s4 1983009808
    %v2812 = vunpack.c.0.s8 %v2811
    %v2813 = vlaneseq
    %v2814 = vshrl.u32 %v2813, 7
    %v2815 = vsub.s32 %v2812, %v2814
    %v2816 = vrot.slane %v2808, %v2815
    %v2817 = vcombine.high %v2816, %v2816
    %v2820 = vmul.f32 %v2805, %v2816
    %v2821 = vmul.f32 %v2806, %v2817
    %v2822 = vadd.f32 %v2774, %v2820
    %v2823 = vadd.f32 %v2775, %v2821
    %s2824 = sld [smem:[#allocation2 + $0x2f]]
    %s2825 = sld [smem:[#allocation2 + $0x60]]
    %v2826 = vstv %s2824
    %v2827 = vmul.f32 %v499, %v2826
    %v2828 = vmul.f32 %v508, %v2826
    %v2829 = vmul.f32 %v517, %v2826
    %v2830 = vmul.f32 %v526, %v2826
    %v2831 = vstv %s2825
    %v2832 = vmul.f32 %v564, %v2831
    %v2833 = vmul.f32 %v565, %v2831
    %v2834 = vmul.f32 %v566, %v2831
    %v2835 = vmul.f32 %v567, %v2831
    %v2836 = vadd.f32 %v2827, %v2832
    %v2837 = vadd.f32 %v2828, %v2833
    %v2838 = vadd.f32 %v2829, %v2834
    %v2839 = vadd.f32 %v2830, %v2835
    %v2844 = vsel %vm300, %v2838, %v2836
    %v2845 = vsel %vm300, %v2839, %v2837
    %2848 = vrot.lane.b32.xlu0 %v2844, 78
    %v2849 = vpop.permute.xlu0 %2848
    %2850 = vrot.lane.b32.xlu0 %v2845, 78
    %v2851 = vpop.permute.xlu0 %2850
    %vm2852 = vcmp.lt.s32.totalorder %v217, 78
    %v2853 = vsel %vm2852, %v2849, %v2851
    %v2854 = vsel %vm2852, %v2851, %v2849
    %s2855 = scalar_lea.vmem %s5, 188
    %v2856 = vld [vmem:[%s2855] sm:$0xf]
    %v2859 = vunpack.c.l.s4 1983009808
    %v2860 = vunpack.c.0.s8 %v2859
    %v2861 = vlaneseq
    %v2862 = vshrl.u32 %v2861, 7
    %v2863 = vsub.s32 %v2860, %v2862
    %v2864 = vrot.slane %v2856, %v2863
    %v2865 = vcombine.high %v2864, %v2864
    %v2868 = vmul.f32 %v2853, %v2864
    %v2869 = vmul.f32 %v2854, %v2865
    %v2870 = vadd.f32 %v2822, %v2868
    %v2871 = vadd.f32 %v2823, %v2869
    %s2872 = sld [smem:[#allocation2 + $0x30]]
    %s2873 = sld [smem:[#allocation2 + $0x61]]
    %v2874 = vstv %s2872
    %v2875 = vmul.f32 %v499, %v2874
    %v2876 = vmul.f32 %v508, %v2874
    %v2877 = vmul.f32 %v517, %v2874
    %v2878 = vmul.f32 %v526, %v2874
    %v2879 = vstv %s2873
    %v2880 = vmul.f32 %v564, %v2879
    %v2881 = vmul.f32 %v565, %v2879
    %v2882 = vmul.f32 %v566, %v2879
    %v2883 = vmul.f32 %v567, %v2879
    %v2884 = vadd.f32 %v2875, %v2880
    %v2885 = vadd.f32 %v2876, %v2881
    %v2886 = vadd.f32 %v2877, %v2882
    %v2887 = vadd.f32 %v2878, %v2883
    %v2892 = vsel %vm300, %v2886, %v2884
    %v2893 = vsel %vm300, %v2887, %v2885
    %2896 = vrot.lane.b32.xlu0 %v2892, 77
    %v2897 = vpop.permute.xlu0 %2896
    %2898 = vrot.lane.b32.xlu0 %v2893, 77
    %v2899 = vpop.permute.xlu0 %2898
    %vm2900 = vcmp.lt.s32.totalorder %v217, 77
    %v2901 = vsel %vm2900, %v2897, %v2899
    %v2902 = vsel %vm2900, %v2899, %v2897
    %s2903 = scalar_lea.vmem %s5, 192
    %v2904 = vld [vmem:[%s2903] sm:$0xf]
    %v2907 = vunpack.c.l.s4 1983009808
    %v2908 = vunpack.c.0.s8 %v2907
    %v2909 = vlaneseq
    %v2910 = vshrl.u32 %v2909, 7
    %v2911 = vsub.s32 %v2908, %v2910
    %v2912 = vrot.slane %v2904, %v2911
    %v2913 = vcombine.high %v2912, %v2912
    %v2916 = vmul.f32 %v2901, %v2912
    %v2917 = vmul.f32 %v2902, %v2913
    %v2918 = vadd.f32 %v2870, %v2916
    %v2919 = vadd.f32 %v2871, %v2917
    %vm2920 = vcmask 1041408
    %v2921 = vsel %vm2920, %v2918, 0.0
    %v2922 = vsel %vm2920, %v2919, 0.0
    %v2923 = vadd.f32 %v2921, %v2922
    %2924 = vadd.xlane.f32.xlu0 %v2923
    %v2925 = vpop.xlane.xlu0 %2924
    %v2926 = vrot.slane %v2925, 4
    %v2927 = vadd.f32 %v2925, %v2926
    %v2928 = vrot.slane %v2927, 2
    %v2929 = vadd.f32 %v2927, %v2928
    %v2930 = vrot.slane %v2929, 1
    %v2931 = vadd.f32 %v2929, %v2930
    %s2932 = vtos %v2931
    %v2933 = vrcp.pop 512.0
    %s2934 = vtos %v2933
    %s2935 = smul.f32 %s2932, %s2934
    %v2936 = vstv %s2935
    %v2937 = vsub.f32 %v2918, %v2936
    %v2938 = vsub.f32 %v2919, %v2936
    %v2939 = vmul.f32 %v2937, %v2937
    %v2940 = vmul.f32 %v2938, %v2938
    %v2941 = vsel %vm2920, %v2939, 0.0
    %v2942 = vsel %vm2920, %v2940, 0.0
    %v2943 = vadd.f32 %v2941, %v2942
    %2944 = vadd.xlane.f32.xlu0 %v2943
    %v2945 = vpop.xlane.xlu0 %2944
    %v2946 = vrot.slane %v2945, 4
    %v2947 = vadd.f32 %v2945, %v2946
    %v2948 = vrot.slane %v2947, 2
    %v2949 = vadd.f32 %v2947, %v2948
    %v2950 = vrot.slane %v2949, 1
    %v2951 = vadd.f32 %v2949, %v2950
    %s2952 = vtos %v2951
    %v2953 = vrcp.pop 512.0
    %s2954 = vtos %v2953
    %s2955 = smul.f32 %s2952, %s2954
    %s2956 = sadd.f32 %s2955, 1e-05
    %v2957 = vstv %s2956
    %v2958 = vrsqrt.pop %v2957
    %s2959 = vtos %v2958
    %v2960 = vstv %s2959
    %v2961 = vmul.f32 %v2937, %v2960
    %v2962 = vmul.f32 %v2938, %v2960
    %v2963 = vsel %vm2920, %v2961, 0.0
    %v2964 = vsel %vm2920, %v2962, 0.0
    %v2965 = vadd.f32 %v2963, %v2964
    %2966 = vadd.xlane.f32.xlu0 %v2965
    %v2967 = vpop.xlane.xlu0 %2966
    %v2968 = vrot.slane %v2967, 4
    %v2969 = vadd.f32 %v2967, %v2968
    %v2970 = vrot.slane %v2969, 2
    %v2971 = vadd.f32 %v2969, %v2970
    %v2972 = vrot.slane %v2971, 1
    %v2973 = vadd.f32 %v2971, %v2972
    %s2974 = vtos %v2973
    %v2975 = vrcp.pop 512.0
    %s2976 = vtos %v2975
    %s2977 = smul.f32 %s2974, %s2976
    %v2978 = vstv %s2977
    %v2979 = vsub.f32 %v2961, %v2978
    %v2980 = vsub.f32 %v2962, %v2978
    %v2981 = vmul.f32 %v2979, %v2979
    %v2982 = vmul.f32 %v2980, %v2980
    %v2983 = vsel %vm2920, %v2981, 0.0
    %v2984 = vsel %vm2920, %v2982, 0.0
    %v2985 = vadd.f32 %v2983, %v2984
    %2986 = vadd.xlane.f32.xlu0 %v2985
    %v2987 = vpop.xlane.xlu0 %2986
    %v2988 = vrot.slane %v2987, 4
    %v2989 = vadd.f32 %v2987, %v2988
    %v2990 = vrot.slane %v2989, 2
    %v2991 = vadd.f32 %v2989, %v2990
    %v2992 = vrot.slane %v2991, 1
    %v2993 = vadd.f32 %v2991, %v2992
    %s2994 = vtos %v2993
    %s2995 = smul.f32 %s2994, 0.0019569471
    %s2996 = smul.f32 %s2995, 6.2831855
    %v2997 = vstv %s2996
    %v2998 = vrsqrt.pop %v2997
    %s2999 = vtos %v2998
    %v3000 = vsub.f32 0.0, %v2981
    %v3001 = vsub.f32 0.0, %v2982
    %v3002 = vstv %s2995
    %v3003 = vrcp.pop %v3002
    %s3004 = vtos %v3003
    %s3005 = smul.f32 0.5, %s3004
    %v3006 = vstv %s3005
    %v3007 = vmul.f32 %v3000, %v3006
    %v3008 = vmul.f32 %v3001, %v3006
    %v3009 = vmul.f32 %v3007, 1.442695
    %v3010 = vpow.pop %v3009
    %v3011 = vmul.f32 %v3008, 1.442695
    %v3012 = vpow.pop %v3011
    %v3013 = vstv %s2999
    %v3014 = vmul.f32 %v3010, %v3013
    %v3015 = vmul.f32 %v3012, %v3013
    %v3016 = vld [vmem:[%s7] sm:$0xff]
    %v3017 = vld [vmem:[%s7 + $0x8] sm:$0xff]
    %v3018 = vld [vmem:[%s7 + $0x10] sm:$0xff]
    %v3019 = vld [vmem:[%s7 + $0x18] sm:$0xff]
    %v3020 = vld [vmem:[%s7 + $0x20] sm:$0xff]
    %v3021 = vld [vmem:[%s7 + $0x28] sm:$0xff]
    %v3022 = vld [vmem:[%s7 + $0x30] sm:$0xff]
    %v3023 = vld [vmem:[%s7 + $0x38] sm:$0xff]
    %v3024 = vld [vmem:[%s7 + $0x40] sm:$0xff]
    %v3025 = vld [vmem:[%s7 + $0x48] sm:$0xff]
    %v3026 = vld [vmem:[%s7 + $0x50] sm:$0xff]
    %v3027 = vld [vmem:[%s7 + $0x58] sm:$0xff]
    %v3028 = vld [vmem:[%s7 + $0x60] sm:$0xff]
    %v3029 = vld [vmem:[%s7 + $0x68] sm:$0xff]
    %v3030 = vld [vmem:[%s7 + $0x70] sm:$0xff]
    %v3031 = vld [vmem:[%s7 + $0x78] sm:$0xff]
    %v3034 = vcombine.low %v3014, %v3015
    %v3036 = vunpack.c.l.s4 1966171168
    %v3037 = vunpack.c.0.s8 %v3036
    %v3038 = vlaneseq
    %v3039 = vshrl.u32 %v3038, 7
    %v3040 = vsub.s32 %v3037, %v3039
    %v3041 = vrot.slane %v3034, %v3040
    %v3042 = vcombine.high %v3041, %v3041
    %v3044 = vunpack.c.l.s4 1966171168
    %v3045 = vunpack.c.0.s8 %v3044
    %v3046 = vlaneseq
    %v3047 = vshrl.u32 %v3046, 7
    %v3048 = vsub.s32 %v3045, %v3047
    %v3049 = vrot.slane %v3041, %v3048
    %v3051 = vunpack.c.l.s4 1966171168
    %v3052 = vunpack.c.0.s8 %v3051
    %v3053 = vlaneseq
    %v3054 = vshrl.u32 %v3053, 7
    %v3055 = vsub.s32 %v3052, %v3054
    %v3056 = vrot.slane %v3042, %v3055
    %v3057 = vlaneseq
    %v3058 = vshrl.u32 %v3057, 7
    %v3059 = vsub.s32 0, %v3058
    %v3060 = vrot.slane %v3049, %v3059
    %v3061 = vlaneseq
    %v3062 = vshrl.u32 %v3061, 7
    %v3063 = vsub.s32 1, %v3062
    %v3064 = vrot.slane %v3049, %v3063
    %v3065 = vlaneseq
    %v3066 = vshrl.u32 %v3065, 7
    %v3067 = vsub.s32 0, %v3066
    %v3068 = vrot.slane %v3056, %v3067
    %v3069 = vlaneseq
    %v3070 = vshrl.u32 %v3069, 7
    %v3071 = vsub.s32 1, %v3070
    %v3072 = vrot.slane %v3056, %v3071
    %v3077 = vmul.f32 %v3016, %v3060
    %v3078 = vmul.f32 %v3017, %v3064
    %v3079 = vmul.f32 %v3018, %v3060
    %v3080 = vmul.f32 %v3019, %v3064
    %v3081 = vmul.f32 %v3020, %v3060
    %v3082 = vmul.f32 %v3021, %v3064
    %v3083 = vmul.f32 %v3022, %v3060
    %v3084 = vmul.f32 %v3023, %v3064
    %v3085 = vmul.f32 %v3024, %v3068
    %v3086 = vmul.f32 %v3025, %v3072
    %v3087 = vmul.f32 %v3026, %v3068
    %v3088 = vmul.f32 %v3027, %v3072
    %v3089 = vmul.f32 %v3028, %v3068
    %v3090 = vmul.f32 %v3029, %v3072
    %v3091 = vmul.f32 %v3030, %v3068
    %v3092 = vmul.f32 %v3031, %v3072
    %3093 = vst [vmem:[%s7] sm:$0xff] %v3077
    %3094 = vst [vmem:[%s7 + $0x8] sm:$0xff] %v3078
    %3095 = vst [vmem:[%s7 + $0x10] sm:$0xff] %v3079
    %3096 = vst [vmem:[%s7 + $0x18] sm:$0xff] %v3080
    %3097 = vst [vmem:[%s7 + $0x20] sm:$0xff] %v3081
    %3098 = vst [vmem:[%s7 + $0x28] sm:$0xff] %v3082
    %3099 = vst [vmem:[%s7 + $0x30] sm:$0xff] %v3083
    %3100 = vst [vmem:[%s7 + $0x38] sm:$0xff] %v3084
    %3101 = vst [vmem:[%s7 + $0x40] sm:$0xff] %v3085
    %3102 = vst [vmem:[%s7 + $0x48] sm:$0xff] %v3086
    %3103 = vst [vmem:[%s7 + $0x50] sm:$0xff] %v3087
    %3104 = vst [vmem:[%s7 + $0x58] sm:$0xff] %v3088
    %3105 = vst [vmem:[%s7 + $0x60] sm:$0xff] %v3089
    %3106 = vst [vmem:[%s7 + $0x68] sm:$0xff] %v3090
    %3107 = vst [vmem:[%s7 + $0x70] sm:$0xff] %v3091
    %3108 = vst [vmem:[%s7 + $0x78] sm:$0xff] %v3092
    // Predicated region
    $region34: #{amm_forward.1} parent=1 // pred_check
      _
    $region35: #{amm_forward.1} parent=1 // pred_check_branch
      %3110 = sbr.rel (0) target = $region37
    $region36: #{amm_forward.1} parent=1 // pred_region
      _
    $region37: #{amm_forward.1} parent=1 // pred_fallthru
      _
    // Predicated region
    $region38: #{amm_forward.1} parent=1 // pred_check
      _
    $region39: #{amm_forward.1} parent=1 // pred_check_branch
      %3112 = sbr.rel (0) target = $region41
    $region40: #{amm_forward.1} parent=1 // pred_region
      _
    $region41: #{amm_forward.1} parent=1 // pred_fallthru
      _
    %3113 = vsyncpa [#allocation3], 1

</llo_original>
